<compile_context>
chip_gen: v6e
topology: v6e:2x2x1
jax: 0.10.0
libtpu: 0.0.40
codegen_flags: <defaults>
</compile_context>

<pallas_src>
import numpy as np
import jax
import jax.numpy as jnp
from jax import lax
from jax.experimental import pallas as pl
from jax.experimental.pallas import tpu as pltpu

EPS = 1e-8


def _guarded_recip(x):
    """1 / (x if x > eps else eps) -- same clamp semantics as div_with_small_value."""
    return pl.reciprocal(jnp.where(x > EPS, x, EPS), approx=True)


# ----------------------------------------------------------------------------
# Fused kernel: GCN(p) + GCN(h) + cosine attention + multi-perspective match +
#               avg/max pooling + prediction MLP + sigmoid  (one batch element
#               per grid step).
# ----------------------------------------------------------------------------
def fused_kernel(xp_ref, xh_ref, adjp_ref, adjh_ref,
                 gw1, gb1, gw2, gb2, gw3, gb3,
                 w2t_ref,
                 fw1, fb1, fw2, fb2, fw3, fb3, fw4r, fb4,
                 out_ref):
    f32 = jnp.float32

    # ---- GCN stacks (DenseGCNConv, add_loop=False, relu, dropout=id) -------
    gcn_params = ((gw1[...], gb1[...]), (gw2[...], gb2[...]), (gw3[...], gb3[...]))

    def gcn_stack(x, adj):
        deg = jnp.sum(adj, axis=-1, keepdims=True)            # (N, 1)
        dis = lax.rsqrt(jnp.maximum(deg, 1.0))                 # deg.clamp(1)^-0.5
        for w, b in gcn_params:
            xw = jnp.dot(x, w, preferred_element_type=f32)
            # D^-1/2 A D^-1/2 (X W)  ==  dis * (A @ (dis * xw))
            x = dis * jnp.dot(adj, dis * xw, preferred_element_type=f32) + b
            x = jnp.maximum(x, 0.0)
        return x

    fp = gcn_stack(xp_ref[0], adjp_ref[0])                     # (Np, F), >= 0
    fh = gcn_stack(xh_ref[0], adjh_ref[0])                     # (Nh, F), >= 0

    # ---- cosine attention, computed in BOTH orientations (no transposes) ----
    dn_t = (((1,), (1,)), ((), ()))                            # a @ b.T
    a_ph = lax.dot_general(fp, fh, dn_t, preferred_element_type=f32)   # (Np, Nh)
    a_hp = lax.dot_general(fh, fp, dn_t, preferred_element_type=f32)   # (Nh, Np)

    p_norm = jnp.sqrt(jnp.sum(fp * fp, axis=-1, keepdims=True))        # (Np, 1)
    h_norm = jnp.sqrt(jnp.sum(fh * fh, axis=-1, keepdims=True))        # (Nh, 1)
    ones_f = jnp.ones((1, fp.shape[1]), f32)
    p_norm_row = jnp.sqrt(lax.dot_general(ones_f, fp * fp, dn_t,
                                          preferred_element_type=f32)) # (1, Np)
    h_norm_row = jnp.sqrt(lax.dot_general(ones_f, fh * fh, dn_t,
                                          preferred_element_type=f32)) # (1, Nh)

    att = a_ph * _guarded_recip(p_norm * h_norm_row)           # (Np, Nh)
    att_t = a_hp * _guarded_recip(h_norm * p_norm_row)         # (Nh, Np) == att.T

    # ---- attention-weighted means -------------------------------------------
    num_h = jnp.dot(att, fh, preferred_element_type=f32)        # (Np, F)
    att_mean_h = num_h * _guarded_recip(jnp.sum(att, axis=-1, keepdims=True))
    num_p = jnp.dot(att_t, fp, preferred_element_type=f32)      # (Nh, F)
    att_mean_p = num_p * _guarded_recip(jnp.sum(att_t, axis=-1, keepdims=True))

    # ---- multi-perspective cosine matching; w2t = (mp_w**2).T  : (F, P) -----
    w2t = w2t_ref[...]

    def mp_cos(v1, v2):
        num = jnp.dot(v1 * v2, w2t, preferred_element_type=f32)
        n1 = jnp.sqrt(jnp.dot(v1 * v1, w2t, preferred_element_type=f32))
        n2 = jnp.sqrt(jnp.dot(v2 * v2, w2t, preferred_element_type=f32))
        den = jnp.maximum(n1, EPS) * jnp.maximum(n2, EPS)
        return num * pl.reciprocal(den, approx=True)

    multi_p = mp_cos(fp, att_mean_h)                             # (Np, P)
    multi_h = mp_cos(fh, att_mean_p)                             # (Nh, P)

    # ---- pooling: match_agg='avg' + global max_pool --------------------------
    agg_p = jnp.mean(multi_p, axis=0, keepdims=True)             # (1, P)
    agg_h = jnp.mean(multi_h, axis=0, keepdims=True)             # (1, P)
    gmax_p = jnp.max(fp, axis=0, keepdims=True)                  # (1, F)
    gmax_h = jnp.max(fh, axis=0, keepdims=True)                  # (1, F)
    x = jnp.concatenate([agg_p, gmax_p, agg_h, gmax_h], axis=-1)  # (1, 2*(P+F))

    # ---- prediction head: fc1..fc3 + relu, fc4, sigmoid ----------------------
    for w, b in ((fw1, fb1), (fw2, fb2), (fw3, fb3)):
        x = jnp.dot(x, w[...], preferred_element_type=f32) + b[...]
        x = jnp.maximum(x, 0.0)
    # last layer has output width 1 -> broadcast-multiply + lane reduce
    x = jnp.sum(x * fw4r[...], axis=-1, keepdims=True) + fb4[...]   # (1, 1)
    out_ref[0] = pl.reciprocal(1.0 + jnp.exp(-x), approx=True)      # sigmoid


def graph_match_forward(batch_x_p, batch_x_h, batch_adj_p, batch_adj_h, params):
    B, Np, D0 = batch_x_p.shape
    _, Nh, _ = batch_x_h.shape
    (gw1, gb1), (gw2, gb2), (gw3, gb3) = params["gcn"]
    F = gw3.shape[1]
    mp_w = params["mp_w"]
    P = mp_w.shape[0]
    (fw1, fb1), (fw2, fb2), (fw3, fb3), (fw4, fb4) = params["fc"]

    # host-side glue (tiny, one-time)
    w2t = jnp.transpose(mp_w * mp_w)                         # (F, P)
    fw4r = jnp.transpose(fw4)                                # (1, d_last)

    weights = (gw1, gb1, gw2, gb2, gw3, gb3, w2t,
               fw1, fb1, fw2, fb2, fw3, fb3, fw4r, fb4)

    in_specs = [
        pl.BlockSpec((1, Np, D0), lambda b: (b, 0, 0)),
        pl.BlockSpec((1, Nh, D0), lambda b: (b, 0, 0)),
        pl.BlockSpec((1, Np, Np), lambda b: (b, 0, 0)),
        pl.BlockSpec((1, Nh, Nh), lambda b: (b, 0, 0)),
    ] + [pl.BlockSpec(w.shape, lambda b: (0, 0)) for w in weights]

    # advisory cost estimate (tiny kernel; helps XLA scheduling around it)
    gcn_flops, din = 0, D0
    for w, _ in params["gcn"]:
        dout = w.shape[1]
        gcn_flops += 2 * (Np + Nh) * din * dout + 2 * (Np * Np + Nh * Nh) * dout
        din = dout
    match_flops = 4 * 2 * Np * Nh * F + 6 * 2 * max(Np, Nh) * F * P
    mlp_flops = sum(2 * w.shape[0] * w.shape[1] for w, _ in params["fc"])
    bytes_accessed = 4 * (batch_x_p.size + batch_x_h.size + batch_adj_p.size
                          + batch_adj_h.size + B
                          + B * sum(int(w.size) for w in weights))
    cost = pl.CostEstimate(
        flops=int(B * (gcn_flops + match_flops + mlp_flops)),
        transcendentals=int(B * (2 * Np * Nh + 3 * (Np + Nh) * P + 2 * (Np + Nh) + 8)),
        bytes_accessed=int(bytes_accessed),
    )

    out = pl.pallas_call(
        fused_kernel,
        out_shape=jax.ShapeDtypeStruct((B, 1, 1), jnp.float32),
        grid=(B,),
        in_specs=in_specs,
        out_specs=pl.BlockSpec((1, 1, 1), lambda b: (b, 0, 0)),
        compiler_params=pltpu.CompilerParams(
            dimension_semantics=("parallel",)),   # v7x: 2 TCs split the batch
        cost_estimate=cost,
    )(batch_x_p, batch_x_h, batch_adj_p, batch_adj_h, *weights)
    return out.reshape(B)                                     # squeeze(-1)


# ----------------------------------------------------------------------------
# Pure-JAX reference (mirrors the PyTorch semantics) for validation
# ----------------------------------------------------------------------------
def reference_forward(xp, xh, adjp, adjh, params):
    def gcn_stack(feat, adj):
        deg = jnp.maximum(jnp.sum(adj, axis=-1, keepdims=True), 1.0)
        dis = 1.0 / jnp.sqrt(deg)
        x = feat
        for w, b in params["gcn"]:
            xw = jnp.einsum("bnd,df->bnf", x, w)
            x = dis * jnp.einsum("bnm,bmf->bnf", adj, dis * xw) + b
            x = jnp.maximum(x, 0.0)
        return x

    fp = gcn_stack(xp, adjp)
    fh = gcn_stack(xh, adjh)

    a = jnp.einsum("bid,bjd->bij", fp, fh)
    pn = jnp.sqrt(jnp.sum(fp * fp, -1, keepdims=True))
    hn = jnp.sqrt(jnp.sum(fh * fh, -1, keepdims=True))
    d = pn * jnp.swapaxes(hn, -1, -2)
    att = a / jnp.where(d > EPS, d, EPS)

    num_h = jnp.einsum("bij,bjd->bid", att, fh)
    s_h = jnp.sum(att, axis=-1, keepdims=True)
    amh = num_h / jnp.where(s_h > EPS, s_h, EPS)
    num_p = jnp.einsum("bij,bid->bjd", att, fp)
    s_p = jnp.sum(att, axis=1)[..., None]
    amp = num_p / jnp.where(s_p > EPS, s_p, EPS)

    w2 = params["mp_w"] * params["mp_w"]                    # (P, F)

    def mp(v1, v2):
        num = jnp.einsum("bld,pd->blp", v1 * v2, w2)
        n1 = jnp.sqrt(jnp.einsum("bld,pd->blp", v1 * v1, w2))
        n2 = jnp.sqrt(jnp.einsum("bld,pd->blp", v2 * v2, w2))
        return num / (jnp.maximum(n1, EPS) * jnp.maximum(n2, EPS))

    multi_p, multi_h = mp(fp, amh), mp(fh, amp)
    agg_p = jnp.concatenate([jnp.mean(multi_p, 1), jnp.max(fp, 1)], axis=-1)
    agg_h = jnp.concatenate([jnp.mean(multi_h, 1), jnp.max(fh, 1)], axis=-1)
    x = jnp.concatenate([agg_p, agg_h], axis=-1)

    for i, (w, b) in enumerate(params["fc"]):
        x = jnp.einsum("bi,io->bo", x, w) + b
        if i < 3:
            x = jnp.maximum(x, 0.0)
    return (1.0 / (1.0 + jnp.exp(-x)))[:, 0]


# ----------------------------------------------------------------------------
# Deterministic parameter / input construction
# ----------------------------------------------------------------------------
def init_params(key, node_init_dims, filters, perspectives, hidden_size):
    keys = jax.random.split(key, 16)
    ki = 0
    dims = [node_init_dims] + filters
    gcn = []
    for i in range(len(filters)):
        w = jax.random.normal(keys[ki], (dims[i], dims[i + 1]), jnp.float32)
        w = w / jnp.sqrt(jnp.float32(dims[i]))
        b = 0.01 * jax.random.normal(keys[ki + 1], (1, dims[i + 1]), jnp.float32)
        gcn.append((w, b))
        ki += 2
    mp_w = jax.random.uniform(keys[ki], (perspectives, filters[-1]), jnp.float32)
    ki += 1
    factor = 2  # match_agg='avg' (1) + global max_pool (1)
    fc_dims = [hidden_size * 2 * factor, hidden_size * factor,
               hidden_size * factor // 2, hidden_size * factor // 4, 1]
    fc = []
    for i in range(4):
        w = jax.random.normal(keys[ki], (fc_dims[i], fc_dims[i + 1]), jnp.float32)
        w = w / jnp.sqrt(jnp.float32(fc_dims[i]))
        b = 0.01 * jax.random.normal(keys[ki + 1], (1, fc_dims[i + 1]), jnp.float32)
        fc.append((w, b))
        ki += 2
    return {"gcn": gcn, "mp_w": mp_w, "fc": fc}


if __name__ == "__main__":
    B, Np, Nh, D0 = 2, 8, 8, 16
    filters, P, H = [32, 32, 32], 32, 32

    key = jax.random.PRNGKey(0)
    k_par, k_xp, k_xh, k_ap, k_ah = jax.random.split(key, 5)
    params = init_params(k_par, D0, filters, P, H)

    batch_x_p = jax.random.normal(k_xp, (B, Np, D0), jnp.float32)
    batch_x_h = jax.random.normal(k_xh, (B, Nh, D0), jnp.float32)

    def make_adj(k, n):
        a = (jax.random.uniform(k, (B, n, n)) < 0.5).astype(jnp.float32)
        return jnp.maximum(a, jnp.swapaxes(a, -1, -2))      # symmetric 0/1 adjacency

    batch_adj_p = make_adj(k_ap, Np)
    batch_adj_h = make_adj(k_ah, Nh)

    y = jax.block_until_ready(
        graph_match_forward(batch_x_p, batch_x_h, batch_adj_p, batch_adj_h, params))

    y_ref = jax.block_until_ready(
        reference_forward(batch_x_p, batch_x_h, batch_adj_p, batch_adj_h, params))

    np.testing.assert_allclose(np.asarray(y), np.asarray(y_ref), rtol=1e-2, atol=1e-2)
    assert y.shape == (B,)
    print("KERNEL_OK")
</pallas_src>

<mosaic_0001>
module attributes {stable_mosaic.version = 11 : i64} {
  func.func @fused_kernel(%arg0: i32, %arg1: memref<1x8x16xf32, #tpu.memory_space<vmem>>, %arg2: memref<1x8x16xf32, #tpu.memory_space<vmem>>, %arg3: memref<1x8x8xf32, #tpu.memory_space<vmem>>, %arg4: memref<1x8x8xf32, #tpu.memory_space<vmem>>, %arg5: memref<16x32xf32, #tpu.memory_space<vmem>>, %arg6: memref<1x32xf32, #tpu.memory_space<vmem>>, %arg7: memref<32x32xf32, #tpu.memory_space<vmem>>, %arg8: memref<1x32xf32, #tpu.memory_space<vmem>>, %arg9: memref<32x32xf32, #tpu.memory_space<vmem>>, %arg10: memref<1x32xf32, #tpu.memory_space<vmem>>, %arg11: memref<32x32xf32, #tpu.memory_space<vmem>>, %arg12: memref<128x64xf32, #tpu.memory_space<vmem>>, %arg13: memref<1x64xf32, #tpu.memory_space<vmem>>, %arg14: memref<64x32xf32, #tpu.memory_space<vmem>>, %arg15: memref<1x32xf32, #tpu.memory_space<vmem>>, %arg16: memref<32x16xf32, #tpu.memory_space<vmem>>, %arg17: memref<1x16xf32, #tpu.memory_space<vmem>>, %arg18: memref<1x16xf32, #tpu.memory_space<vmem>>, %arg19: memref<1x1xf32, #tpu.memory_space<vmem>>, %arg20: memref<1x1x1xf32, #tpu.memory_space<vmem>>) attributes {dimension_semantics = [#tpu.dimension_semantics<parallel>], iteration_bounds = array<i64: 2>, scalar_prefetch = 0 : i64, scratch_operands = 0 : i64, tpu.core_type = #tpu.core_type<tc>, window_params = [{transform_indices = @transform_0, window_bounds = array<i64: 1, 8, 16>}, {transform_indices = @transform_1, window_bounds = array<i64: 1, 8, 16>}, {transform_indices = @transform_2, window_bounds = array<i64: 1, 8, 8>}, {transform_indices = @transform_3, window_bounds = array<i64: 1, 8, 8>}, {pipeline_mode = #tpu.pipeline_mode<synchronous>, transform_indices = @transform_4, window_bounds = array<i64: 16, 32>}, {pipeline_mode = #tpu.pipeline_mode<synchronous>, transform_indices = @transform_5, window_bounds = array<i64: 1, 32>}, {pipeline_mode = #tpu.pipeline_mode<synchronous>, transform_indices = @transform_6, window_bounds = array<i64: 32, 32>}, {pipeline_mode = #tpu.pipeline_mode<synchronous>, transform_indices = @transform_7, window_bounds = array<i64: 1, 32>}, {pipeline_mode = #tpu.pipeline_mode<synchronous>, transform_indices = @transform_8, window_bounds = array<i64: 32, 32>}, {pipeline_mode = #tpu.pipeline_mode<synchronous>, transform_indices = @transform_9, window_bounds = array<i64: 1, 32>}, {pipeline_mode = #tpu.pipeline_mode<synchronous>, transform_indices = @transform_10, window_bounds = array<i64: 32, 32>}, {pipeline_mode = #tpu.pipeline_mode<synchronous>, transform_indices = @transform_11, window_bounds = array<i64: 128, 64>}, {pipeline_mode = #tpu.pipeline_mode<synchronous>, transform_indices = @transform_12, window_bounds = array<i64: 1, 64>}, {pipeline_mode = #tpu.pipeline_mode<synchronous>, transform_indices = @transform_13, window_bounds = array<i64: 64, 32>}, {pipeline_mode = #tpu.pipeline_mode<synchronous>, transform_indices = @transform_14, window_bounds = array<i64: 1, 32>}, {pipeline_mode = #tpu.pipeline_mode<synchronous>, transform_indices = @transform_15, window_bounds = array<i64: 32, 16>}, {pipeline_mode = #tpu.pipeline_mode<synchronous>, transform_indices = @transform_16, window_bounds = array<i64: 1, 16>}, {pipeline_mode = #tpu.pipeline_mode<synchronous>, transform_indices = @transform_17, window_bounds = array<i64: 1, 16>}, {pipeline_mode = #tpu.pipeline_mode<synchronous>, transform_indices = @transform_18, window_bounds = array<i64: 1, 1>}, {transform_indices = @transform_19, window_bounds = array<i64: 1, 1, 1>}]} {
    %c0 = arith.constant 0 : index
    %c0_0 = arith.constant 0 : index
    %0 = vector.load %arg5[%c0, %c0_0] : memref<16x32xf32, #tpu.memory_space<vmem>>, vector<16x32xf32>
    %c0_1 = arith.constant 0 : index
    %c0_2 = arith.constant 0 : index
    %1 = vector.load %arg6[%c0_1, %c0_2] : memref<1x32xf32, #tpu.memory_space<vmem>>, vector<1x32xf32>
    %c0_3 = arith.constant 0 : index
    %c0_4 = arith.constant 0 : index
    %2 = vector.load %arg7[%c0_3, %c0_4] : memref<32x32xf32, #tpu.memory_space<vmem>>, vector<32x32xf32>
    %c0_5 = arith.constant 0 : index
    %c0_6 = arith.constant 0 : index
    %3 = vector.load %arg8[%c0_5, %c0_6] : memref<1x32xf32, #tpu.memory_space<vmem>>, vector<1x32xf32>
    %c0_7 = arith.constant 0 : index
    %c0_8 = arith.constant 0 : index
    %4 = vector.load %arg9[%c0_7, %c0_8] : memref<32x32xf32, #tpu.memory_space<vmem>>, vector<32x32xf32>
    %c0_9 = arith.constant 0 : index
    %c0_10 = arith.constant 0 : index
    %5 = vector.load %arg10[%c0_9, %c0_10] : memref<1x32xf32, #tpu.memory_space<vmem>>, vector<1x32xf32>
    %c0_11 = arith.constant 0 : index
    %c0_12 = arith.constant 0 : index
    %c0_13 = arith.constant 0 : index
    %6 = vector.load %arg1[%c0_11, %c0_12, %c0_13] : memref<1x8x16xf32, #tpu.memory_space<vmem>>, vector<1x8x16xf32>
    %7 = vector.shape_cast %6 : vector<1x8x16xf32> to vector<8x16xf32>
    %c0_14 = arith.constant 0 : index
    %c0_15 = arith.constant 0 : index
    %c0_16 = arith.constant 0 : index
    %8 = vector.load %arg3[%c0_14, %c0_15, %c0_16] : memref<1x8x8xf32, #tpu.memory_space<vmem>>, vector<1x8x8xf32>
    %9 = vector.shape_cast %8 : vector<1x8x8xf32> to vector<8x8xf32>
    %cst = arith.constant dense<0.000000e+00> : vector<8xf32>
    %10 = vector.multi_reduction <add>, %9, %cst [1] : vector<8x8xf32> to vector<8xf32>
    %11 = vector.shape_cast %10 : vector<8xf32> to vector<8x1xf32>
    %cst_17 = arith.constant 1.000000e+00 : f32
    %12 = vector.broadcast %cst_17 : f32 to vector<8x1xf32>
    %13 = arith.maximumf %11, %12 : vector<8x1xf32>
    %14 = math.rsqrt %13 : vector<8x1xf32>
    %cst_18 = arith.constant dense<0.000000e+00> : vector<8x32xf32>
    %15 = tpu.matmul %7, %0, %cst_18 {dimension_numbers = #tpu.dot_dimension_numbers<[1], [0], [0], [1], [0, 0, 1, 1], [], []>} : vector<8x16xf32>, vector<16x32xf32>, vector<8x32xf32> -> vector<8x32xf32>
    %16 = vector.broadcast %14 : vector<8x1xf32> to vector<8x32xf32>
    %17 = arith.mulf %16, %15 : vector<8x32xf32>
    %cst_19 = arith.constant dense<0.000000e+00> : vector<8x32xf32>
    %18 = tpu.matmul %9, %17, %cst_19 {dimension_numbers = #tpu.dot_dimension_numbers<[1], [0], [0], [1], [0, 0, 1, 1], [], []>} : vector<8x8xf32>, vector<8x32xf32>, vector<8x32xf32> -> vector<8x32xf32>
    %19 = vector.broadcast %14 : vector<8x1xf32> to vector<8x32xf32>
    %20 = arith.mulf %19, %18 : vector<8x32xf32>
    %21 = vector.broadcast %1 : vector<1x32xf32> to vector<8x32xf32>
    %22 = arith.addf %20, %21 : vector<8x32xf32>
    %cst_20 = arith.constant 0.000000e+00 : f32
    %23 = vector.broadcast %cst_20 : f32 to vector<8x32xf32>
    %24 = arith.maximumf %22, %23 : vector<8x32xf32>
    %cst_21 = arith.constant dense<0.000000e+00> : vector<8x32xf32>
    %25 = tpu.matmul %24, %2, %cst_21 {dimension_numbers = #tpu.dot_dimension_numbers<[1], [0], [0], [1], [0, 0, 1, 1], [], []>} : vector<8x32xf32>, vector<32x32xf32>, vector<8x32xf32> -> vector<8x32xf32>
    %26 = vector.broadcast %14 : vector<8x1xf32> to vector<8x32xf32>
    %27 = arith.mulf %26, %25 : vector<8x32xf32>
    %cst_22 = arith.constant dense<0.000000e+00> : vector<8x32xf32>
    %28 = tpu.matmul %9, %27, %cst_22 {dimension_numbers = #tpu.dot_dimension_numbers<[1], [0], [0], [1], [0, 0, 1, 1], [], []>} : vector<8x8xf32>, vector<8x32xf32>, vector<8x32xf32> -> vector<8x32xf32>
    %29 = vector.broadcast %14 : vector<8x1xf32> to vector<8x32xf32>
    %30 = arith.mulf %29, %28 : vector<8x32xf32>
    %31 = vector.broadcast %3 : vector<1x32xf32> to vector<8x32xf32>
    %32 = arith.addf %30, %31 : vector<8x32xf32>
    %cst_23 = arith.constant 0.000000e+00 : f32
    %33 = vector.broadcast %cst_23 : f32 to vector<8x32xf32>
    %34 = arith.maximumf %32, %33 : vector<8x32xf32>
    %cst_24 = arith.constant dense<0.000000e+00> : vector<8x32xf32>
    %35 = tpu.matmul %34, %4, %cst_24 {dimension_numbers = #tpu.dot_dimension_numbers<[1], [0], [0], [1], [0, 0, 1, 1], [], []>} : vector<8x32xf32>, vector<32x32xf32>, vector<8x32xf32> -> vector<8x32xf32>
    %36 = vector.broadcast %14 : vector<8x1xf32> to vector<8x32xf32>
    %37 = arith.mulf %36, %35 : vector<8x32xf32>
    %cst_25 = arith.constant dense<0.000000e+00> : vector<8x32xf32>
    %38 = tpu.matmul %9, %37, %cst_25 {dimension_numbers = #tpu.dot_dimension_numbers<[1], [0], [0], [1], [0, 0, 1, 1], [], []>} : vector<8x8xf32>, vector<8x32xf32>, vector<8x32xf32> -> vector<8x32xf32>
    %39 = vector.broadcast %14 : vector<8x1xf32> to vector<8x32xf32>
    %40 = arith.mulf %39, %38 : vector<8x32xf32>
    %41 = vector.broadcast %5 : vector<1x32xf32> to vector<8x32xf32>
    %42 = arith.addf %40, %41 : vector<8x32xf32>
    %cst_26 = arith.constant 0.000000e+00 : f32
    %43 = vector.broadcast %cst_26 : f32 to vector<8x32xf32>
    %44 = arith.maximumf %42, %43 : vector<8x32xf32>
    %c0_27 = arith.constant 0 : index
    %c0_28 = arith.constant 0 : index
    %c0_29 = arith.constant 0 : index
    %45 = vector.load %arg2[%c0_27, %c0_28, %c0_29] : memref<1x8x16xf32, #tpu.memory_space<vmem>>, vector<1x8x16xf32>
    %46 = vector.shape_cast %45 : vector<1x8x16xf32> to vector<8x16xf32>
    %c0_30 = arith.constant 0 : index
    %c0_31 = arith.constant 0 : index
    %c0_32 = arith.constant 0 : index
    %47 = vector.load %arg4[%c0_30, %c0_31, %c0_32] : memref<1x8x8xf32, #tpu.memory_space<vmem>>, vector<1x8x8xf32>
    %48 = vector.shape_cast %47 : vector<1x8x8xf32> to vector<8x8xf32>
    %cst_33 = arith.constant dense<0.000000e+00> : vector<8xf32>
    %49 = vector.multi_reduction <add>, %48, %cst_33 [1] : vector<8x8xf32> to vector<8xf32>
    %50 = vector.shape_cast %49 : vector<8xf32> to vector<8x1xf32>
    %cst_34 = arith.constant 1.000000e+00 : f32
    %51 = vector.broadcast %cst_34 : f32 to vector<8x1xf32>
    %52 = arith.maximumf %50, %51 : vector<8x1xf32>
    %53 = math.rsqrt %52 : vector<8x1xf32>
    %cst_35 = arith.constant dense<0.000000e+00> : vector<8x32xf32>
    %54 = tpu.matmul %46, %0, %cst_35 {dimension_numbers = #tpu.dot_dimension_numbers<[1], [0], [0], [1], [0, 0, 1, 1], [], []>} : vector<8x16xf32>, vector<16x32xf32>, vector<8x32xf32> -> vector<8x32xf32>
    %55 = vector.broadcast %53 : vector<8x1xf32> to vector<8x32xf32>
    %56 = arith.mulf %55, %54 : vector<8x32xf32>
    %cst_36 = arith.constant dense<0.000000e+00> : vector<8x32xf32>
    %57 = tpu.matmul %48, %56, %cst_36 {dimension_numbers = #tpu.dot_dimension_numbers<[1], [0], [0], [1], [0, 0, 1, 1], [], []>} : vector<8x8xf32>, vector<8x32xf32>, vector<8x32xf32> -> vector<8x32xf32>
    %58 = vector.broadcast %53 : vector<8x1xf32> to vector<8x32xf32>
    %59 = arith.mulf %58, %57 : vector<8x32xf32>
    %60 = vector.broadcast %1 : vector<1x32xf32> to vector<8x32xf32>
    %61 = arith.addf %59, %60 : vector<8x32xf32>
    %cst_37 = arith.constant 0.000000e+00 : f32
    %62 = vector.broadcast %cst_37 : f32 to vector<8x32xf32>
    %63 = arith.maximumf %61, %62 : vector<8x32xf32>
    %cst_38 = arith.constant dense<0.000000e+00> : vector<8x32xf32>
    %64 = tpu.matmul %63, %2, %cst_38 {dimension_numbers = #tpu.dot_dimension_numbers<[1], [0], [0], [1], [0, 0, 1, 1], [], []>} : vector<8x32xf32>, vector<32x32xf32>, vector<8x32xf32> -> vector<8x32xf32>
    %65 = vector.broadcast %53 : vector<8x1xf32> to vector<8x32xf32>
    %66 = arith.mulf %65, %64 : vector<8x32xf32>
    %cst_39 = arith.constant dense<0.000000e+00> : vector<8x32xf32>
    %67 = tpu.matmul %48, %66, %cst_39 {dimension_numbers = #tpu.dot_dimension_numbers<[1], [0], [0], [1], [0, 0, 1, 1], [], []>} : vector<8x8xf32>, vector<8x32xf32>, vector<8x32xf32> -> vector<8x32xf32>
    %68 = vector.broadcast %53 : vector<8x1xf32> to vector<8x32xf32>
    %69 = arith.mulf %68, %67 : vector<8x32xf32>
    %70 = vector.broadcast %3 : vector<1x32xf32> to vector<8x32xf32>
    %71 = arith.addf %69, %70 : vector<8x32xf32>
    %cst_40 = arith.constant 0.000000e+00 : f32
    %72 = vector.broadcast %cst_40 : f32 to vector<8x32xf32>
    %73 = arith.maximumf %71, %72 : vector<8x32xf32>
    %cst_41 = arith.constant dense<0.000000e+00> : vector<8x32xf32>
    %74 = tpu.matmul %73, %4, %cst_41 {dimension_numbers = #tpu.dot_dimension_numbers<[1], [0], [0], [1], [0, 0, 1, 1], [], []>} : vector<8x32xf32>, vector<32x32xf32>, vector<8x32xf32> -> vector<8x32xf32>
    %75 = vector.broadcast %53 : vector<8x1xf32> to vector<8x32xf32>
    %76 = arith.mulf %75, %74 : vector<8x32xf32>
    %cst_42 = arith.constant dense<0.000000e+00> : vector<8x32xf32>
    %77 = tpu.matmul %48, %76, %cst_42 {dimension_numbers = #tpu.dot_dimension_numbers<[1], [0], [0], [1], [0, 0, 1, 1], [], []>} : vector<8x8xf32>, vector<8x32xf32>, vector<8x32xf32> -> vector<8x32xf32>
    %78 = vector.broadcast %53 : vector<8x1xf32> to vector<8x32xf32>
    %79 = arith.mulf %78, %77 : vector<8x32xf32>
    %80 = vector.broadcast %5 : vector<1x32xf32> to vector<8x32xf32>
    %81 = arith.addf %79, %80 : vector<8x32xf32>
    %cst_43 = arith.constant 0.000000e+00 : f32
    %82 = vector.broadcast %cst_43 : f32 to vector<8x32xf32>
    %83 = arith.maximumf %81, %82 : vector<8x32xf32>
    %cst_44 = arith.constant dense<0.000000e+00> : vector<8x8xf32>
    %84 = tpu.matmul %44, %83, %cst_44 {dimension_numbers = #tpu.dot_dimension_numbers<[1], [1], [0], [0], [0, 0, 1, 0], [], []>} : vector<8x32xf32>, vector<8x32xf32>, vector<8x8xf32> -> vector<8x8xf32>
    %cst_45 = arith.constant dense<0.000000e+00> : vector<8x8xf32>
    %85 = tpu.matmul %83, %44, %cst_45 {dimension_numbers = #tpu.dot_dimension_numbers<[1], [1], [0], [0], [0, 0, 1, 0], [], []>} : vector<8x32xf32>, vector<8x32xf32>, vector<8x8xf32> -> vector<8x8xf32>
    %86 = arith.mulf %44, %44 : vector<8x32xf32>
    %cst_46 = arith.constant dense<0.000000e+00> : vector<8xf32>
    %87 = vector.multi_reduction <add>, %86, %cst_46 [1] : vector<8x32xf32> to vector<8xf32>
    %88 = vector.shape_cast %87 : vector<8xf32> to vector<8x1xf32>
    %89 = math.sqrt %88 : vector<8x1xf32>
    %90 = arith.mulf %83, %83 : vector<8x32xf32>
    %cst_47 = arith.constant dense<0.000000e+00> : vector<8xf32>
    %91 = vector.multi_reduction <add>, %90, %cst_47 [1] : vector<8x32xf32> to vector<8xf32>
    %92 = vector.shape_cast %91 : vector<8xf32> to vector<8x1xf32>
    %93 = math.sqrt %92 : vector<8x1xf32>
    %cst_48 = arith.constant 1.000000e+00 : f32
    %94 = vector.broadcast %cst_48 : f32 to vector<1x32xf32>
    %95 = arith.mulf %44, %44 : vector<8x32xf32>
    %cst_49 = arith.constant dense<0.000000e+00> : vector<1x8xf32>
    %96 = tpu.matmul %94, %95, %cst_49 {dimension_numbers = #tpu.dot_dimension_numbers<[1], [1], [0], [0], [0, 0, 1, 0], [], []>} : vector<1x32xf32>, vector<8x32xf32>, vector<1x8xf32> -> vector<1x8xf32>
    %97 = math.sqrt %96 : vector<1x8xf32>
    %98 = arith.mulf %83, %83 : vector<8x32xf32>
    %cst_50 = arith.constant dense<0.000000e+00> : vector<1x8xf32>
    %99 = tpu.matmul %94, %98, %cst_50 {dimension_numbers = #tpu.dot_dimension_numbers<[1], [1], [0], [0], [0, 0, 1, 0], [], []>} : vector<1x32xf32>, vector<8x32xf32>, vector<1x8xf32> -> vector<1x8xf32>
    %100 = math.sqrt %99 : vector<1x8xf32>
    %101 = vector.broadcast %89 : vector<8x1xf32> to vector<8x8xf32>
    %102 = vector.broadcast %100 : vector<1x8xf32> to vector<8x8xf32>
    %103 = arith.mulf %101, %102 : vector<8x8xf32>
    %cst_51 = arith.constant 9.99999993E-9 : f32
    %104 = vector.broadcast %cst_51 : f32 to vector<8x8xf32>
    %105 = arith.cmpf ogt, %103, %104 : vector<8x8xf32>
    %cst_52 = arith.constant 9.99999993E-9 : f32
    %106 = vector.broadcast %cst_52 : f32 to vector<8x8xf32>
    %107 = arith.select %105, %103, %106 : vector<8x8xi1>, vector<8x8xf32>
    %108 = tpu.reciprocal %107 {approx = true} : vector<8x8xf32> -> vector<8x8xf32>
    %109 = arith.mulf %84, %108 : vector<8x8xf32>
    %110 = vector.broadcast %93 : vector<8x1xf32> to vector<8x8xf32>
    %111 = vector.broadcast %97 : vector<1x8xf32> to vector<8x8xf32>
    %112 = arith.mulf %110, %111 : vector<8x8xf32>
    %cst_53 = arith.constant 9.99999993E-9 : f32
    %113 = vector.broadcast %cst_53 : f32 to vector<8x8xf32>
    %114 = arith.cmpf ogt, %112, %113 : vector<8x8xf32>
    %cst_54 = arith.constant 9.99999993E-9 : f32
    %115 = vector.broadcast %cst_54 : f32 to vector<8x8xf32>
    %116 = arith.select %114, %112, %115 : vector<8x8xi1>, vector<8x8xf32>
    %117 = tpu.reciprocal %116 {approx = true} : vector<8x8xf32> -> vector<8x8xf32>
    %118 = arith.mulf %85, %117 : vector<8x8xf32>
    %cst_55 = arith.constant dense<0.000000e+00> : vector<8x32xf32>
    %119 = tpu.matmul %109, %83, %cst_55 {dimension_numbers = #tpu.dot_dimension_numbers<[1], [0], [0], [1], [0, 0, 1, 1], [], []>} : vector<8x8xf32>, vector<8x32xf32>, vector<8x32xf32> -> vector<8x32xf32>
    %cst_56 = arith.constant dense<0.000000e+00> : vector<8xf32>
    %120 = vector.multi_reduction <add>, %109, %cst_56 [1] : vector<8x8xf32> to vector<8xf32>
    %121 = vector.shape_cast %120 : vector<8xf32> to vector<8x1xf32>
    %cst_57 = arith.constant 9.99999993E-9 : f32
    %122 = vector.broadcast %cst_57 : f32 to vector<8x1xf32>
    %123 = arith.cmpf ogt, %121, %122 : vector<8x1xf32>
    %cst_58 = arith.constant 9.99999993E-9 : f32
    %124 = vector.broadcast %cst_58 : f32 to vector<8x1xf32>
    %125 = arith.select %123, %121, %124 : vector<8x1xi1>, vector<8x1xf32>
    %126 = tpu.reciprocal %125 {approx = true} : vector<8x1xf32> -> vector<8x1xf32>
    %127 = vector.broadcast %126 : vector<8x1xf32> to vector<8x32xf32>
    %128 = arith.mulf %119, %127 : vector<8x32xf32>
    %cst_59 = arith.constant dense<0.000000e+00> : vector<8x32xf32>
    %129 = tpu.matmul %118, %44, %cst_59 {dimension_numbers = #tpu.dot_dimension_numbers<[1], [0], [0], [1], [0, 0, 1, 1], [], []>} : vector<8x8xf32>, vector<8x32xf32>, vector<8x32xf32> -> vector<8x32xf32>
    %cst_60 = arith.constant dense<0.000000e+00> : vector<8xf32>
    %130 = vector.multi_reduction <add>, %118, %cst_60 [1] : vector<8x8xf32> to vector<8xf32>
    %131 = vector.shape_cast %130 : vector<8xf32> to vector<8x1xf32>
    %cst_61 = arith.constant 9.99999993E-9 : f32
    %132 = vector.broadcast %cst_61 : f32 to vector<8x1xf32>
    %133 = arith.cmpf ogt, %131, %132 : vector<8x1xf32>
    %cst_62 = arith.constant 9.99999993E-9 : f32
    %134 = vector.broadcast %cst_62 : f32 to vector<8x1xf32>
    %135 = arith.select %133, %131, %134 : vector<8x1xi1>, vector<8x1xf32>
    %136 = tpu.reciprocal %135 {approx = true} : vector<8x1xf32> -> vector<8x1xf32>
    %137 = vector.broadcast %136 : vector<8x1xf32> to vector<8x32xf32>
    %138 = arith.mulf %129, %137 : vector<8x32xf32>
    %c0_63 = arith.constant 0 : index
    %c0_64 = arith.constant 0 : index
    %139 = vector.load %arg11[%c0_63, %c0_64] : memref<32x32xf32, #tpu.memory_space<vmem>>, vector<32x32xf32>
    %140 = arith.mulf %44, %128 : vector<8x32xf32>
    %cst_65 = arith.constant dense<0.000000e+00> : vector<8x32xf32>
    %141 = tpu.matmul %140, %139, %cst_65 {dimension_numbers = #tpu.dot_dimension_numbers<[1], [0], [0], [1], [0, 0, 1, 1], [], []>} : vector<8x32xf32>, vector<32x32xf32>, vector<8x32xf32> -> vector<8x32xf32>
    %142 = arith.mulf %44, %44 : vector<8x32xf32>
    %cst_66 = arith.constant dense<0.000000e+00> : vector<8x32xf32>
    %143 = tpu.matmul %142, %139, %cst_66 {dimension_numbers = #tpu.dot_dimension_numbers<[1], [0], [0], [1], [0, 0, 1, 1], [], []>} : vector<8x32xf32>, vector<32x32xf32>, vector<8x32xf32> -> vector<8x32xf32>
    %144 = math.sqrt %143 : vector<8x32xf32>
    %145 = arith.mulf %128, %128 : vector<8x32xf32>
    %cst_67 = arith.constant dense<0.000000e+00> : vector<8x32xf32>
    %146 = tpu.matmul %145, %139, %cst_67 {dimension_numbers = #tpu.dot_dimension_numbers<[1], [0], [0], [1], [0, 0, 1, 1], [], []>} : vector<8x32xf32>, vector<32x32xf32>, vector<8x32xf32> -> vector<8x32xf32>
    %147 = math.sqrt %146 : vector<8x32xf32>
    %cst_68 = arith.constant 9.99999993E-9 : f32
    %148 = vector.broadcast %cst_68 : f32 to vector<8x32xf32>
    %149 = arith.maximumf %144, %148 : vector<8x32xf32>
    %cst_69 = arith.constant 9.99999993E-9 : f32
    %150 = vector.broadcast %cst_69 : f32 to vector<8x32xf32>
    %151 = arith.maximumf %147, %150 : vector<8x32xf32>
    %152 = arith.mulf %149, %151 : vector<8x32xf32>
    %153 = tpu.reciprocal %152 {approx = true} : vector<8x32xf32> -> vector<8x32xf32>
    %154 = arith.mulf %141, %153 : vector<8x32xf32>
    %155 = arith.mulf %83, %138 : vector<8x32xf32>
    %cst_70 = arith.constant dense<0.000000e+00> : vector<8x32xf32>
    %156 = tpu.matmul %155, %139, %cst_70 {dimension_numbers = #tpu.dot_dimension_numbers<[1], [0], [0], [1], [0, 0, 1, 1], [], []>} : vector<8x32xf32>, vector<32x32xf32>, vector<8x32xf32> -> vector<8x32xf32>
    %157 = arith.mulf %83, %83 : vector<8x32xf32>
    %cst_71 = arith.constant dense<0.000000e+00> : vector<8x32xf32>
    %158 = tpu.matmul %157, %139, %cst_71 {dimension_numbers = #tpu.dot_dimension_numbers<[1], [0], [0], [1], [0, 0, 1, 1], [], []>} : vector<8x32xf32>, vector<32x32xf32>, vector<8x32xf32> -> vector<8x32xf32>
    %159 = math.sqrt %158 : vector<8x32xf32>
    %160 = arith.mulf %138, %138 : vector<8x32xf32>
    %cst_72 = arith.constant dense<0.000000e+00> : vector<8x32xf32>
    %161 = tpu.matmul %160, %139, %cst_72 {dimension_numbers = #tpu.dot_dimension_numbers<[1], [0], [0], [1], [0, 0, 1, 1], [], []>} : vector<8x32xf32>, vector<32x32xf32>, vector<8x32xf32> -> vector<8x32xf32>
    %162 = math.sqrt %161 : vector<8x32xf32>
    %cst_73 = arith.constant 9.99999993E-9 : f32
    %163 = vector.broadcast %cst_73 : f32 to vector<8x32xf32>
    %164 = arith.maximumf %159, %163 : vector<8x32xf32>
    %cst_74 = arith.constant 9.99999993E-9 : f32
    %165 = vector.broadcast %cst_74 : f32 to vector<8x32xf32>
    %166 = arith.maximumf %162, %165 : vector<8x32xf32>
    %167 = arith.mulf %164, %166 : vector<8x32xf32>
    %168 = tpu.reciprocal %167 {approx = true} : vector<8x32xf32> -> vector<8x32xf32>
    %169 = arith.mulf %156, %168 : vector<8x32xf32>
    %cst_75 = arith.constant dense<0.000000e+00> : vector<32xf32>
    %170 = vector.multi_reduction <add>, %154, %cst_75 [0] : vector<8x32xf32> to vector<32xf32>
    %171 = vector.shape_cast %170 : vector<32xf32> to vector<1x32xf32>
    %cst_76 = arith.constant 8.000000e+00 : f32
    %172 = vector.broadcast %cst_76 : f32 to vector<1x32xf32>
    %173 = arith.divf %171, %172 : vector<1x32xf32>
    %cst_77 = arith.constant dense<0.000000e+00> : vector<32xf32>
    %174 = vector.multi_reduction <add>, %169, %cst_77 [0] : vector<8x32xf32> to vector<32xf32>
    %175 = vector.shape_cast %174 : vector<32xf32> to vector<1x32xf32>
    %cst_78 = arith.constant 8.000000e+00 : f32
    %176 = vector.broadcast %cst_78 : f32 to vector<1x32xf32>
    %177 = arith.divf %175, %176 : vector<1x32xf32>
    %cst_79 = arith.constant dense<0xFF800000> : vector<32xf32>
    %178 = vector.multi_reduction <maximumf>, %44, %cst_79 [0] : vector<8x32xf32> to vector<32xf32>
    %179 = vector.shape_cast %178 : vector<32xf32> to vector<1x32xf32>
    %cst_80 = arith.constant dense<0xFF800000> : vector<32xf32>
    %180 = vector.multi_reduction <maximumf>, %83, %cst_80 [0] : vector<8x32xf32> to vector<32xf32>
    %181 = vector.shape_cast %180 : vector<32xf32> to vector<1x32xf32>
    %182 = tpu.concatenate %173, %179, %177, %181 in 1 : vector<1x32xf32>, vector<1x32xf32>, vector<1x32xf32>, vector<1x32xf32> -> vector<1x128xf32>
    %c0_81 = arith.constant 0 : index
    %c0_82 = arith.constant 0 : index
    %183 = vector.load %arg12[%c0_81, %c0_82] : memref<128x64xf32, #tpu.memory_space<vmem>>, vector<128x64xf32>
    %cst_83 = arith.constant dense<0.000000e+00> : vector<1x64xf32>
    %184 = tpu.matmul %182, %183, %cst_83 {dimension_numbers = #tpu.dot_dimension_numbers<[1], [0], [0], [1], [0, 0, 1, 1], [], []>} : vector<1x128xf32>, vector<128x64xf32>, vector<1x64xf32> -> vector<1x64xf32>
    %c0_84 = arith.constant 0 : index
    %c0_85 = arith.constant 0 : index
    %185 = vector.load %arg13[%c0_84, %c0_85] : memref<1x64xf32, #tpu.memory_space<vmem>>, vector<1x64xf32>
    %186 = arith.addf %184, %185 : vector<1x64xf32>
    %cst_86 = arith.constant 0.000000e+00 : f32
    %187 = vector.broadcast %cst_86 : f32 to vector<1x64xf32>
    %188 = arith.maximumf %186, %187 : vector<1x64xf32>
    %c0_87 = arith.constant 0 : index
    %c0_88 = arith.constant 0 : index
    %189 = vector.load %arg14[%c0_87, %c0_88] : memref<64x32xf32, #tpu.memory_space<vmem>>, vector<64x32xf32>
    %cst_89 = arith.constant dense<0.000000e+00> : vector<1x32xf32>
    %190 = tpu.matmul %188, %189, %cst_89 {dimension_numbers = #tpu.dot_dimension_numbers<[1], [0], [0], [1], [0, 0, 1, 1], [], []>} : vector<1x64xf32>, vector<64x32xf32>, vector<1x32xf32> -> vector<1x32xf32>
    %c0_90 = arith.constant 0 : index
    %c0_91 = arith.constant 0 : index
    %191 = vector.load %arg15[%c0_90, %c0_91] : memref<1x32xf32, #tpu.memory_space<vmem>>, vector<1x32xf32>
    %192 = arith.addf %190, %191 : vector<1x32xf32>
    %cst_92 = arith.constant 0.000000e+00 : f32
    %193 = vector.broadcast %cst_92 : f32 to vector<1x32xf32>
    %194 = arith.maximumf %192, %193 : vector<1x32xf32>
    %c0_93 = arith.constant 0 : index
    %c0_94 = arith.constant 0 : index
    %195 = vector.load %arg16[%c0_93, %c0_94] : memref<32x16xf32, #tpu.memory_space<vmem>>, vector<32x16xf32>
    %cst_95 = arith.constant dense<0.000000e+00> : vector<1x16xf32>
    %196 = tpu.matmul %194, %195, %cst_95 {dimension_numbers = #tpu.dot_dimension_numbers<[1], [0], [0], [1], [0, 0, 1, 1], [], []>} : vector<1x32xf32>, vector<32x16xf32>, vector<1x16xf32> -> vector<1x16xf32>
    %c0_96 = arith.constant 0 : index
    %c0_97 = arith.constant 0 : index
    %197 = vector.load %arg17[%c0_96, %c0_97] : memref<1x16xf32, #tpu.memory_space<vmem>>, vector<1x16xf32>
    %198 = arith.addf %196, %197 : vector<1x16xf32>
    %cst_98 = arith.constant 0.000000e+00 : f32
    %199 = vector.broadcast %cst_98 : f32 to vector<1x16xf32>
    %200 = arith.maximumf %198, %199 : vector<1x16xf32>
    %c0_99 = arith.constant 0 : index
    %c0_100 = arith.constant 0 : index
    %201 = vector.load %arg18[%c0_99, %c0_100] : memref<1x16xf32, #tpu.memory_space<vmem>>, vector<1x16xf32>
    %202 = arith.mulf %200, %201 : vector<1x16xf32>
    %cst_101 = arith.constant dense<0.000000e+00> : vector<1xf32>
    %203 = vector.multi_reduction <add>, %202, %cst_101 [1] : vector<1x16xf32> to vector<1xf32>
    %204 = vector.shape_cast %203 : vector<1xf32> to vector<1x1xf32>
    %c0_102 = arith.constant 0 : index
    %c0_103 = arith.constant 0 : index
    %205 = vector.load %arg19[%c0_102, %c0_103] : memref<1x1xf32, #tpu.memory_space<vmem>>, vector<1x1xf32>
    %206 = arith.addf %204, %205 : vector<1x1xf32>
    %cst_104 = arith.constant 0.000000e+00 : f32
    %207 = vector.broadcast %cst_104 : f32 to vector<1x1xf32>
    %208 = arith.subf %207, %206 : vector<1x1xf32>
    %209 = math.exp %208 : vector<1x1xf32>
    %cst_105 = arith.constant 1.000000e+00 : f32
    %210 = vector.broadcast %cst_105 : f32 to vector<1x1xf32>
    %211 = arith.addf %210, %209 : vector<1x1xf32>
    %212 = tpu.reciprocal %211 {approx = true} : vector<1x1xf32> -> vector<1x1xf32>
    %c0_106 = arith.constant 0 : index
    %c0_107 = arith.constant 0 : index
    %c0_108 = arith.constant 0 : index
    %213 = vector.load %arg20[%c0_106, %c0_107, %c0_108] : memref<1x1x1xf32, #tpu.memory_space<vmem>>, vector<1x1x1xf32>
    %214 = vector.shape_cast %213 : vector<1x1x1xf32> to vector<1x1xf32>
    %215 = vector.shape_cast %212 : vector<1x1xf32> to vector<1x1x1xf32>
    tpu.vector_store %arg20[%c0_106, %c0_107, %c0_108], %215 {strides = array<i32>} : memref<1x1x1xf32, #tpu.memory_space<vmem>>, vector<1x1x1xf32>,
    return
  }
  func.func @transform_0(%arg0: i32) -> (i32, i32, i32) {
    %c0_i32 = arith.constant 0 : i32
    %c0_i32_0 = arith.constant 0 : i32
    %c0_i32_1 = arith.constant 0 : i32
    return %arg0, %c0_i32, %c0_i32_0 : i32, i32, i32
  }
  func.func @transform_1(%arg0: i32) -> (i32, i32, i32) {
    %c0_i32 = arith.constant 0 : i32
    %c0_i32_0 = arith.constant 0 : i32
    %c0_i32_1 = arith.constant 0 : i32
    return %arg0, %c0_i32, %c0_i32_0 : i32, i32, i32
  }
  func.func @transform_2(%arg0: i32) -> (i32, i32, i32) {
    %c0_i32 = arith.constant 0 : i32
    %c0_i32_0 = arith.constant 0 : i32
    %c0_i32_1 = arith.constant 0 : i32
    return %arg0, %c0_i32, %c0_i32_0 : i32, i32, i32
  }
  func.func @transform_3(%arg0: i32) -> (i32, i32, i32) {
    %c0_i32 = arith.constant 0 : i32
    %c0_i32_0 = arith.constant 0 : i32
    %c0_i32_1 = arith.constant 0 : i32
    return %arg0, %c0_i32, %c0_i32_0 : i32, i32, i32
  }
  func.func @transform_4(%arg0: i32) -> (i32, i32) {
    %c0_i32 = arith.constant 0 : i32
    %c0_i32_0 = arith.constant 0 : i32
    %c0_i32_1 = arith.constant 0 : i32
    return %c0_i32, %c0_i32_0 : i32, i32
  }
  func.func @transform_5(%arg0: i32) -> (i32, i32) {
    %c0_i32 = arith.constant 0 : i32
    %c0_i32_0 = arith.constant 0 : i32
    %c0_i32_1 = arith.constant 0 : i32
    return %c0_i32, %c0_i32_0 : i32, i32
  }
  func.func @transform_6(%arg0: i32) -> (i32, i32) {
    %c0_i32 = arith.constant 0 : i32
    %c0_i32_0 = arith.constant 0 : i32
    %c0_i32_1 = arith.constant 0 : i32
    return %c0_i32, %c0_i32_0 : i32, i32
  }
  func.func @transform_7(%arg0: i32) -> (i32, i32) {
    %c0_i32 = arith.constant 0 : i32
    %c0_i32_0 = arith.constant 0 : i32
    %c0_i32_1 = arith.constant 0 : i32
    return %c0_i32, %c0_i32_0 : i32, i32
  }
  func.func @transform_8(%arg0: i32) -> (i32, i32) {
    %c0_i32 = arith.constant 0 : i32
    %c0_i32_0 = arith.constant 0 : i32
    %c0_i32_1 = arith.constant 0 : i32
    return %c0_i32, %c0_i32_0 : i32, i32
  }
  func.func @transform_9(%arg0: i32) -> (i32, i32) {
    %c0_i32 = arith.constant 0 : i32
    %c0_i32_0 = arith.constant 0 : i32
    %c0_i32_1 = arith.constant 0 : i32
    return %c0_i32, %c0_i32_0 : i32, i32
  }
  func.func @transform_10(%arg0: i32) -> (i32, i32) {
    %c0_i32 = arith.constant 0 : i32
    %c0_i32_0 = arith.constant 0 : i32
    %c0_i32_1 = arith.constant 0 : i32
    return %c0_i32, %c0_i32_0 : i32, i32
  }
  func.func @transform_11(%arg0: i32) -> (i32, i32) {
    %c0_i32 = arith.constant 0 : i32
    %c0_i32_0 = arith.constant 0 : i32
    %c0_i32_1 = arith.constant 0 : i32
    return %c0_i32, %c0_i32_0 : i32, i32
  }
  func.func @transform_12(%arg0: i32) -> (i32, i32) {
    %c0_i32 = arith.constant 0 : i32
    %c0_i32_0 = arith.constant 0 : i32
    %c0_i32_1 = arith.constant 0 : i32
    return %c0_i32, %c0_i32_0 : i32, i32
  }
  func.func @transform_13(%arg0: i32) -> (i32, i32) {
    %c0_i32 = arith.constant 0 : i32
    %c0_i32_0 = arith.constant 0 : i32
    %c0_i32_1 = arith.constant 0 : i32
    return %c0_i32, %c0_i32_0 : i32, i32
  }
  func.func @transform_14(%arg0: i32) -> (i32, i32) {
    %c0_i32 = arith.constant 0 : i32
    %c0_i32_0 = arith.constant 0 : i32
    %c0_i32_1 = arith.constant 0 : i32
    return %c0_i32, %c0_i32_0 : i32, i32
  }
  func.func @transform_15(%arg0: i32) -> (i32, i32) {
    %c0_i32 = arith.constant 0 : i32
    %c0_i32_0 = arith.constant 0 : i32
    %c0_i32_1 = arith.constant 0 : i32
    return %c0_i32, %c0_i32_0 : i32, i32
  }
  func.func @transform_16(%arg0: i32) -> (i32, i32) {
    %c0_i32 = arith.constant 0 : i32
    %c0_i32_0 = arith.constant 0 : i32
    %c0_i32_1 = arith.constant 0 : i32
    return %c0_i32, %c0_i32_0 : i32, i32
  }
  func.func @transform_17(%arg0: i32) -> (i32, i32) {
    %c0_i32 = arith.constant 0 : i32
    %c0_i32_0 = arith.constant 0 : i32
    %c0_i32_1 = arith.constant 0 : i32
    return %c0_i32, %c0_i32_0 : i32, i32
  }
  func.func @transform_18(%arg0: i32) -> (i32, i32) {
    %c0_i32 = arith.constant 0 : i32
    %c0_i32_0 = arith.constant 0 : i32
    %c0_i32_1 = arith.constant 0 : i32
    return %c0_i32, %c0_i32_0 : i32, i32
  }
  func.func @transform_19(%arg0: i32) -> (i32, i32, i32) {
    %c0_i32 = arith.constant 0 : i32
    %c0_i32_0 = arith.constant 0 : i32
    %c0_i32_1 = arith.constant 0 : i32
    return %arg0, %c0_i32, %c0_i32_0 : i32, i32, i32
  }
}

</mosaic_0001>

<llo_original>
// kernel: tpu_custom_call.1
$region0: #{tpu_custom_call.1}
  #allocation0 [shape = 'u32[]', space=smem, size = 0x4, offset = 0x4, fixed_abs, tag = 'smem constant byte address 0x4 - core index']
  #allocation1 [shape = 'u32[144,128]{1,0:T(1,128)}', space=vmem, size = 0x12000, scoped, tag = 'internal scratch']
  #allocation2 [shape = 'f32[1,1]{1,0:T(1,128)S(1)}', space=vmem, size = 0x200, scoped, tag = 'scoped memory for tpu_custom_call.1']
  %s0 = inlined_call_operand.vmem [shape: f32[2,8,16], index: 0, kind: input, shape index: {}]
  %s1 = inlined_call_operand.vmem [shape: f32[2,8,16], index: 1, kind: input, shape index: {}]
  %s2 = inlined_call_operand.vmem [shape: f32[2,8,8], index: 2, kind: input, shape index: {}]
  %s3 = inlined_call_operand.vmem [shape: f32[2,8,8], index: 3, kind: input, shape index: {}]
  %s4 = inlined_call_operand.vmem [shape: f32[16,32], index: 4, kind: input, shape index: {}]
  %s5 = inlined_call_operand.vmem [shape: f32[1,32], index: 5, kind: input, shape index: {}]
  %s6 = inlined_call_operand.vmem [shape: f32[32,32], index: 6, kind: input, shape index: {}]
  %s7 = inlined_call_operand.vmem [shape: f32[1,32], index: 7, kind: input, shape index: {}]
  %s8 = inlined_call_operand.vmem [shape: f32[32,32], index: 8, kind: input, shape index: {}]
  %s9 = inlined_call_operand.vmem [shape: f32[1,32], index: 9, kind: input, shape index: {}]
  %s10 = inlined_call_operand.vmem [shape: f32[32,32], index: 10, kind: input, shape index: {}]
  %s11 = inlined_call_operand.vmem [shape: f32[128,64], index: 11, kind: input, shape index: {}]
  %s12 = inlined_call_operand.vmem [shape: f32[1,64], index: 12, kind: input, shape index: {}]
  %s13 = inlined_call_operand.vmem [shape: f32[64,32], index: 13, kind: input, shape index: {}]
  %s14 = inlined_call_operand.vmem [shape: f32[1,32], index: 14, kind: input, shape index: {}]
  %s15 = inlined_call_operand.vmem [shape: f32[32,16], index: 15, kind: input, shape index: {}]
  %s16 = inlined_call_operand.vmem [shape: f32[1,16], index: 16, kind: input, shape index: {}]
  %s17 = inlined_call_operand.vmem [shape: f32[1,16], index: 17, kind: input, shape index: {}]
  %s18 = inlined_call_operand.<no memory space> [shape: f32[1,1], index: 18, kind: input, shape index: {}]
  %s19 = inlined_call_operand.vmem [shape: f32[2,1,1], index: 19, kind: output, shape index: {}]
  %s20 = sld [smem:[#allocation0]]
  $region109: #{tpu_custom_call.1} parent=0
    _
  %s22 = ssub.s32 1, %s20
  %s23 = scalar_select 0, %s22, %s20
  %v24 = vstv %s18
  %25 = vst [vmem:[#allocation2] sm:$0x1] %v24
  loop: start=0, step=1, limit=4
  $region2: #{tpu_custom_call.1} parent=0 // loop_pre_header
    _
  $region3: #{tpu_custom_call.1} parent=0 // loop_header
    %s27 = sphi 0, %s31
    %p28 = scmp.ge.s32.totalorder %s27, 4
    %s37 = sphi 0, %s39
    %s40 = sphi 0, %s37
    %s41 = sphi 0, %s40
    %s57 = sphi 0, %s41
    %s63 = sphi 0, %s65
    %s66 = sphi 0, %s63
    %s67 = sphi 0, %s66
    %s83 = sphi 0, %s67
    %s89 = sphi 0, %s91
    %s92 = sphi 0, %s89
    %s93 = sphi 0, %s92
    %s109 = sphi 0, %s93
    %s115 = sphi 0, %s117
    %s118 = sphi 0, %s115
    %s119 = sphi 0, %s118
    %s135 = sphi 0, %s119
    %s139 = sphi 0, %s139
    %s141 = sphi 0, %s139
    %s142 = sphi 0, %s141
    %s156 = sphi 0, %s142
    %s160 = sphi 0, %s160
    %s162 = sphi 0, %s160
    %s163 = sphi 0, %s162
    %s177 = sphi 0, %s163
    %s181 = sphi 0, %s181
    %s183 = sphi 0, %s181
    %s184 = sphi 0, %s183
    %s198 = sphi 0, %s184
    %s202 = sphi 0, %s202
    %s204 = sphi 0, %s202
    %s205 = sphi 0, %s204
    %s219 = sphi 0, %s205
    %s223 = sphi 0, %s223
    %s225 = sphi 0, %s223
    %s226 = sphi 0, %s225
    %s240 = sphi 0, %s226
    %s244 = sphi 0, %s244
    %s246 = sphi 0, %s244
    %s247 = sphi 0, %s246
    %s261 = sphi 0, %s247
    %s265 = sphi 0, %s265
    %s267 = sphi 0, %s265
    %s268 = sphi 0, %s267
    %s282 = sphi 0, %s268
    %s286 = sphi 0, %s286
    %s288 = sphi 0, %s286
    %s289 = sphi 0, %s288
    %s303 = sphi 0, %s289
    %s307 = sphi 0, %s307
    %s309 = sphi 0, %s307
    %s310 = sphi 0, %s309
    %s324 = sphi 0, %s310
    %s328 = sphi 0, %s328
    %s330 = sphi 0, %s328
    %s331 = sphi 0, %s330
    %s345 = sphi 0, %s331
    %s349 = sphi 0, %s349
    %s351 = sphi 0, %s349
    %s352 = sphi 0, %s351
    %s366 = sphi 0, %s352
    %s370 = sphi 0, %s370
    %s372 = sphi 0, %s370
    %s373 = sphi 0, %s372
    %s387 = sphi 0, %s373
    %s391 = sphi 0, %s391
    %s393 = sphi 0, %s391
    %s394 = sphi 0, %s393
    %s408 = sphi 0, %s394
    %s412 = sphi 0, %s412
    %s414 = sphi 0, %s412
    %s415 = sphi 0, %s414
    %s429 = sphi 0, %s415
    %s433 = sphi 0, %s433
    %s435 = sphi 0, %s433
    %s436 = sphi 0, %s435
    %s450 = sphi 0, %s436
    %s456 = sphi 0, %s458
    %s459 = sphi 0, %s456
    %s460 = sphi 0, %s459
    %s476 = sphi 0, %s460
  $region4: #{tpu_custom_call.1} parent=0 // loop_header_branch
    %30 = sbr.rel (%p28) target = $region8
  $region5: #{tpu_custom_call.1} parent=0 // loop_body
    %s32 = ssub.s32 %s27, 1
    %s33 = ssub.s32 %s27, 2
    %s34 = sadd.s32 %s27, 1
    %s35 = ssub.s32 %s27, %s34
    %p36 = scmp.eq.s32.totalorder %s35, 0
    %s38 = sadd.s32 %s37, 1
    %s39 = scalar_select %p36, %s37, %s38
    %p42 = pneg %p36
    %p43 = scmp.eq.s32.totalorder %s27, 1
    %p44 = por %p42, %p43
    %p45 = scmp.ne.s32.totalorder %s37, %s40
    %p46 = scmp.eq.s32.totalorder %s27, 0
    %p47 = por %p45, %p46
    %p48 = scmp.ne.s32.totalorder %s37, %s40
    %p49 = scmp.eq.s32.totalorder %s32, 1
    %p50 = por %p48, %p49
    %p51 = scmp.ne.s32.totalorder %s40, %s41
    %p52 = scmp.eq.s32.totalorder %s32, 0
    %p53 = por %p51, %p52
    %p54 = scmp.ne.s32.totalorder %s40, %s41
    %p55 = scmp.eq.s32.totalorder %s33, 1
    %p56 = por %p54, %p55
    %p58 = scmp.ne.s32.totalorder %s41, %s57
    %p59 = scmp.eq.s32.totalorder %s33, 0
    %p60 = por %p58, %p59
    %s61 = ssub.s32 %s27, %s34
    %p62 = scmp.eq.s32.totalorder %s61, 0
    %s64 = sadd.s32 %s63, 1
    %s65 = scalar_select %p62, %s63, %s64
    %p68 = pneg %p62
    %p69 = scmp.eq.s32.totalorder %s27, 1
    %p70 = por %p68, %p69
    %p71 = scmp.ne.s32.totalorder %s63, %s66
    %p72 = scmp.eq.s32.totalorder %s27, 0
    %p73 = por %p71, %p72
    %p74 = scmp.ne.s32.totalorder %s63, %s66
    %p75 = scmp.eq.s32.totalorder %s32, 1
    %p76 = por %p74, %p75
    %p77 = scmp.ne.s32.totalorder %s66, %s67
    %p78 = scmp.eq.s32.totalorder %s32, 0
    %p79 = por %p77, %p78
    %p80 = scmp.ne.s32.totalorder %s66, %s67
    %p81 = scmp.eq.s32.totalorder %s33, 1
    %p82 = por %p80, %p81
    %p84 = scmp.ne.s32.totalorder %s67, %s83
    %p85 = scmp.eq.s32.totalorder %s33, 0
    %p86 = por %p84, %p85
    %s87 = ssub.s32 %s27, %s34
    %p88 = scmp.eq.s32.totalorder %s87, 0
    %s90 = sadd.s32 %s89, 1
    %s91 = scalar_select %p88, %s89, %s90
    %p94 = pneg %p88
    %p95 = scmp.eq.s32.totalorder %s27, 1
    %p96 = por %p94, %p95
    %p97 = scmp.ne.s32.totalorder %s89, %s92
    %p98 = scmp.eq.s32.totalorder %s27, 0
    %p99 = por %p97, %p98
    %p100 = scmp.ne.s32.totalorder %s89, %s92
    %p101 = scmp.eq.s32.totalorder %s32, 1
    %p102 = por %p100, %p101
    %p103 = scmp.ne.s32.totalorder %s92, %s93
    %p104 = scmp.eq.s32.totalorder %s32, 0
    %p105 = por %p103, %p104
    %p106 = scmp.ne.s32.totalorder %s92, %s93
    %p107 = scmp.eq.s32.totalorder %s33, 1
    %p108 = por %p106, %p107
    %p110 = scmp.ne.s32.totalorder %s93, %s109
    %p111 = scmp.eq.s32.totalorder %s33, 0
    %p112 = por %p110, %p111
    %s113 = ssub.s32 %s27, %s34
    %p114 = scmp.eq.s32.totalorder %s113, 0
    %s116 = sadd.s32 %s115, 1
    %s117 = scalar_select %p114, %s115, %s116
    %p120 = pneg %p114
    %p121 = scmp.eq.s32.totalorder %s27, 1
    %p122 = por %p120, %p121
    %p123 = scmp.ne.s32.totalorder %s115, %s118
    %p124 = scmp.eq.s32.totalorder %s27, 0
    %p125 = por %p123, %p124
    %p126 = scmp.ne.s32.totalorder %s115, %s118
    %p127 = scmp.eq.s32.totalorder %s32, 1
    %p128 = por %p126, %p127
    %p129 = scmp.ne.s32.totalorder %s118, %s119
    %p130 = scmp.eq.s32.totalorder %s32, 0
    %p131 = por %p129, %p130
    %p132 = scmp.ne.s32.totalorder %s118, %s119
    %p133 = scmp.eq.s32.totalorder %s33, 1
    %p134 = por %p132, %p133
    %p136 = scmp.ne.s32.totalorder %s119, %s135
    %p137 = scmp.eq.s32.totalorder %s33, 0
    %p138 = por %p136, %p137
    %s140 = sadd.s32 %s139, 1
    %p143 = scmp.eq.s32.totalorder %s27, 1
    %p144 = scmp.ne.s32.totalorder %s139, %s141
    %p145 = scmp.eq.s32.totalorder %s27, 0
    %p146 = por %p144, %p145
    %p147 = scmp.ne.s32.totalorder %s139, %s141
    %p148 = scmp.eq.s32.totalorder %s32, 1
    %p149 = por %p147, %p148
    %p150 = scmp.ne.s32.totalorder %s141, %s142
    %p151 = scmp.eq.s32.totalorder %s32, 0
    %p152 = por %p150, %p151
    %p153 = scmp.ne.s32.totalorder %s141, %s142
    %p154 = scmp.eq.s32.totalorder %s33, 1
    %p155 = por %p153, %p154
    %p157 = scmp.ne.s32.totalorder %s142, %s156
    %p158 = scmp.eq.s32.totalorder %s33, 0
    %p159 = por %p157, %p158
    %s161 = sadd.s32 %s160, 1
    %p164 = scmp.eq.s32.totalorder %s27, 1
    %p165 = scmp.ne.s32.totalorder %s160, %s162
    %p166 = scmp.eq.s32.totalorder %s27, 0
    %p167 = por %p165, %p166
    %p168 = scmp.ne.s32.totalorder %s160, %s162
    %p169 = scmp.eq.s32.totalorder %s32, 1
    %p170 = por %p168, %p169
    %p171 = scmp.ne.s32.totalorder %s162, %s163
    %p172 = scmp.eq.s32.totalorder %s32, 0
    %p173 = por %p171, %p172
    %p174 = scmp.ne.s32.totalorder %s162, %s163
    %p175 = scmp.eq.s32.totalorder %s33, 1
    %p176 = por %p174, %p175
    %p178 = scmp.ne.s32.totalorder %s163, %s177
    %p179 = scmp.eq.s32.totalorder %s33, 0
    %p180 = por %p178, %p179
    %s182 = sadd.s32 %s181, 1
    %p185 = scmp.eq.s32.totalorder %s27, 1
    %p186 = scmp.ne.s32.totalorder %s181, %s183
    %p187 = scmp.eq.s32.totalorder %s27, 0
    %p188 = por %p186, %p187
    %p189 = scmp.ne.s32.totalorder %s181, %s183
    %p190 = scmp.eq.s32.totalorder %s32, 1
    %p191 = por %p189, %p190
    %p192 = scmp.ne.s32.totalorder %s183, %s184
    %p193 = scmp.eq.s32.totalorder %s32, 0
    %p194 = por %p192, %p193
    %p195 = scmp.ne.s32.totalorder %s183, %s184
    %p196 = scmp.eq.s32.totalorder %s33, 1
    %p197 = por %p195, %p196
    %p199 = scmp.ne.s32.totalorder %s184, %s198
    %p200 = scmp.eq.s32.totalorder %s33, 0
    %p201 = por %p199, %p200
    %s203 = sadd.s32 %s202, 1
    %p206 = scmp.eq.s32.totalorder %s27, 1
    %p207 = scmp.ne.s32.totalorder %s202, %s204
    %p208 = scmp.eq.s32.totalorder %s27, 0
    %p209 = por %p207, %p208
    %p210 = scmp.ne.s32.totalorder %s202, %s204
    %p211 = scmp.eq.s32.totalorder %s32, 1
    %p212 = por %p210, %p211
    %p213 = scmp.ne.s32.totalorder %s204, %s205
    %p214 = scmp.eq.s32.totalorder %s32, 0
    %p215 = por %p213, %p214
    %p216 = scmp.ne.s32.totalorder %s204, %s205
    %p217 = scmp.eq.s32.totalorder %s33, 1
    %p218 = por %p216, %p217
    %p220 = scmp.ne.s32.totalorder %s205, %s219
    %p221 = scmp.eq.s32.totalorder %s33, 0
    %p222 = por %p220, %p221
    %s224 = sadd.s32 %s223, 1
    %p227 = scmp.eq.s32.totalorder %s27, 1
    %p228 = scmp.ne.s32.totalorder %s223, %s225
    %p229 = scmp.eq.s32.totalorder %s27, 0
    %p230 = por %p228, %p229
    %p231 = scmp.ne.s32.totalorder %s223, %s225
    %p232 = scmp.eq.s32.totalorder %s32, 1
    %p233 = por %p231, %p232
    %p234 = scmp.ne.s32.totalorder %s225, %s226
    %p235 = scmp.eq.s32.totalorder %s32, 0
    %p236 = por %p234, %p235
    %p237 = scmp.ne.s32.totalorder %s225, %s226
    %p238 = scmp.eq.s32.totalorder %s33, 1
    %p239 = por %p237, %p238
    %p241 = scmp.ne.s32.totalorder %s226, %s240
    %p242 = scmp.eq.s32.totalorder %s33, 0
    %p243 = por %p241, %p242
    %s245 = sadd.s32 %s244, 1
    %p248 = scmp.eq.s32.totalorder %s27, 1
    %p249 = scmp.ne.s32.totalorder %s244, %s246
    %p250 = scmp.eq.s32.totalorder %s27, 0
    %p251 = por %p249, %p250
    %p252 = scmp.ne.s32.totalorder %s244, %s246
    %p253 = scmp.eq.s32.totalorder %s32, 1
    %p254 = por %p252, %p253
    %p255 = scmp.ne.s32.totalorder %s246, %s247
    %p256 = scmp.eq.s32.totalorder %s32, 0
    %p257 = por %p255, %p256
    %p258 = scmp.ne.s32.totalorder %s246, %s247
    %p259 = scmp.eq.s32.totalorder %s33, 1
    %p260 = por %p258, %p259
    %p262 = scmp.ne.s32.totalorder %s247, %s261
    %p263 = scmp.eq.s32.totalorder %s33, 0
    %p264 = por %p262, %p263
    %s266 = sadd.s32 %s265, 1
    %p269 = scmp.eq.s32.totalorder %s27, 1
    %p270 = scmp.ne.s32.totalorder %s265, %s267
    %p271 = scmp.eq.s32.totalorder %s27, 0
    %p272 = por %p270, %p271
    %p273 = scmp.ne.s32.totalorder %s265, %s267
    %p274 = scmp.eq.s32.totalorder %s32, 1
    %p275 = por %p273, %p274
    %p276 = scmp.ne.s32.totalorder %s267, %s268
    %p277 = scmp.eq.s32.totalorder %s32, 0
    %p278 = por %p276, %p277
    %p279 = scmp.ne.s32.totalorder %s267, %s268
    %p280 = scmp.eq.s32.totalorder %s33, 1
    %p281 = por %p279, %p280
    %p283 = scmp.ne.s32.totalorder %s268, %s282
    %p284 = scmp.eq.s32.totalorder %s33, 0
    %p285 = por %p283, %p284
    %s287 = sadd.s32 %s286, 1
    %p290 = scmp.eq.s32.totalorder %s27, 1
    %p291 = scmp.ne.s32.totalorder %s286, %s288
    %p292 = scmp.eq.s32.totalorder %s27, 0
    %p293 = por %p291, %p292
    %p294 = scmp.ne.s32.totalorder %s286, %s288
    %p295 = scmp.eq.s32.totalorder %s32, 1
    %p296 = por %p294, %p295
    %p297 = scmp.ne.s32.totalorder %s288, %s289
    %p298 = scmp.eq.s32.totalorder %s32, 0
    %p299 = por %p297, %p298
    %p300 = scmp.ne.s32.totalorder %s288, %s289
    %p301 = scmp.eq.s32.totalorder %s33, 1
    %p302 = por %p300, %p301
    %p304 = scmp.ne.s32.totalorder %s289, %s303
    %p305 = scmp.eq.s32.totalorder %s33, 0
    %p306 = por %p304, %p305
    %s308 = sadd.s32 %s307, 1
    %p311 = scmp.eq.s32.totalorder %s27, 1
    %p312 = scmp.ne.s32.totalorder %s307, %s309
    %p313 = scmp.eq.s32.totalorder %s27, 0
    %p314 = por %p312, %p313
    %p315 = scmp.ne.s32.totalorder %s307, %s309
    %p316 = scmp.eq.s32.totalorder %s32, 1
    %p317 = por %p315, %p316
    %p318 = scmp.ne.s32.totalorder %s309, %s310
    %p319 = scmp.eq.s32.totalorder %s32, 0
    %p320 = por %p318, %p319
    %p321 = scmp.ne.s32.totalorder %s309, %s310
    %p322 = scmp.eq.s32.totalorder %s33, 1
    %p323 = por %p321, %p322
    %p325 = scmp.ne.s32.totalorder %s310, %s324
    %p326 = scmp.eq.s32.totalorder %s33, 0
    %p327 = por %p325, %p326
    %s329 = sadd.s32 %s328, 1
    %p332 = scmp.eq.s32.totalorder %s27, 1
    %p333 = scmp.ne.s32.totalorder %s328, %s330
    %p334 = scmp.eq.s32.totalorder %s27, 0
    %p335 = por %p333, %p334
    %p336 = scmp.ne.s32.totalorder %s328, %s330
    %p337 = scmp.eq.s32.totalorder %s32, 1
    %p338 = por %p336, %p337
    %p339 = scmp.ne.s32.totalorder %s330, %s331
    %p340 = scmp.eq.s32.totalorder %s32, 0
    %p341 = por %p339, %p340
    %p342 = scmp.ne.s32.totalorder %s330, %s331
    %p343 = scmp.eq.s32.totalorder %s33, 1
    %p344 = por %p342, %p343
    %p346 = scmp.ne.s32.totalorder %s331, %s345
    %p347 = scmp.eq.s32.totalorder %s33, 0
    %p348 = por %p346, %p347
    %s350 = sadd.s32 %s349, 1
    %p353 = scmp.eq.s32.totalorder %s27, 1
    %p354 = scmp.ne.s32.totalorder %s349, %s351
    %p355 = scmp.eq.s32.totalorder %s27, 0
    %p356 = por %p354, %p355
    %p357 = scmp.ne.s32.totalorder %s349, %s351
    %p358 = scmp.eq.s32.totalorder %s32, 1
    %p359 = por %p357, %p358
    %p360 = scmp.ne.s32.totalorder %s351, %s352
    %p361 = scmp.eq.s32.totalorder %s32, 0
    %p362 = por %p360, %p361
    %p363 = scmp.ne.s32.totalorder %s351, %s352
    %p364 = scmp.eq.s32.totalorder %s33, 1
    %p365 = por %p363, %p364
    %p367 = scmp.ne.s32.totalorder %s352, %s366
    %p368 = scmp.eq.s32.totalorder %s33, 0
    %p369 = por %p367, %p368
    %s371 = sadd.s32 %s370, 1
    %p374 = scmp.eq.s32.totalorder %s27, 1
    %p375 = scmp.ne.s32.totalorder %s370, %s372
    %p376 = scmp.eq.s32.totalorder %s27, 0
    %p377 = por %p375, %p376
    %p378 = scmp.ne.s32.totalorder %s370, %s372
    %p379 = scmp.eq.s32.totalorder %s32, 1
    %p380 = por %p378, %p379
    %p381 = scmp.ne.s32.totalorder %s372, %s373
    %p382 = scmp.eq.s32.totalorder %s32, 0
    %p383 = por %p381, %p382
    %p384 = scmp.ne.s32.totalorder %s372, %s373
    %p385 = scmp.eq.s32.totalorder %s33, 1
    %p386 = por %p384, %p385
    %p388 = scmp.ne.s32.totalorder %s373, %s387
    %p389 = scmp.eq.s32.totalorder %s33, 0
    %p390 = por %p388, %p389
    %s392 = sadd.s32 %s391, 1
    %p395 = scmp.eq.s32.totalorder %s27, 1
    %p396 = scmp.ne.s32.totalorder %s391, %s393
    %p397 = scmp.eq.s32.totalorder %s27, 0
    %p398 = por %p396, %p397
    %p399 = scmp.ne.s32.totalorder %s391, %s393
    %p400 = scmp.eq.s32.totalorder %s32, 1
    %p401 = por %p399, %p400
    %p402 = scmp.ne.s32.totalorder %s393, %s394
    %p403 = scmp.eq.s32.totalorder %s32, 0
    %p404 = por %p402, %p403
    %p405 = scmp.ne.s32.totalorder %s393, %s394
    %p406 = scmp.eq.s32.totalorder %s33, 1
    %p407 = por %p405, %p406
    %p409 = scmp.ne.s32.totalorder %s394, %s408
    %p410 = scmp.eq.s32.totalorder %s33, 0
    %p411 = por %p409, %p410
    %s413 = sadd.s32 %s412, 1
    %p416 = scmp.eq.s32.totalorder %s27, 1
    %p417 = scmp.ne.s32.totalorder %s412, %s414
    %p418 = scmp.eq.s32.totalorder %s27, 0
    %p419 = por %p417, %p418
    %p420 = scmp.ne.s32.totalorder %s412, %s414
    %p421 = scmp.eq.s32.totalorder %s32, 1
    %p422 = por %p420, %p421
    %p423 = scmp.ne.s32.totalorder %s414, %s415
    %p424 = scmp.eq.s32.totalorder %s32, 0
    %p425 = por %p423, %p424
    %p426 = scmp.ne.s32.totalorder %s414, %s415
    %p427 = scmp.eq.s32.totalorder %s33, 1
    %p428 = por %p426, %p427
    %p430 = scmp.ne.s32.totalorder %s415, %s429
    %p431 = scmp.eq.s32.totalorder %s33, 0
    %p432 = por %p430, %p431
    %s434 = sadd.s32 %s433, 1
    %p437 = scmp.eq.s32.totalorder %s27, 1
    %p438 = scmp.ne.s32.totalorder %s433, %s435
    %p439 = scmp.eq.s32.totalorder %s27, 0
    %p440 = por %p438, %p439
    %p441 = scmp.ne.s32.totalorder %s433, %s435
    %p442 = scmp.eq.s32.totalorder %s32, 1
    %p443 = por %p441, %p442
    %p444 = scmp.ne.s32.totalorder %s435, %s436
    %p445 = scmp.eq.s32.totalorder %s32, 0
    %p446 = por %p444, %p445
    %p447 = scmp.ne.s32.totalorder %s435, %s436
    %p448 = scmp.eq.s32.totalorder %s33, 1
    %p449 = por %p447, %p448
    %p451 = scmp.ne.s32.totalorder %s436, %s450
    %p452 = scmp.eq.s32.totalorder %s33, 0
    %p453 = por %p451, %p452
    %s454 = ssub.s32 %s27, %s34
    %p455 = scmp.eq.s32.totalorder %s454, 0
    %s457 = sadd.s32 %s456, 1
    %s458 = scalar_select %p455, %s456, %s457
    %p461 = pneg %p455
    %p462 = scmp.eq.s32.totalorder %s27, 1
    %p463 = por %p461, %p462
    %p464 = scmp.ne.s32.totalorder %s456, %s459
    %p465 = scmp.eq.s32.totalorder %s27, 0
    %p466 = por %p464, %p465
    %p467 = scmp.ne.s32.totalorder %s456, %s459
    %p468 = scmp.eq.s32.totalorder %s32, 1
    %p469 = por %p467, %p468
    %p470 = scmp.ne.s32.totalorder %s459, %s460
    %p471 = scmp.eq.s32.totalorder %s32, 0
    %p472 = por %p470, %p471
    %p473 = scmp.ne.s32.totalorder %s459, %s460
    %p474 = scmp.eq.s32.totalorder %s33, 1
    %p475 = por %p473, %p474
    %p477 = scmp.ne.s32.totalorder %s460, %s476
    %p478 = scmp.eq.s32.totalorder %s33, 0
    %p479 = por %p477, %p478
    %p480 = scmp.le.s32.totalorder 1, %s27
    %p481 = scmp.lt.s32.totalorder %s27, 3
    %p482 = pnand %p480, %p481
    %p483 = pneg %p482
    // Predicated region
    $region9: #{tpu_custom_call.1} parent=5 // pred_check
      _
    $region10: #{tpu_custom_call.1} parent=5 // pred_check_branch
      %485 = sbr.rel (%p482) target = $region12
    $region11: #{tpu_custom_call.1} parent=5 // pred_region
      %s486 = ssub.s32 %s27, 1
      // Predicated region
      $region13: #{tpu_custom_call.1} parent=11 // pred_check
        %p487 = pneg %p152
      $region14: #{tpu_custom_call.1} parent=11 // pred_check_branch
        %489 = sbr.rel (%p487) target = $region16
      $region15: #{tpu_custom_call.1} parent=11 // pred_region
        _
      $region16: #{tpu_custom_call.1} parent=11 // pred_fallthru
        _
      // Predicated region
      $region17: #{tpu_custom_call.1} parent=11 // pred_check
        %p490 = pneg %p173
      $region18: #{tpu_custom_call.1} parent=11 // pred_check_branch
        %492 = sbr.rel (%p490) target = $region20
      $region19: #{tpu_custom_call.1} parent=11 // pred_region
        _
      $region20: #{tpu_custom_call.1} parent=11 // pred_fallthru
        _
      // Predicated region
      $region21: #{tpu_custom_call.1} parent=11 // pred_check
        %p493 = pneg %p194
      $region22: #{tpu_custom_call.1} parent=11 // pred_check_branch
        %495 = sbr.rel (%p493) target = $region24
      $region23: #{tpu_custom_call.1} parent=11 // pred_region
        _
      $region24: #{tpu_custom_call.1} parent=11 // pred_fallthru
        _
      // Predicated region
      $region25: #{tpu_custom_call.1} parent=11 // pred_check
        %p496 = pneg %p215
      $region26: #{tpu_custom_call.1} parent=11 // pred_check_branch
        %498 = sbr.rel (%p496) target = $region28
      $region27: #{tpu_custom_call.1} parent=11 // pred_region
        _
      $region28: #{tpu_custom_call.1} parent=11 // pred_fallthru
        _
      // Predicated region
      $region29: #{tpu_custom_call.1} parent=11 // pred_check
        %p499 = pneg %p236
      $region30: #{tpu_custom_call.1} parent=11 // pred_check_branch
        %501 = sbr.rel (%p499) target = $region32
      $region31: #{tpu_custom_call.1} parent=11 // pred_region
        _
      $region32: #{tpu_custom_call.1} parent=11 // pred_fallthru
        _
      // Predicated region
      $region33: #{tpu_custom_call.1} parent=11 // pred_check
        %p502 = pneg %p257
      $region34: #{tpu_custom_call.1} parent=11 // pred_check_branch
        %504 = sbr.rel (%p502) target = $region36
      $region35: #{tpu_custom_call.1} parent=11 // pred_region
        _
      $region36: #{tpu_custom_call.1} parent=11 // pred_fallthru
        _
      // Predicated region
      $region37: #{tpu_custom_call.1} parent=11 // pred_check
        %p505 = pneg %p278
      $region38: #{tpu_custom_call.1} parent=11 // pred_check_branch
        %507 = sbr.rel (%p505) target = $region40
      $region39: #{tpu_custom_call.1} parent=11 // pred_region
        _
      $region40: #{tpu_custom_call.1} parent=11 // pred_fallthru
        _
      // Predicated region
      $region41: #{tpu_custom_call.1} parent=11 // pred_check
        %p508 = pneg %p299
      $region42: #{tpu_custom_call.1} parent=11 // pred_check_branch
        %510 = sbr.rel (%p508) target = $region44
      $region43: #{tpu_custom_call.1} parent=11 // pred_region
        _
      $region44: #{tpu_custom_call.1} parent=11 // pred_fallthru
        _
      // Predicated region
      $region45: #{tpu_custom_call.1} parent=11 // pred_check
        %p511 = pneg %p320
      $region46: #{tpu_custom_call.1} parent=11 // pred_check_branch
        %513 = sbr.rel (%p511) target = $region48
      $region47: #{tpu_custom_call.1} parent=11 // pred_region
        _
      $region48: #{tpu_custom_call.1} parent=11 // pred_fallthru
        _
      // Predicated region
      $region49: #{tpu_custom_call.1} parent=11 // pred_check
        %p514 = pneg %p341
      $region50: #{tpu_custom_call.1} parent=11 // pred_check_branch
        %516 = sbr.rel (%p514) target = $region52
      $region51: #{tpu_custom_call.1} parent=11 // pred_region
        _
      $region52: #{tpu_custom_call.1} parent=11 // pred_fallthru
        _
      // Predicated region
      $region53: #{tpu_custom_call.1} parent=11 // pred_check
        %p517 = pneg %p362
      $region54: #{tpu_custom_call.1} parent=11 // pred_check_branch
        %519 = sbr.rel (%p517) target = $region56
      $region55: #{tpu_custom_call.1} parent=11 // pred_region
        _
      $region56: #{tpu_custom_call.1} parent=11 // pred_fallthru
        _
      // Predicated region
      $region57: #{tpu_custom_call.1} parent=11 // pred_check
        %p520 = pneg %p383
      $region58: #{tpu_custom_call.1} parent=11 // pred_check_branch
        %522 = sbr.rel (%p520) target = $region60
      $region59: #{tpu_custom_call.1} parent=11 // pred_region
        _
      $region60: #{tpu_custom_call.1} parent=11 // pred_fallthru
        _
      // Predicated region
      $region61: #{tpu_custom_call.1} parent=11 // pred_check
        %p523 = pneg %p404
      $region62: #{tpu_custom_call.1} parent=11 // pred_check_branch
        %525 = sbr.rel (%p523) target = $region64
      $region63: #{tpu_custom_call.1} parent=11 // pred_region
        _
      $region64: #{tpu_custom_call.1} parent=11 // pred_fallthru
        _
      // Predicated region
      $region65: #{tpu_custom_call.1} parent=11 // pred_check
        %p526 = pneg %p425
      $region66: #{tpu_custom_call.1} parent=11 // pred_check_branch
        %528 = sbr.rel (%p526) target = $region68
      $region67: #{tpu_custom_call.1} parent=11 // pred_region
        _
      $region68: #{tpu_custom_call.1} parent=11 // pred_fallthru
        _
      // Predicated region
      $region69: #{tpu_custom_call.1} parent=11 // pred_check
        %p529 = pneg %p446
      $region70: #{tpu_custom_call.1} parent=11 // pred_check_branch
        %531 = sbr.rel (%p529) target = $region72
      $region71: #{tpu_custom_call.1} parent=11 // pred_region
        _
      $region72: #{tpu_custom_call.1} parent=11 // pred_fallthru
        _
    $region12: #{tpu_custom_call.1} parent=5 // pred_fallthru
      _
    %p532 = scmp.lt.s32.totalorder %s27, 2
    // Predicated region
    $region73: #{tpu_custom_call.1} parent=5 // pred_check
      %p533 = pneg %p532
    $region74: #{tpu_custom_call.1} parent=5 // pred_check_branch
      %535 = sbr.rel (%p533) target = $region76
    $region75: #{tpu_custom_call.1} parent=5 // pred_region
      // Predicated region
      $region77: #{tpu_custom_call.1} parent=75 // pred_check
        %p536 = pneg %p47
      $region78: #{tpu_custom_call.1} parent=75 // pred_check_branch
        %538 = sbr.rel (%p536) target = $region80
      $region79: #{tpu_custom_call.1} parent=75 // pred_region
        %p539 = scmp.lt.s32.totalorder %s27, 1
        %s540 = scalar_select %p539, %s27, 1
        %s541 = smul.addr %s540, 8
        %s542 = scalar_lea.vmem %s0, %s541
      $region80: #{tpu_custom_call.1} parent=75 // pred_fallthru
        _
      // Predicated region
      $region81: #{tpu_custom_call.1} parent=75 // pred_check
        %p543 = pneg %p73
      $region82: #{tpu_custom_call.1} parent=75 // pred_check_branch
        %545 = sbr.rel (%p543) target = $region84
      $region83: #{tpu_custom_call.1} parent=75 // pred_region
        %p546 = scmp.lt.s32.totalorder %s27, 1
        %s547 = scalar_select %p546, %s27, 1
        %s548 = smul.addr %s547, 8
        %s549 = scalar_lea.vmem %s1, %s548
      $region84: #{tpu_custom_call.1} parent=75 // pred_fallthru
        _
      // Predicated region
      $region85: #{tpu_custom_call.1} parent=75 // pred_check
        %p550 = pneg %p99
      $region86: #{tpu_custom_call.1} parent=75 // pred_check_branch
        %552 = sbr.rel (%p550) target = $region88
      $region87: #{tpu_custom_call.1} parent=75 // pred_region
        %p553 = scmp.lt.s32.totalorder %s27, 1
        %s554 = scalar_select %p553, %s27, 1
        %s555 = smul.addr %s554, 8
        %s556 = scalar_lea.vmem %s2, %s555
      $region88: #{tpu_custom_call.1} parent=75 // pred_fallthru
        _
      // Predicated region
      $region89: #{tpu_custom_call.1} parent=75 // pred_check
        %p557 = pneg %p125
      $region90: #{tpu_custom_call.1} parent=75 // pred_check_branch
        %559 = sbr.rel (%p557) target = $region92
      $region91: #{tpu_custom_call.1} parent=75 // pred_region
        %p560 = scmp.lt.s32.totalorder %s27, 1
        %s561 = scalar_select %p560, %s27, 1
        %s562 = smul.addr %s561, 8
        %s563 = scalar_lea.vmem %s3, %s562
      $region92: #{tpu_custom_call.1} parent=75 // pred_fallthru
        _
    $region76: #{tpu_custom_call.1} parent=5 // pred_fallthru
      _
    %p564 = scmp.le.s32.totalorder 1, %s27
    %p565 = scmp.lt.s32.totalorder %s27, 3
    %p566 = pnand %p564, %p565
    %p567 = pneg %p566
    // Predicated region
    $region93: #{tpu_custom_call.1} parent=5 // pred_check
      _
    $region94: #{tpu_custom_call.1} parent=5 // pred_check_branch
      %569 = sbr.rel (%p566) target = $region96
    $region95: #{tpu_custom_call.1} parent=5 // pred_region
      %s570 = ssub.s32 %s27, 1
      %p571 = scmp.lt.s32.totalorder %s32, 1
      %s572 = scalar_select %p571, %s32, 1
      %s573 = smul.addr %s572, 8
      %s574 = scalar_lea.vmem %s0, %s573
      %p575 = pneg %p53
      %p576 = pneg %p50
      %p577 = scmp.lt.s32.totalorder %s32, 1
      %s578 = scalar_select %p577, %s32, 1
      %s579 = smul.addr %s578, 8
      %s580 = scalar_lea.vmem %s1, %s579
      %p581 = pneg %p79
      %p582 = pneg %p76
      %p583 = scmp.lt.s32.totalorder %s32, 1
      %s584 = scalar_select %p583, %s32, 1
      %s585 = smul.addr %s584, 8
      %s586 = scalar_lea.vmem %s2, %s585
      %p587 = pneg %p105
      %p588 = pneg %p102
      %p589 = scmp.lt.s32.totalorder %s32, 1
      %s590 = scalar_select %p589, %s32, 1
      %s591 = smul.addr %s590, 8
      %s592 = scalar_lea.vmem %s3, %s591
      %p593 = pneg %p131
      %p594 = pneg %p128
      %p595 = pneg %p152
      %p596 = pneg %p149
      %p597 = pneg %p173
      %p598 = pneg %p170
      %p599 = pneg %p194
      %p600 = pneg %p191
      %p601 = pneg %p215
      %p602 = pneg %p212
      %p603 = pneg %p236
      %p604 = pneg %p233
      %p605 = pneg %p257
      %p606 = pneg %p254
      %p607 = pneg %p278
      %p608 = pneg %p275
      %p609 = pneg %p299
      %p610 = pneg %p296
      %p611 = pneg %p320
      %p612 = pneg %p317
      %p613 = pneg %p341
      %p614 = pneg %p338
      %p615 = pneg %p362
      %p616 = pneg %p359
      %p617 = pneg %p383
      %p618 = pneg %p380
      %p619 = pneg %p404
      %p620 = pneg %p401
      %p621 = pneg %p425
      %p622 = pneg %p422
      %p623 = pneg %p446
      %p624 = pneg %p443
      %p625 = pneg %p472
      %p626 = pneg %p469
      %p627 = scmp.lt.s32.totalorder %s32, 1
      %s628 = scalar_select %p627, %s32, 1
      %s629 = scalar_lea.vmem %s19, %s628
      %p630 = scmp.lt.s32.totalorder %s32, 1
      %s631 = scalar_select %p630, %s32, 1
      %s632 = smul.addr %s631, 8
      %s633 = scalar_lea.vmem %s0, %s632
      %p634 = scmp.lt.s32.totalorder %s32, 1
      %s635 = scalar_select %p634, %s32, 1
      %s636 = smul.addr %s635, 8
      %s637 = scalar_lea.vmem %s1, %s636
      %p638 = scmp.lt.s32.totalorder %s32, 1
      %s639 = scalar_select %p638, %s32, 1
      %s640 = smul.addr %s639, 8
      %s641 = scalar_lea.vmem %s2, %s640
      %p642 = scmp.lt.s32.totalorder %s32, 1
      %s643 = scalar_select %p642, %s32, 1
      %s644 = smul.addr %s643, 8
      %s645 = scalar_lea.vmem %s3, %s644
      %p646 = scmp.lt.s32.totalorder %s32, 1
      %s647 = scalar_select %p646, %s32, 1
      %s648 = scalar_lea.vmem %s19, %s647
      %v649 = vld [vmem:[%s4] sm:$0xff]
      %v650 = vld [vmem:[%s4 + $0x8] sm:$0xff]
      %v651 = vld [vmem:[%s5] sm:$0x1]
      %v652 = vld [vmem:[%s6] sm:$0xff]
      %v653 = vld [vmem:[%s6 + $0x8] sm:$0xff]
      %v654 = vld [vmem:[%s6 + $0x10] sm:$0xff]
      %v655 = vld [vmem:[%s6 + $0x18] sm:$0xff]
      %v656 = vld [vmem:[%s7] sm:$0x1]
      %v657 = vld [vmem:[%s8] sm:$0xff]
      %v658 = vld [vmem:[%s8 + $0x8] sm:$0xff]
      %v659 = vld [vmem:[%s8 + $0x10] sm:$0xff]
      %v660 = vld [vmem:[%s8 + $0x18] sm:$0xff]
      %v661 = vld [vmem:[%s9] sm:$0x1]
      %v662 = vld [vmem:[%s633] sm:$0xff]
      %v663 = vld [vmem:[%s641] sm:$0xff]
      %vm664 = vcmask 64512
      %v665 = vsel %vm664, %v663, 0.0
      %666 = vadd.xlane.f32.xlu0 %v665
      %v667 = vpop.xlane.xlu0 %666
      %v668 = vmax.f32 %v667, 1.0
      %v669 = vrsqrt.pop %v668
      %vm670 = vcmask 130048
      %v672 = vsel %vm670, %v662, 0
      %674 = vmatprep.subr.mxu0 0.0
      %675 = vmatpush1.msra.mxu0 0.0
      %676 = vmatprep.subr.mxu0 0.0
      %677 = vmatpush1.msra.mxu0 0.0
      %678 = vmatprep.subr.mxu0 0.0
      %679 = vmatpush1.msra.mxu0 0.0
      %680 = vmatprep.subr.mxu0 0.0
      %681 = vmatpush1.msra.mxu0 0.0
      %682 = vmatprep.subr.mxu0 0.0
      %683 = vmatpush1.msra.mxu0 0.0
      %684 = vmatprep.subr.mxu0 0.0
      %685 = vmatpush1.msra.mxu0 0.0
      %686 = vmatprep.subr.mxu0 0.0
      %687 = vmatpush1.msra.mxu0 0.0
      %688 = vmatprep.subr.mxu0 0.0
      %689 = vmatpush1.msra.mxu0 0.0
      %690 = vmatprep.subr.mxu0 0.0
      %691 = vmatpush1.msra.mxu0 0.0
      %692 = vmatprep.subr.mxu0 0.0
      %693 = vmatpush1.msra.mxu0 0.0
      %694 = vmatprep.subr.mxu0 0.0
      %695 = vmatpush1.msra.mxu0 0.0
      %696 = vmatprep.subr.mxu0 0.0
      %697 = vmatpush1.msra.mxu0 0.0
      %698 = vmatprep.subr.mxu0 0.0
      %699 = vmatpush1.msra.mxu0 0.0
      %700 = vmatprep.subr.mxu0 0.0
      %701 = vmatpush1.msra.mxu0 0.0
      %702 = vmatprep.subr.mxu0 0.0
      %703 = vmatpush1.msra.mxu0 %v650
      %704 = vmatprep.subr.mxu0 0.0
      %705 = vmatpush1.msra.mxu0 %v649
      %706 = vmatprep.subr.mxu0 0.0
      %707 = vmatpush2.msra.mxu0 0.0
      %708 = vmatprep.subr.mxu0 0.0
      %709 = vmatpush2.msra.mxu0 0.0
      %710 = vmatprep.subr.mxu0 0.0
      %711 = vmatpush2.msra.mxu0 0.0
      %712 = vmatprep.subr.mxu0 0.0
      %713 = vmatpush2.msra.mxu0 0.0
      %714 = vmatprep.subr.mxu0 0.0
      %715 = vmatpush2.msra.mxu0 0.0
      %716 = vmatprep.subr.mxu0 0.0
      %717 = vmatpush2.msra.mxu0 0.0
      %718 = vmatprep.subr.mxu0 0.0
      %719 = vmatpush2.msra.mxu0 0.0
      %720 = vmatprep.subr.mxu0 0.0
      %721 = vmatpush2.msra.mxu0 0.0
      %722 = vmatprep.subr.mxu0 0.0
      %723 = vmatpush2.msra.mxu0 0.0
      %724 = vmatprep.subr.mxu0 0.0
      %725 = vmatpush2.msra.mxu0 0.0
      %726 = vmatprep.subr.mxu0 0.0
      %727 = vmatpush2.msra.mxu0 0.0
      %728 = vmatprep.subr.mxu0 0.0
      %729 = vmatpush2.msra.mxu0 0.0
      %730 = vmatprep.subr.mxu0 0.0
      %731 = vmatpush2.msra.mxu0 0.0
      %732 = vmatprep.subr.mxu0 0.0
      %733 = vmatpush2.msra.mxu0 0.0
      %734 = vmatprep.subr.mxu0 0.0
      %735 = vmatpush2.msra.mxu0 0.0
      %736 = vmatprep.subr.mxu0 0.0
      %737 = vmatpush2.msra.mxu0 0.0
      %738 = vmatprep.mubr.f32.mxu0 0.0
      %739 = vmatmul.mubr.f32.gmra.mxu0 %v672
      %v740 = vpop.f32.mrf.mxu0
      %v741 = vadd.f32 0.0, %v740
      %v742 = vpop.f32.mrf.mxu0
      %743 = vdwg.mxu0
      %v744 = vmul.f32 %v669, %v741
      %v746 = vsel %vm664, %v663, 0
      %748 = vmatprep.subr.mxu0 0.0
      %749 = vmatpush1.msra.mxu0 0.0
      %750 = vmatprep.subr.mxu0 0.0
      %751 = vmatpush1.msra.mxu0 0.0
      %752 = vmatprep.subr.mxu0 0.0
      %753 = vmatpush1.msra.mxu0 0.0
      %754 = vmatprep.subr.mxu0 0.0
      %755 = vmatpush1.msra.mxu0 0.0
      %756 = vmatprep.subr.mxu0 0.0
      %757 = vmatpush1.msra.mxu0 0.0
      %758 = vmatprep.subr.mxu0 0.0
      %759 = vmatpush1.msra.mxu0 0.0
      %760 = vmatprep.subr.mxu0 0.0
      %761 = vmatpush1.msra.mxu0 0.0
      %762 = vmatprep.subr.mxu0 0.0
      %763 = vmatpush1.msra.mxu0 0.0
      %764 = vmatprep.subr.mxu0 0.0
      %765 = vmatpush1.msra.mxu0 0.0
      %766 = vmatprep.subr.mxu0 0.0
      %767 = vmatpush1.msra.mxu0 0.0
      %768 = vmatprep.subr.mxu0 0.0
      %769 = vmatpush1.msra.mxu0 0.0
      %770 = vmatprep.subr.mxu0 0.0
      %771 = vmatpush1.msra.mxu0 0.0
      %772 = vmatprep.subr.mxu0 0.0
      %773 = vmatpush1.msra.mxu0 0.0
      %774 = vmatprep.subr.mxu0 0.0
      %775 = vmatpush1.msra.mxu0 0.0
      %776 = vmatprep.subr.mxu0 0.0
      %777 = vmatpush1.msra.mxu0 0.0
      %778 = vmatprep.subr.mxu0 0.0
      %779 = vmatpush1.msra.mxu0 %v744
      %780 = vmatprep.subr.mxu0 0.0
      %781 = vmatpush2.msra.mxu0 0.0
      %782 = vmatprep.subr.mxu0 0.0
      %783 = vmatpush2.msra.mxu0 0.0
      %784 = vmatprep.subr.mxu0 0.0
      %785 = vmatpush2.msra.mxu0 0.0
      %786 = vmatprep.subr.mxu0 0.0
      %787 = vmatpush2.msra.mxu0 0.0
      %788 = vmatprep.subr.mxu0 0.0
      %789 = vmatpush2.msra.mxu0 0.0
      %790 = vmatprep.subr.mxu0 0.0
      %791 = vmatpush2.msra.mxu0 0.0
      %792 = vmatprep.subr.mxu0 0.0
      %793 = vmatpush2.msra.mxu0 0.0
      %794 = vmatprep.subr.mxu0 0.0
      %795 = vmatpush2.msra.mxu0 0.0
      %796 = vmatprep.subr.mxu0 0.0
      %797 = vmatpush2.msra.mxu0 0.0
      %798 = vmatprep.subr.mxu0 0.0
      %799 = vmatpush2.msra.mxu0 0.0
      %800 = vmatprep.subr.mxu0 0.0
      %801 = vmatpush2.msra.mxu0 0.0
      %802 = vmatprep.subr.mxu0 0.0
      %803 = vmatpush2.msra.mxu0 0.0
      %804 = vmatprep.subr.mxu0 0.0
      %805 = vmatpush2.msra.mxu0 0.0
      %806 = vmatprep.subr.mxu0 0.0
      %807 = vmatpush2.msra.mxu0 0.0
      %808 = vmatprep.subr.mxu0 0.0
      %809 = vmatpush2.msra.mxu0 0.0
      %810 = vmatprep.subr.mxu0 0.0
      %811 = vmatpush2.msra.mxu0 0.0
      %812 = vmatprep.mubr.f32.mxu0 0.0
      %813 = vmatmul.mubr.f32.gmra.mxu0 %v746
      %v814 = vpop.f32.mrf.mxu0
      %v815 = vadd.f32 0.0, %v814
      %v816 = vpop.f32.mrf.mxu0
      %817 = vdwg.mxu0
      %v818 = vmul.f32 %v669, %v815
      %v820 = vlaneseq
      %v821 = vshrl.u32 %v820, 7
      %v822 = vsub.s32 0, %v821
      %v823 = vrot.slane %v651, %v822
      %v825 = vadd.f32 %v818, %v823
      %v826 = vmax.f32 %v825, 0.0
      %vm827 = vcmask 261120
      %v829 = vsel %vm827, %v826, 0
      %831 = vmatprep.subr.mxu0 0.0
      %832 = vmatpush1.msra.mxu0 0.0
      %833 = vmatprep.subr.mxu0 0.0
      %834 = vmatpush1.msra.mxu0 0.0
      %835 = vmatprep.subr.mxu0 0.0
      %836 = vmatpush1.msra.mxu0 0.0
      %837 = vmatprep.subr.mxu0 0.0
      %838 = vmatpush1.msra.mxu0 0.0
      %839 = vmatprep.subr.mxu0 0.0
      %840 = vmatpush1.msra.mxu0 0.0
      %841 = vmatprep.subr.mxu0 0.0
      %842 = vmatpush1.msra.mxu0 0.0
      %843 = vmatprep.subr.mxu0 0.0
      %844 = vmatpush1.msra.mxu0 0.0
      %845 = vmatprep.subr.mxu0 0.0
      %846 = vmatpush1.msra.mxu0 0.0
      %847 = vmatprep.subr.mxu0 0.0
      %848 = vmatpush1.msra.mxu0 0.0
      %849 = vmatprep.subr.mxu0 0.0
      %850 = vmatpush1.msra.mxu0 0.0
      %851 = vmatprep.subr.mxu0 0.0
      %852 = vmatpush1.msra.mxu0 0.0
      %853 = vmatprep.subr.mxu0 0.0
      %854 = vmatpush1.msra.mxu0 0.0
      %855 = vmatprep.subr.mxu0 0.0
      %856 = vmatpush1.msra.mxu0 %v655
      %857 = vmatprep.subr.mxu0 0.0
      %858 = vmatpush1.msra.mxu0 %v654
      %859 = vmatprep.subr.mxu0 0.0
      %860 = vmatpush1.msra.mxu0 %v653
      %861 = vmatprep.subr.mxu0 0.0
      %862 = vmatpush1.msra.mxu0 %v652
      %863 = vmatprep.subr.mxu0 0.0
      %864 = vmatpush2.msra.mxu0 0.0
      %865 = vmatprep.subr.mxu0 0.0
      %866 = vmatpush2.msra.mxu0 0.0
      %867 = vmatprep.subr.mxu0 0.0
      %868 = vmatpush2.msra.mxu0 0.0
      %869 = vmatprep.subr.mxu0 0.0
      %870 = vmatpush2.msra.mxu0 0.0
      %871 = vmatprep.subr.mxu0 0.0
      %872 = vmatpush2.msra.mxu0 0.0
      %873 = vmatprep.subr.mxu0 0.0
      %874 = vmatpush2.msra.mxu0 0.0
      %875 = vmatprep.subr.mxu0 0.0
      %876 = vmatpush2.msra.mxu0 0.0
      %877 = vmatprep.subr.mxu0 0.0
      %878 = vmatpush2.msra.mxu0 0.0
      %879 = vmatprep.subr.mxu0 0.0
      %880 = vmatpush2.msra.mxu0 0.0
      %881 = vmatprep.subr.mxu0 0.0
      %882 = vmatpush2.msra.mxu0 0.0
      %883 = vmatprep.subr.mxu0 0.0
      %884 = vmatpush2.msra.mxu0 0.0
      %885 = vmatprep.subr.mxu0 0.0
      %886 = vmatpush2.msra.mxu0 0.0
      %887 = vmatprep.subr.mxu0 0.0
      %888 = vmatpush2.msra.mxu0 0.0
      %889 = vmatprep.subr.mxu0 0.0
      %890 = vmatpush2.msra.mxu0 0.0
      %891 = vmatprep.subr.mxu0 0.0
      %892 = vmatpush2.msra.mxu0 0.0
      %893 = vmatprep.subr.mxu0 0.0
      %894 = vmatpush2.msra.mxu0 0.0
      %895 = vmatprep.mubr.f32.mxu0 0.0
      %896 = vmatmul.mubr.f32.gmra.mxu0 %v829
      %v897 = vpop.f32.mrf.mxu0
      %v898 = vadd.f32 0.0, %v897
      %v899 = vpop.f32.mrf.mxu0
      %900 = vdwg.mxu0
      %v901 = vmul.f32 %v669, %v898
      %902 = vmatprep.subr.mxu0 0.0
      %903 = vmatpush1.msra.mxu0 0.0
      %904 = vmatprep.subr.mxu0 0.0
      %905 = vmatpush1.msra.mxu0 0.0
      %906 = vmatprep.subr.mxu0 0.0
      %907 = vmatpush1.msra.mxu0 0.0
      %908 = vmatprep.subr.mxu0 0.0
      %909 = vmatpush1.msra.mxu0 0.0
      %910 = vmatprep.subr.mxu0 0.0
      %911 = vmatpush1.msra.mxu0 0.0
      %912 = vmatprep.subr.mxu0 0.0
      %913 = vmatpush1.msra.mxu0 0.0
      %914 = vmatprep.subr.mxu0 0.0
      %915 = vmatpush1.msra.mxu0 0.0
      %916 = vmatprep.subr.mxu0 0.0
      %917 = vmatpush1.msra.mxu0 0.0
      %918 = vmatprep.subr.mxu0 0.0
      %919 = vmatpush1.msra.mxu0 0.0
      %920 = vmatprep.subr.mxu0 0.0
      %921 = vmatpush1.msra.mxu0 0.0
      %922 = vmatprep.subr.mxu0 0.0
      %923 = vmatpush1.msra.mxu0 0.0
      %924 = vmatprep.subr.mxu0 0.0
      %925 = vmatpush1.msra.mxu0 0.0
      %926 = vmatprep.subr.mxu0 0.0
      %927 = vmatpush1.msra.mxu0 0.0
      %928 = vmatprep.subr.mxu0 0.0
      %929 = vmatpush1.msra.mxu0 0.0
      %930 = vmatprep.subr.mxu0 0.0
      %931 = vmatpush1.msra.mxu0 0.0
      %932 = vmatprep.subr.mxu0 0.0
      %933 = vmatpush1.msra.mxu0 %v901
      %934 = vmatprep.subr.mxu0 0.0
      %935 = vmatpush2.msra.mxu0 0.0
      %936 = vmatprep.subr.mxu0 0.0
      %937 = vmatpush2.msra.mxu0 0.0
      %938 = vmatprep.subr.mxu0 0.0
      %939 = vmatpush2.msra.mxu0 0.0
      %940 = vmatprep.subr.mxu0 0.0
      %941 = vmatpush2.msra.mxu0 0.0
      %942 = vmatprep.subr.mxu0 0.0
      %943 = vmatpush2.msra.mxu0 0.0
      %944 = vmatprep.subr.mxu0 0.0
      %945 = vmatpush2.msra.mxu0 0.0
      %946 = vmatprep.subr.mxu0 0.0
      %947 = vmatpush2.msra.mxu0 0.0
      %948 = vmatprep.subr.mxu0 0.0
      %949 = vmatpush2.msra.mxu0 0.0
      %950 = vmatprep.subr.mxu0 0.0
      %951 = vmatpush2.msra.mxu0 0.0
      %952 = vmatprep.subr.mxu0 0.0
      %953 = vmatpush2.msra.mxu0 0.0
      %954 = vmatprep.subr.mxu0 0.0
      %955 = vmatpush2.msra.mxu0 0.0
      %956 = vmatprep.subr.mxu0 0.0
      %957 = vmatpush2.msra.mxu0 0.0
      %958 = vmatprep.subr.mxu0 0.0
      %959 = vmatpush2.msra.mxu0 0.0
      %960 = vmatprep.subr.mxu0 0.0
      %961 = vmatpush2.msra.mxu0 0.0
      %962 = vmatprep.subr.mxu0 0.0
      %963 = vmatpush2.msra.mxu0 0.0
      %964 = vmatprep.subr.mxu0 0.0
      %965 = vmatpush2.msra.mxu0 0.0
      %966 = vmatprep.mubr.f32.mxu0 0.0
      %967 = vmatmul.mubr.f32.gmra.mxu0 %v746
      %v968 = vpop.f32.mrf.mxu0
      %v969 = vadd.f32 0.0, %v968
      %v970 = vpop.f32.mrf.mxu0
      %971 = vdwg.mxu0
      %v972 = vmul.f32 %v669, %v969
      %v974 = vlaneseq
      %v975 = vshrl.u32 %v974, 7
      %v976 = vsub.s32 0, %v975
      %v977 = vrot.slane %v656, %v976
      %v979 = vadd.f32 %v972, %v977
      %v980 = vmax.f32 %v979, 0.0
      %v982 = vsel %vm827, %v980, 0
      %984 = vmatprep.subr.mxu0 0.0
      %985 = vmatpush1.msra.mxu0 0.0
      %986 = vmatprep.subr.mxu0 0.0
      %987 = vmatpush1.msra.mxu0 0.0
      %988 = vmatprep.subr.mxu0 0.0
      %989 = vmatpush1.msra.mxu0 0.0
      %990 = vmatprep.subr.mxu0 0.0
      %991 = vmatpush1.msra.mxu0 0.0
      %992 = vmatprep.subr.mxu0 0.0
      %993 = vmatpush1.msra.mxu0 0.0
      %994 = vmatprep.subr.mxu0 0.0
      %995 = vmatpush1.msra.mxu0 0.0
      %996 = vmatprep.subr.mxu0 0.0
      %997 = vmatpush1.msra.mxu0 0.0
      %998 = vmatprep.subr.mxu0 0.0
      %999 = vmatpush1.msra.mxu0 0.0
      %1000 = vmatprep.subr.mxu0 0.0
      %1001 = vmatpush1.msra.mxu0 0.0
      %1002 = vmatprep.subr.mxu0 0.0
      %1003 = vmatpush1.msra.mxu0 0.0
      %1004 = vmatprep.subr.mxu0 0.0
      %1005 = vmatpush1.msra.mxu0 0.0
      %1006 = vmatprep.subr.mxu0 0.0
      %1007 = vmatpush1.msra.mxu0 0.0
      %1008 = vmatprep.subr.mxu0 0.0
      %1009 = vmatpush1.msra.mxu0 %v660
      %1010 = vmatprep.subr.mxu0 0.0
      %1011 = vmatpush1.msra.mxu0 %v659
      %1012 = vmatprep.subr.mxu0 0.0
      %1013 = vmatpush1.msra.mxu0 %v658
      %1014 = vmatprep.subr.mxu0 0.0
      %1015 = vmatpush1.msra.mxu0 %v657
      %1016 = vmatprep.subr.mxu0 0.0
      %1017 = vmatpush2.msra.mxu0 0.0
      %1018 = vmatprep.subr.mxu0 0.0
      %1019 = vmatpush2.msra.mxu0 0.0
      %1020 = vmatprep.subr.mxu0 0.0
      %1021 = vmatpush2.msra.mxu0 0.0
      %1022 = vmatprep.subr.mxu0 0.0
      %1023 = vmatpush2.msra.mxu0 0.0
      %1024 = vmatprep.subr.mxu0 0.0
      %1025 = vmatpush2.msra.mxu0 0.0
      %1026 = vmatprep.subr.mxu0 0.0
      %1027 = vmatpush2.msra.mxu0 0.0
      %1028 = vmatprep.subr.mxu0 0.0
      %1029 = vmatpush2.msra.mxu0 0.0
      %1030 = vmatprep.subr.mxu0 0.0
      %1031 = vmatpush2.msra.mxu0 0.0
      %1032 = vmatprep.subr.mxu0 0.0
      %1033 = vmatpush2.msra.mxu0 0.0
      %1034 = vmatprep.subr.mxu0 0.0
      %1035 = vmatpush2.msra.mxu0 0.0
      %1036 = vmatprep.subr.mxu0 0.0
      %1037 = vmatpush2.msra.mxu0 0.0
      %1038 = vmatprep.subr.mxu0 0.0
      %1039 = vmatpush2.msra.mxu0 0.0
      %1040 = vmatprep.subr.mxu0 0.0
      %1041 = vmatpush2.msra.mxu0 0.0
      %1042 = vmatprep.subr.mxu0 0.0
      %1043 = vmatpush2.msra.mxu0 0.0
      %1044 = vmatprep.subr.mxu0 0.0
      %1045 = vmatpush2.msra.mxu0 0.0
      %1046 = vmatprep.subr.mxu0 0.0
      %1047 = vmatpush2.msra.mxu0 0.0
      %1048 = vmatprep.mubr.f32.mxu0 0.0
      %1049 = vmatmul.mubr.f32.gmra.mxu0 %v982
      %v1050 = vpop.f32.mrf.mxu0
      %v1051 = vadd.f32 0.0, %v1050
      %v1052 = vpop.f32.mrf.mxu0
      %1053 = vdwg.mxu0
      %v1054 = vmul.f32 %v669, %v1051
      %1055 = vmatprep.subr.mxu0 0.0
      %1056 = vmatpush1.msra.mxu0 0.0
      %1057 = vmatprep.subr.mxu0 0.0
      %1058 = vmatpush1.msra.mxu0 0.0
      %1059 = vmatprep.subr.mxu0 0.0
      %1060 = vmatpush1.msra.mxu0 0.0
      %1061 = vmatprep.subr.mxu0 0.0
      %1062 = vmatpush1.msra.mxu0 0.0
      %1063 = vmatprep.subr.mxu0 0.0
      %1064 = vmatpush1.msra.mxu0 0.0
      %1065 = vmatprep.subr.mxu0 0.0
      %1066 = vmatpush1.msra.mxu0 0.0
      %1067 = vmatprep.subr.mxu0 0.0
      %1068 = vmatpush1.msra.mxu0 0.0
      %1069 = vmatprep.subr.mxu0 0.0
      %1070 = vmatpush1.msra.mxu0 0.0
      %1071 = vmatprep.subr.mxu0 0.0
      %1072 = vmatpush1.msra.mxu0 0.0
      %1073 = vmatprep.subr.mxu0 0.0
      %1074 = vmatpush1.msra.mxu0 0.0
      %1075 = vmatprep.subr.mxu0 0.0
      %1076 = vmatpush1.msra.mxu0 0.0
      %1077 = vmatprep.subr.mxu0 0.0
      %1078 = vmatpush1.msra.mxu0 0.0
      %1079 = vmatprep.subr.mxu0 0.0
      %1080 = vmatpush1.msra.mxu0 0.0
      %1081 = vmatprep.subr.mxu0 0.0
      %1082 = vmatpush1.msra.mxu0 0.0
      %1083 = vmatprep.subr.mxu0 0.0
      %1084 = vmatpush1.msra.mxu0 0.0
      %1085 = vmatprep.subr.mxu0 0.0
      %1086 = vmatpush1.msra.mxu0 %v1054
      %1087 = vmatprep.subr.mxu0 0.0
      %1088 = vmatpush2.msra.mxu0 0.0
      %1089 = vmatprep.subr.mxu0 0.0
      %1090 = vmatpush2.msra.mxu0 0.0
      %1091 = vmatprep.subr.mxu0 0.0
      %1092 = vmatpush2.msra.mxu0 0.0
      %1093 = vmatprep.subr.mxu0 0.0
      %1094 = vmatpush2.msra.mxu0 0.0
      %1095 = vmatprep.subr.mxu0 0.0
      %1096 = vmatpush2.msra.mxu0 0.0
      %1097 = vmatprep.subr.mxu0 0.0
      %1098 = vmatpush2.msra.mxu0 0.0
      %1099 = vmatprep.subr.mxu0 0.0
      %1100 = vmatpush2.msra.mxu0 0.0
      %1101 = vmatprep.subr.mxu0 0.0
      %1102 = vmatpush2.msra.mxu0 0.0
      %1103 = vmatprep.subr.mxu0 0.0
      %1104 = vmatpush2.msra.mxu0 0.0
      %1105 = vmatprep.subr.mxu0 0.0
      %1106 = vmatpush2.msra.mxu0 0.0
      %1107 = vmatprep.subr.mxu0 0.0
      %1108 = vmatpush2.msra.mxu0 0.0
      %1109 = vmatprep.subr.mxu0 0.0
      %1110 = vmatpush2.msra.mxu0 0.0
      %1111 = vmatprep.subr.mxu0 0.0
      %1112 = vmatpush2.msra.mxu0 0.0
      %1113 = vmatprep.subr.mxu0 0.0
      %1114 = vmatpush2.msra.mxu0 0.0
      %1115 = vmatprep.subr.mxu0 0.0
      %1116 = vmatpush2.msra.mxu0 0.0
      %1117 = vmatprep.subr.mxu0 0.0
      %1118 = vmatpush2.msra.mxu0 0.0
      %1119 = vmatprep.mubr.f32.mxu0 0.0
      %1120 = vmatmul.mubr.f32.gmra.mxu0 %v746
      %v1121 = vpop.f32.mrf.mxu0
      %v1122 = vadd.f32 0.0, %v1121
      %v1123 = vpop.f32.mrf.mxu0
      %1124 = vdwg.mxu0
      %v1125 = vmul.f32 %v669, %v1122
      %v1127 = vlaneseq
      %v1128 = vshrl.u32 %v1127, 7
      %v1129 = vsub.s32 0, %v1128
      %v1130 = vrot.slane %v661, %v1129
      %v1132 = vadd.f32 %v1125, %v1130
      %v1133 = vmax.f32 %v1132, 0.0
      %v1134 = vld [vmem:[%s637] sm:$0xff]
      %v1135 = vld [vmem:[%s645] sm:$0xff]
      %v1136 = vsel %vm664, %v1135, 0.0
      %1137 = vadd.xlane.f32.xlu0 %v1136
      %v1138 = vpop.xlane.xlu0 %1137
      %v1139 = vmax.f32 %v1138, 1.0
      %v1140 = vrsqrt.pop %v1139
      %v1142 = vsel %vm670, %v1134, 0
      %1144 = vmatprep.subr.mxu0 0.0
      %1145 = vmatpush1.msra.mxu0 0.0
      %1146 = vmatprep.subr.mxu0 0.0
      %1147 = vmatpush1.msra.mxu0 0.0
      %1148 = vmatprep.subr.mxu0 0.0
      %1149 = vmatpush1.msra.mxu0 0.0
      %1150 = vmatprep.subr.mxu0 0.0
      %1151 = vmatpush1.msra.mxu0 0.0
      %1152 = vmatprep.subr.mxu0 0.0
      %1153 = vmatpush1.msra.mxu0 0.0
      %1154 = vmatprep.subr.mxu0 0.0
      %1155 = vmatpush1.msra.mxu0 0.0
      %1156 = vmatprep.subr.mxu0 0.0
      %1157 = vmatpush1.msra.mxu0 0.0
      %1158 = vmatprep.subr.mxu0 0.0
      %1159 = vmatpush1.msra.mxu0 0.0
      %1160 = vmatprep.subr.mxu0 0.0
      %1161 = vmatpush1.msra.mxu0 0.0
      %1162 = vmatprep.subr.mxu0 0.0
      %1163 = vmatpush1.msra.mxu0 0.0
      %1164 = vmatprep.subr.mxu0 0.0
      %1165 = vmatpush1.msra.mxu0 0.0
      %1166 = vmatprep.subr.mxu0 0.0
      %1167 = vmatpush1.msra.mxu0 0.0
      %1168 = vmatprep.subr.mxu0 0.0
      %1169 = vmatpush1.msra.mxu0 0.0
      %1170 = vmatprep.subr.mxu0 0.0
      %1171 = vmatpush1.msra.mxu0 0.0
      %1172 = vmatprep.subr.mxu0 0.0
      %1173 = vmatpush1.msra.mxu0 %v650
      %1174 = vmatprep.subr.mxu0 0.0
      %1175 = vmatpush1.msra.mxu0 %v649
      %1176 = vmatprep.subr.mxu0 0.0
      %1177 = vmatpush2.msra.mxu0 0.0
      %1178 = vmatprep.subr.mxu0 0.0
      %1179 = vmatpush2.msra.mxu0 0.0
      %1180 = vmatprep.subr.mxu0 0.0
      %1181 = vmatpush2.msra.mxu0 0.0
      %1182 = vmatprep.subr.mxu0 0.0
      %1183 = vmatpush2.msra.mxu0 0.0
      %1184 = vmatprep.subr.mxu0 0.0
      %1185 = vmatpush2.msra.mxu0 0.0
      %1186 = vmatprep.subr.mxu0 0.0
      %1187 = vmatpush2.msra.mxu0 0.0
      %1188 = vmatprep.subr.mxu0 0.0
      %1189 = vmatpush2.msra.mxu0 0.0
      %1190 = vmatprep.subr.mxu0 0.0
      %1191 = vmatpush2.msra.mxu0 0.0
      %1192 = vmatprep.subr.mxu0 0.0
      %1193 = vmatpush2.msra.mxu0 0.0
      %1194 = vmatprep.subr.mxu0 0.0
      %1195 = vmatpush2.msra.mxu0 0.0
      %1196 = vmatprep.subr.mxu0 0.0
      %1197 = vmatpush2.msra.mxu0 0.0
      %1198 = vmatprep.subr.mxu0 0.0
      %1199 = vmatpush2.msra.mxu0 0.0
      %1200 = vmatprep.subr.mxu0 0.0
      %1201 = vmatpush2.msra.mxu0 0.0
      %1202 = vmatprep.subr.mxu0 0.0
      %1203 = vmatpush2.msra.mxu0 0.0
      %1204 = vmatprep.subr.mxu0 0.0
      %1205 = vmatpush2.msra.mxu0 0.0
      %1206 = vmatprep.subr.mxu0 0.0
      %1207 = vmatpush2.msra.mxu0 0.0
      %1208 = vmatprep.mubr.f32.mxu0 0.0
      %1209 = vmatmul.mubr.f32.gmra.mxu0 %v1142
      %v1210 = vpop.f32.mrf.mxu0
      %v1211 = vadd.f32 0.0, %v1210
      %v1212 = vpop.f32.mrf.mxu0
      %1213 = vdwg.mxu0
      %v1214 = vmul.f32 %v1140, %v1211
      %v1216 = vsel %vm664, %v1135, 0
      %1218 = vmatprep.subr.mxu0 0.0
      %1219 = vmatpush1.msra.mxu0 0.0
      %1220 = vmatprep.subr.mxu0 0.0
      %1221 = vmatpush1.msra.mxu0 0.0
      %1222 = vmatprep.subr.mxu0 0.0
      %1223 = vmatpush1.msra.mxu0 0.0
      %1224 = vmatprep.subr.mxu0 0.0
      %1225 = vmatpush1.msra.mxu0 0.0
      %1226 = vmatprep.subr.mxu0 0.0
      %1227 = vmatpush1.msra.mxu0 0.0
      %1228 = vmatprep.subr.mxu0 0.0
      %1229 = vmatpush1.msra.mxu0 0.0
      %1230 = vmatprep.subr.mxu0 0.0
      %1231 = vmatpush1.msra.mxu0 0.0
      %1232 = vmatprep.subr.mxu0 0.0
      %1233 = vmatpush1.msra.mxu0 0.0
      %1234 = vmatprep.subr.mxu0 0.0
      %1235 = vmatpush1.msra.mxu0 0.0
      %1236 = vmatprep.subr.mxu0 0.0
      %1237 = vmatpush1.msra.mxu0 0.0
      %1238 = vmatprep.subr.mxu0 0.0
      %1239 = vmatpush1.msra.mxu0 0.0
      %1240 = vmatprep.subr.mxu0 0.0
      %1241 = vmatpush1.msra.mxu0 0.0
      %1242 = vmatprep.subr.mxu0 0.0
      %1243 = vmatpush1.msra.mxu0 0.0
      %1244 = vmatprep.subr.mxu0 0.0
      %1245 = vmatpush1.msra.mxu0 0.0
      %1246 = vmatprep.subr.mxu0 0.0
      %1247 = vmatpush1.msra.mxu0 0.0
      %1248 = vmatprep.subr.mxu0 0.0
      %1249 = vmatpush1.msra.mxu0 %v1214
      %1250 = vmatprep.subr.mxu0 0.0
      %1251 = vmatpush2.msra.mxu0 0.0
      %1252 = vmatprep.subr.mxu0 0.0
      %1253 = vmatpush2.msra.mxu0 0.0
      %1254 = vmatprep.subr.mxu0 0.0
      %1255 = vmatpush2.msra.mxu0 0.0
      %1256 = vmatprep.subr.mxu0 0.0
      %1257 = vmatpush2.msra.mxu0 0.0
      %1258 = vmatprep.subr.mxu0 0.0
      %1259 = vmatpush2.msra.mxu0 0.0
      %1260 = vmatprep.subr.mxu0 0.0
      %1261 = vmatpush2.msra.mxu0 0.0
      %1262 = vmatprep.subr.mxu0 0.0
      %1263 = vmatpush2.msra.mxu0 0.0
      %1264 = vmatprep.subr.mxu0 0.0
      %1265 = vmatpush2.msra.mxu0 0.0
      %1266 = vmatprep.subr.mxu0 0.0
      %1267 = vmatpush2.msra.mxu0 0.0
      %1268 = vmatprep.subr.mxu0 0.0
      %1269 = vmatpush2.msra.mxu0 0.0
      %1270 = vmatprep.subr.mxu0 0.0
      %1271 = vmatpush2.msra.mxu0 0.0
      %1272 = vmatprep.subr.mxu0 0.0
      %1273 = vmatpush2.msra.mxu0 0.0
      %1274 = vmatprep.subr.mxu0 0.0
      %1275 = vmatpush2.msra.mxu0 0.0
      %1276 = vmatprep.subr.mxu0 0.0
      %1277 = vmatpush2.msra.mxu0 0.0
      %1278 = vmatprep.subr.mxu0 0.0
      %1279 = vmatpush2.msra.mxu0 0.0
      %1280 = vmatprep.subr.mxu0 0.0
      %1281 = vmatpush2.msra.mxu0 0.0
      %1282 = vmatprep.mubr.f32.mxu0 0.0
      %1283 = vmatmul.mubr.f32.gmra.mxu0 %v1216
      %v1284 = vpop.f32.mrf.mxu0
      %v1285 = vadd.f32 0.0, %v1284
      %v1286 = vpop.f32.mrf.mxu0
      %1287 = vdwg.mxu0
      %v1288 = vmul.f32 %v1140, %v1285
      %v1289 = vadd.f32 %v1288, %v823
      %v1290 = vmax.f32 %v1289, 0.0
      %v1292 = vsel %vm827, %v1290, 0
      %1294 = vmatprep.subr.mxu0 0.0
      %1295 = vmatpush1.msra.mxu0 0.0
      %1296 = vmatprep.subr.mxu0 0.0
      %1297 = vmatpush1.msra.mxu0 0.0
      %1298 = vmatprep.subr.mxu0 0.0
      %1299 = vmatpush1.msra.mxu0 0.0
      %1300 = vmatprep.subr.mxu0 0.0
      %1301 = vmatpush1.msra.mxu0 0.0
      %1302 = vmatprep.subr.mxu0 0.0
      %1303 = vmatpush1.msra.mxu0 0.0
      %1304 = vmatprep.subr.mxu0 0.0
      %1305 = vmatpush1.msra.mxu0 0.0
      %1306 = vmatprep.subr.mxu0 0.0
      %1307 = vmatpush1.msra.mxu0 0.0
      %1308 = vmatprep.subr.mxu0 0.0
      %1309 = vmatpush1.msra.mxu0 0.0
      %1310 = vmatprep.subr.mxu0 0.0
      %1311 = vmatpush1.msra.mxu0 0.0
      %1312 = vmatprep.subr.mxu0 0.0
      %1313 = vmatpush1.msra.mxu0 0.0
      %1314 = vmatprep.subr.mxu0 0.0
      %1315 = vmatpush1.msra.mxu0 0.0
      %1316 = vmatprep.subr.mxu0 0.0
      %1317 = vmatpush1.msra.mxu0 0.0
      %1318 = vmatprep.subr.mxu0 0.0
      %1319 = vmatpush1.msra.mxu0 %v655
      %1320 = vmatprep.subr.mxu0 0.0
      %1321 = vmatpush1.msra.mxu0 %v654
      %1322 = vmatprep.subr.mxu0 0.0
      %1323 = vmatpush1.msra.mxu0 %v653
      %1324 = vmatprep.subr.mxu0 0.0
      %1325 = vmatpush1.msra.mxu0 %v652
      %1326 = vmatprep.subr.mxu0 0.0
      %1327 = vmatpush2.msra.mxu0 0.0
      %1328 = vmatprep.subr.mxu0 0.0
      %1329 = vmatpush2.msra.mxu0 0.0
      %1330 = vmatprep.subr.mxu0 0.0
      %1331 = vmatpush2.msra.mxu0 0.0
      %1332 = vmatprep.subr.mxu0 0.0
      %1333 = vmatpush2.msra.mxu0 0.0
      %1334 = vmatprep.subr.mxu0 0.0
      %1335 = vmatpush2.msra.mxu0 0.0
      %1336 = vmatprep.subr.mxu0 0.0
      %1337 = vmatpush2.msra.mxu0 0.0
      %1338 = vmatprep.subr.mxu0 0.0
      %1339 = vmatpush2.msra.mxu0 0.0
      %1340 = vmatprep.subr.mxu0 0.0
      %1341 = vmatpush2.msra.mxu0 0.0
      %1342 = vmatprep.subr.mxu0 0.0
      %1343 = vmatpush2.msra.mxu0 0.0
      %1344 = vmatprep.subr.mxu0 0.0
      %1345 = vmatpush2.msra.mxu0 0.0
      %1346 = vmatprep.subr.mxu0 0.0
      %1347 = vmatpush2.msra.mxu0 0.0
      %1348 = vmatprep.subr.mxu0 0.0
      %1349 = vmatpush2.msra.mxu0 0.0
      %1350 = vmatprep.subr.mxu0 0.0
      %1351 = vmatpush2.msra.mxu0 0.0
      %1352 = vmatprep.subr.mxu0 0.0
      %1353 = vmatpush2.msra.mxu0 0.0
      %1354 = vmatprep.subr.mxu0 0.0
      %1355 = vmatpush2.msra.mxu0 0.0
      %1356 = vmatprep.subr.mxu0 0.0
      %1357 = vmatpush2.msra.mxu0 0.0
      %1358 = vmatprep.mubr.f32.mxu0 0.0
      %1359 = vmatmul.mubr.f32.gmra.mxu0 %v1292
      %v1360 = vpop.f32.mrf.mxu0
      %v1361 = vadd.f32 0.0, %v1360
      %v1362 = vpop.f32.mrf.mxu0
      %1363 = vdwg.mxu0
      %v1364 = vmul.f32 %v1140, %v1361
      %1365 = vmatprep.subr.mxu0 0.0
      %1366 = vmatpush1.msra.mxu0 0.0
      %1367 = vmatprep.subr.mxu0 0.0
      %1368 = vmatpush1.msra.mxu0 0.0
      %1369 = vmatprep.subr.mxu0 0.0
      %1370 = vmatpush1.msra.mxu0 0.0
      %1371 = vmatprep.subr.mxu0 0.0
      %1372 = vmatpush1.msra.mxu0 0.0
      %1373 = vmatprep.subr.mxu0 0.0
      %1374 = vmatpush1.msra.mxu0 0.0
      %1375 = vmatprep.subr.mxu0 0.0
      %1376 = vmatpush1.msra.mxu0 0.0
      %1377 = vmatprep.subr.mxu0 0.0
      %1378 = vmatpush1.msra.mxu0 0.0
      %1379 = vmatprep.subr.mxu0 0.0
      %1380 = vmatpush1.msra.mxu0 0.0
      %1381 = vmatprep.subr.mxu0 0.0
      %1382 = vmatpush1.msra.mxu0 0.0
      %1383 = vmatprep.subr.mxu0 0.0
      %1384 = vmatpush1.msra.mxu0 0.0
      %1385 = vmatprep.subr.mxu0 0.0
      %1386 = vmatpush1.msra.mxu0 0.0
      %1387 = vmatprep.subr.mxu0 0.0
      %1388 = vmatpush1.msra.mxu0 0.0
      %1389 = vmatprep.subr.mxu0 0.0
      %1390 = vmatpush1.msra.mxu0 0.0
      %1391 = vmatprep.subr.mxu0 0.0
      %1392 = vmatpush1.msra.mxu0 0.0
      %1393 = vmatprep.subr.mxu0 0.0
      %1394 = vmatpush1.msra.mxu0 0.0
      %1395 = vmatprep.subr.mxu0 0.0
      %1396 = vmatpush1.msra.mxu0 %v1364
      %1397 = vmatprep.subr.mxu0 0.0
      %1398 = vmatpush2.msra.mxu0 0.0
      %1399 = vmatprep.subr.mxu0 0.0
      %1400 = vmatpush2.msra.mxu0 0.0
      %1401 = vmatprep.subr.mxu0 0.0
      %1402 = vmatpush2.msra.mxu0 0.0
      %1403 = vmatprep.subr.mxu0 0.0
      %1404 = vmatpush2.msra.mxu0 0.0
      %1405 = vmatprep.subr.mxu0 0.0
      %1406 = vmatpush2.msra.mxu0 0.0
      %1407 = vmatprep.subr.mxu0 0.0
      %1408 = vmatpush2.msra.mxu0 0.0
      %1409 = vmatprep.subr.mxu0 0.0
      %1410 = vmatpush2.msra.mxu0 0.0
      %1411 = vmatprep.subr.mxu0 0.0
      %1412 = vmatpush2.msra.mxu0 0.0
      %1413 = vmatprep.subr.mxu0 0.0
      %1414 = vmatpush2.msra.mxu0 0.0
      %1415 = vmatprep.subr.mxu0 0.0
      %1416 = vmatpush2.msra.mxu0 0.0
      %1417 = vmatprep.subr.mxu0 0.0
      %1418 = vmatpush2.msra.mxu0 0.0
      %1419 = vmatprep.subr.mxu0 0.0
      %1420 = vmatpush2.msra.mxu0 0.0
      %1421 = vmatprep.subr.mxu0 0.0
      %1422 = vmatpush2.msra.mxu0 0.0
      %1423 = vmatprep.subr.mxu0 0.0
      %1424 = vmatpush2.msra.mxu0 0.0
      %1425 = vmatprep.subr.mxu0 0.0
      %1426 = vmatpush2.msra.mxu0 0.0
      %1427 = vmatprep.subr.mxu0 0.0
      %1428 = vmatpush2.msra.mxu0 0.0
      %1429 = vmatprep.mubr.f32.mxu0 0.0
      %1430 = vmatmul.mubr.f32.gmra.mxu0 %v1216
      %v1431 = vpop.f32.mrf.mxu0
      %v1432 = vadd.f32 0.0, %v1431
      %v1433 = vpop.f32.mrf.mxu0
      %1434 = vdwg.mxu0
      %v1435 = vmul.f32 %v1140, %v1432
      %v1436 = vadd.f32 %v1435, %v977
      %v1437 = vmax.f32 %v1436, 0.0
      %v1439 = vsel %vm827, %v1437, 0
      %1441 = vmatprep.subr.mxu0 0.0
      %1442 = vmatpush1.msra.mxu0 0.0
      %1443 = vmatprep.subr.mxu0 0.0
      %1444 = vmatpush1.msra.mxu0 0.0
      %1445 = vmatprep.subr.mxu0 0.0
      %1446 = vmatpush1.msra.mxu0 0.0
      %1447 = vmatprep.subr.mxu0 0.0
      %1448 = vmatpush1.msra.mxu0 0.0
      %1449 = vmatprep.subr.mxu0 0.0
      %1450 = vmatpush1.msra.mxu0 0.0
      %1451 = vmatprep.subr.mxu0 0.0
      %1452 = vmatpush1.msra.mxu0 0.0
      %1453 = vmatprep.subr.mxu0 0.0
      %1454 = vmatpush1.msra.mxu0 0.0
      %1455 = vmatprep.subr.mxu0 0.0
      %1456 = vmatpush1.msra.mxu0 0.0
      %1457 = vmatprep.subr.mxu0 0.0
      %1458 = vmatpush1.msra.mxu0 0.0
      %1459 = vmatprep.subr.mxu0 0.0
      %1460 = vmatpush1.msra.mxu0 0.0
      %1461 = vmatprep.subr.mxu0 0.0
      %1462 = vmatpush1.msra.mxu0 0.0
      %1463 = vmatprep.subr.mxu0 0.0
      %1464 = vmatpush1.msra.mxu0 0.0
      %1465 = vmatprep.subr.mxu0 0.0
      %1466 = vmatpush1.msra.mxu0 %v660
      %1467 = vmatprep.subr.mxu0 0.0
      %1468 = vmatpush1.msra.mxu0 %v659
      %1469 = vmatprep.subr.mxu0 0.0
      %1470 = vmatpush1.msra.mxu0 %v658
      %1471 = vmatprep.subr.mxu0 0.0
      %1472 = vmatpush1.msra.mxu0 %v657
      %1473 = vmatprep.subr.mxu0 0.0
      %1474 = vmatpush2.msra.mxu0 0.0
      %1475 = vmatprep.subr.mxu0 0.0
      %1476 = vmatpush2.msra.mxu0 0.0
      %1477 = vmatprep.subr.mxu0 0.0
      %1478 = vmatpush2.msra.mxu0 0.0
      %1479 = vmatprep.subr.mxu0 0.0
      %1480 = vmatpush2.msra.mxu0 0.0
      %1481 = vmatprep.subr.mxu0 0.0
      %1482 = vmatpush2.msra.mxu0 0.0
      %1483 = vmatprep.subr.mxu0 0.0
      %1484 = vmatpush2.msra.mxu0 0.0
      %1485 = vmatprep.subr.mxu0 0.0
      %1486 = vmatpush2.msra.mxu0 0.0
      %1487 = vmatprep.subr.mxu0 0.0
      %1488 = vmatpush2.msra.mxu0 0.0
      %1489 = vmatprep.subr.mxu0 0.0
      %1490 = vmatpush2.msra.mxu0 0.0
      %1491 = vmatprep.subr.mxu0 0.0
      %1492 = vmatpush2.msra.mxu0 0.0
      %1493 = vmatprep.subr.mxu0 0.0
      %1494 = vmatpush2.msra.mxu0 0.0
      %1495 = vmatprep.subr.mxu0 0.0
      %1496 = vmatpush2.msra.mxu0 0.0
      %1497 = vmatprep.subr.mxu0 0.0
      %1498 = vmatpush2.msra.mxu0 0.0
      %1499 = vmatprep.subr.mxu0 0.0
      %1500 = vmatpush2.msra.mxu0 0.0
      %1501 = vmatprep.subr.mxu0 0.0
      %1502 = vmatpush2.msra.mxu0 0.0
      %1503 = vmatprep.subr.mxu0 0.0
      %1504 = vmatpush2.msra.mxu0 0.0
      %1505 = vmatprep.mubr.f32.mxu0 0.0
      %1506 = vmatmul.mubr.f32.gmra.mxu0 %v1439
      %v1507 = vpop.f32.mrf.mxu0
      %v1508 = vadd.f32 0.0, %v1507
      %v1509 = vpop.f32.mrf.mxu0
      %1510 = vdwg.mxu0
      %v1511 = vmul.f32 %v1140, %v1508
      %1512 = vmatprep.subr.mxu0 0.0
      %1513 = vmatpush1.msra.mxu0 0.0
      %1514 = vmatprep.subr.mxu0 0.0
      %1515 = vmatpush1.msra.mxu0 0.0
      %1516 = vmatprep.subr.mxu0 0.0
      %1517 = vmatpush1.msra.mxu0 0.0
      %1518 = vmatprep.subr.mxu0 0.0
      %1519 = vmatpush1.msra.mxu0 0.0
      %1520 = vmatprep.subr.mxu0 0.0
      %1521 = vmatpush1.msra.mxu0 0.0
      %1522 = vmatprep.subr.mxu0 0.0
      %1523 = vmatpush1.msra.mxu0 0.0
      %1524 = vmatprep.subr.mxu0 0.0
      %1525 = vmatpush1.msra.mxu0 0.0
      %1526 = vmatprep.subr.mxu0 0.0
      %1527 = vmatpush1.msra.mxu0 0.0
      %1528 = vmatprep.subr.mxu0 0.0
      %1529 = vmatpush1.msra.mxu0 0.0
      %1530 = vmatprep.subr.mxu0 0.0
      %1531 = vmatpush1.msra.mxu0 0.0
      %1532 = vmatprep.subr.mxu0 0.0
      %1533 = vmatpush1.msra.mxu0 0.0
      %1534 = vmatprep.subr.mxu0 0.0
      %1535 = vmatpush1.msra.mxu0 0.0
      %1536 = vmatprep.subr.mxu0 0.0
      %1537 = vmatpush1.msra.mxu0 0.0
      %1538 = vmatprep.subr.mxu0 0.0
      %1539 = vmatpush1.msra.mxu0 0.0
      %1540 = vmatprep.subr.mxu0 0.0
      %1541 = vmatpush1.msra.mxu0 0.0
      %1542 = vmatprep.subr.mxu0 0.0
      %1543 = vmatpush1.msra.mxu0 %v1511
      %1544 = vmatprep.subr.mxu0 0.0
      %1545 = vmatpush2.msra.mxu0 0.0
      %1546 = vmatprep.subr.mxu0 0.0
      %1547 = vmatpush2.msra.mxu0 0.0
      %1548 = vmatprep.subr.mxu0 0.0
      %1549 = vmatpush2.msra.mxu0 0.0
      %1550 = vmatprep.subr.mxu0 0.0
      %1551 = vmatpush2.msra.mxu0 0.0
      %1552 = vmatprep.subr.mxu0 0.0
      %1553 = vmatpush2.msra.mxu0 0.0
      %1554 = vmatprep.subr.mxu0 0.0
      %1555 = vmatpush2.msra.mxu0 0.0
      %1556 = vmatprep.subr.mxu0 0.0
      %1557 = vmatpush2.msra.mxu0 0.0
      %1558 = vmatprep.subr.mxu0 0.0
      %1559 = vmatpush2.msra.mxu0 0.0
      %1560 = vmatprep.subr.mxu0 0.0
      %1561 = vmatpush2.msra.mxu0 0.0
      %1562 = vmatprep.subr.mxu0 0.0
      %1563 = vmatpush2.msra.mxu0 0.0
      %1564 = vmatprep.subr.mxu0 0.0
      %1565 = vmatpush2.msra.mxu0 0.0
      %1566 = vmatprep.subr.mxu0 0.0
      %1567 = vmatpush2.msra.mxu0 0.0
      %1568 = vmatprep.subr.mxu0 0.0
      %1569 = vmatpush2.msra.mxu0 0.0
      %1570 = vmatprep.subr.mxu0 0.0
      %1571 = vmatpush2.msra.mxu0 0.0
      %1572 = vmatprep.subr.mxu0 0.0
      %1573 = vmatpush2.msra.mxu0 0.0
      %1574 = vmatprep.subr.mxu0 0.0
      %1575 = vmatpush2.msra.mxu0 0.0
      %1576 = vmatprep.mubr.f32.mxu0 0.0
      %1577 = vmatmul.mubr.f32.gmra.mxu0 %v1216
      %v1578 = vpop.f32.mrf.mxu0
      %v1579 = vadd.f32 0.0, %v1578
      %v1580 = vpop.f32.mrf.mxu0
      %1581 = vdwg.mxu0
      %v1582 = vmul.f32 %v1140, %v1579
      %v1583 = vadd.f32 %v1582, %v1130
      %v1584 = vmax.f32 %v1583, 0.0
      %v1586 = vsel %vm827, %v1133, 0
      %v1589 = vsel %vm827, %v1584, 0
      %1591 = vmatprep.subr.mxu0 0.0
      %1592 = vmatpush1.xpose.msra.mxu0 0.0
      %1593 = vmatprep.subr.mxu0 0.0
      %1594 = vmatpush1.xpose.msra.mxu0 0.0
      %1595 = vmatprep.subr.mxu0 0.0
      %1596 = vmatpush1.xpose.msra.mxu0 0.0
      %1597 = vmatprep.subr.mxu0 0.0
      %1598 = vmatpush1.xpose.msra.mxu0 0.0
      %1599 = vmatprep.subr.mxu0 0.0
      %1600 = vmatpush1.xpose.msra.mxu0 0.0
      %1601 = vmatprep.subr.mxu0 0.0
      %1602 = vmatpush1.xpose.msra.mxu0 0.0
      %1603 = vmatprep.subr.mxu0 0.0
      %1604 = vmatpush1.xpose.msra.mxu0 0.0
      %1605 = vmatprep.subr.mxu0 0.0
      %1606 = vmatpush1.xpose.msra.mxu0 0.0
      %1607 = vmatprep.subr.mxu0 0.0
      %1608 = vmatpush1.xpose.msra.mxu0 0.0
      %1609 = vmatprep.subr.mxu0 0.0
      %1610 = vmatpush1.xpose.msra.mxu0 0.0
      %1611 = vmatprep.subr.mxu0 0.0
      %1612 = vmatpush1.xpose.msra.mxu0 0.0
      %1613 = vmatprep.subr.mxu0 0.0
      %1614 = vmatpush1.xpose.msra.mxu0 0.0
      %1615 = vmatprep.subr.mxu0 0.0
      %1616 = vmatpush1.xpose.msra.mxu0 0.0
      %1617 = vmatprep.subr.mxu0 0.0
      %1618 = vmatpush1.xpose.msra.mxu0 0.0
      %1619 = vmatprep.subr.mxu0 0.0
      %1620 = vmatpush1.xpose.msra.mxu0 0.0
      %1621 = vmatprep.subr.mxu0 0.0
      %1622 = vmatpush1.xpose.msra.mxu0 %v1589
      %1623 = vmatprep.subr.mxu0 0.0
      %1624 = vmatpush2.xpose.msra.mxu0 0.0
      %1625 = vmatprep.subr.mxu0 0.0
      %1626 = vmatpush2.xpose.msra.mxu0 0.0
      %1627 = vmatprep.subr.mxu0 0.0
      %1628 = vmatpush2.xpose.msra.mxu0 0.0
      %1629 = vmatprep.subr.mxu0 0.0
      %1630 = vmatpush2.xpose.msra.mxu0 0.0
      %1631 = vmatprep.subr.mxu0 0.0
      %1632 = vmatpush2.xpose.msra.mxu0 0.0
      %1633 = vmatprep.subr.mxu0 0.0
      %1634 = vmatpush2.xpose.msra.mxu0 0.0
      %1635 = vmatprep.subr.mxu0 0.0
      %1636 = vmatpush2.xpose.msra.mxu0 0.0
      %1637 = vmatprep.subr.mxu0 0.0
      %1638 = vmatpush2.xpose.msra.mxu0 0.0
      %1639 = vmatprep.subr.mxu0 0.0
      %1640 = vmatpush2.xpose.msra.mxu0 0.0
      %1641 = vmatprep.subr.mxu0 0.0
      %1642 = vmatpush2.xpose.msra.mxu0 0.0
      %1643 = vmatprep.subr.mxu0 0.0
      %1644 = vmatpush2.xpose.msra.mxu0 0.0
      %1645 = vmatprep.subr.mxu0 0.0
      %1646 = vmatpush2.xpose.msra.mxu0 0.0
      %1647 = vmatprep.subr.mxu0 0.0
      %1648 = vmatpush2.xpose.msra.mxu0 0.0
      %1649 = vmatprep.subr.mxu0 0.0
      %1650 = vmatpush2.xpose.msra.mxu0 0.0
      %1651 = vmatprep.subr.mxu0 0.0
      %1652 = vmatpush2.xpose.msra.mxu0 0.0
      %1653 = vmatprep.subr.mxu0 0.0
      %1654 = vmatpush2.xpose.msra.mxu0 0.0
      %1655 = vmatprep.mubr.f32.mxu0 0.0
      %1656 = vmatmul.mubr.f32.gmra.mxu0 %v1586
      %v1657 = vpop.f32.mrf.mxu0
      %v1658 = vadd.f32 0.0, %v1657
      %v1659 = vpop.f32.mrf.mxu0
      %1660 = vdwg.mxu0
      %1661 = vmatprep.subr.mxu0 0.0
      %1662 = vmatpush1.xpose.msra.mxu0 0.0
      %1663 = vmatprep.subr.mxu0 0.0
      %1664 = vmatpush1.xpose.msra.mxu0 0.0
      %1665 = vmatprep.subr.mxu0 0.0
      %1666 = vmatpush1.xpose.msra.mxu0 0.0
      %1667 = vmatprep.subr.mxu0 0.0
      %1668 = vmatpush1.xpose.msra.mxu0 0.0
      %1669 = vmatprep.subr.mxu0 0.0
      %1670 = vmatpush1.xpose.msra.mxu0 0.0
      %1671 = vmatprep.subr.mxu0 0.0
      %1672 = vmatpush1.xpose.msra.mxu0 0.0
      %1673 = vmatprep.subr.mxu0 0.0
      %1674 = vmatpush1.xpose.msra.mxu0 0.0
      %1675 = vmatprep.subr.mxu0 0.0
      %1676 = vmatpush1.xpose.msra.mxu0 0.0
      %1677 = vmatprep.subr.mxu0 0.0
      %1678 = vmatpush1.xpose.msra.mxu0 0.0
      %1679 = vmatprep.subr.mxu0 0.0
      %1680 = vmatpush1.xpose.msra.mxu0 0.0
      %1681 = vmatprep.subr.mxu0 0.0
      %1682 = vmatpush1.xpose.msra.mxu0 0.0
      %1683 = vmatprep.subr.mxu0 0.0
      %1684 = vmatpush1.xpose.msra.mxu0 0.0
      %1685 = vmatprep.subr.mxu0 0.0
      %1686 = vmatpush1.xpose.msra.mxu0 0.0
      %1687 = vmatprep.subr.mxu0 0.0
      %1688 = vmatpush1.xpose.msra.mxu0 0.0
      %1689 = vmatprep.subr.mxu0 0.0
      %1690 = vmatpush1.xpose.msra.mxu0 0.0
      %1691 = vmatprep.subr.mxu0 0.0
      %1692 = vmatpush1.xpose.msra.mxu0 %v1586
      %1693 = vmatprep.subr.mxu0 0.0
      %1694 = vmatpush2.xpose.msra.mxu0 0.0
      %1695 = vmatprep.subr.mxu0 0.0
      %1696 = vmatpush2.xpose.msra.mxu0 0.0
      %1697 = vmatprep.subr.mxu0 0.0
      %1698 = vmatpush2.xpose.msra.mxu0 0.0
      %1699 = vmatprep.subr.mxu0 0.0
      %1700 = vmatpush2.xpose.msra.mxu0 0.0
      %1701 = vmatprep.subr.mxu0 0.0
      %1702 = vmatpush2.xpose.msra.mxu0 0.0
      %1703 = vmatprep.subr.mxu0 0.0
      %1704 = vmatpush2.xpose.msra.mxu0 0.0
      %1705 = vmatprep.subr.mxu0 0.0
      %1706 = vmatpush2.xpose.msra.mxu0 0.0
      %1707 = vmatprep.subr.mxu0 0.0
      %1708 = vmatpush2.xpose.msra.mxu0 0.0
      %1709 = vmatprep.subr.mxu0 0.0
      %1710 = vmatpush2.xpose.msra.mxu0 0.0
      %1711 = vmatprep.subr.mxu0 0.0
      %1712 = vmatpush2.xpose.msra.mxu0 0.0
      %1713 = vmatprep.subr.mxu0 0.0
      %1714 = vmatpush2.xpose.msra.mxu0 0.0
      %1715 = vmatprep.subr.mxu0 0.0
      %1716 = vmatpush2.xpose.msra.mxu0 0.0
      %1717 = vmatprep.subr.mxu0 0.0
      %1718 = vmatpush2.xpose.msra.mxu0 0.0
      %1719 = vmatprep.subr.mxu0 0.0
      %1720 = vmatpush2.xpose.msra.mxu0 0.0
      %1721 = vmatprep.subr.mxu0 0.0
      %1722 = vmatpush2.xpose.msra.mxu0 0.0
      %1723 = vmatprep.subr.mxu0 0.0
      %1724 = vmatpush2.xpose.msra.mxu0 0.0
      %1725 = vmatprep.mubr.f32.mxu0 0.0
      %1726 = vmatmul.mubr.f32.gmra.mxu0 %v1589
      %v1727 = vpop.f32.mrf.mxu0
      %v1728 = vadd.f32 0.0, %v1727
      %v1729 = vpop.f32.mrf.mxu0
      %1730 = vdwg.mxu0
      %v1731 = vmul.f32 %v1133, %v1133
      %v1732 = vsel %vm827, %v1731, 0.0
      %1733 = vadd.xlane.f32.xlu0 %v1732
      %v1734 = vpop.xlane.xlu0 %1733
      %v1735 = vrsqrt.pop %v1734
      %v1736 = vmul.f32 %v1734, %v1735
      %vm1737 = vcmp.eq.f32.partialorder %v1734, inf
      %v1738 = vsel %vm1737, %v1734, %v1736
      %vm1739 = vcmp.eq.f32.partialorder %v1734, 0.0
      %v1740 = vand.u32 %v1734, 2147483648
      %v1741 = vsel %vm1739, %v1740, %v1738
      %v1742 = vmul.f32 %v1584, %v1584
      %v1743 = vsel %vm827, %v1742, 0.0
      %1744 = vadd.xlane.f32.xlu0 %v1743
      %v1745 = vpop.xlane.xlu0 %1744
      %v1746 = vrsqrt.pop %v1745
      %v1747 = vmul.f32 %v1745, %v1746
      %vm1748 = vcmp.eq.f32.partialorder %v1745, inf
      %v1749 = vsel %vm1748, %v1745, %v1747
      %vm1750 = vcmp.eq.f32.partialorder %v1745, 0.0
      %v1751 = vand.u32 %v1745, 2147483648
      %v1752 = vsel %vm1750, %v1751, %v1749
      %v1754 = vsel %vm827, 1.0, 0
      %v1757 = vsel %vm827, %v1731, 0
      %1759 = vmatprep.subr.mxu0 0.0
      %1760 = vmatpush1.xpose.msra.mxu0 0.0
      %1761 = vmatprep.subr.mxu0 0.0
      %1762 = vmatpush1.xpose.msra.mxu0 0.0
      %1763 = vmatprep.subr.mxu0 0.0
      %1764 = vmatpush1.xpose.msra.mxu0 0.0
      %1765 = vmatprep.subr.mxu0 0.0
      %1766 = vmatpush1.xpose.msra.mxu0 0.0
      %1767 = vmatprep.subr.mxu0 0.0
      %1768 = vmatpush1.xpose.msra.mxu0 0.0
      %1769 = vmatprep.subr.mxu0 0.0
      %1770 = vmatpush1.xpose.msra.mxu0 0.0
      %1771 = vmatprep.subr.mxu0 0.0
      %1772 = vmatpush1.xpose.msra.mxu0 0.0
      %1773 = vmatprep.subr.mxu0 0.0
      %1774 = vmatpush1.xpose.msra.mxu0 0.0
      %1775 = vmatprep.subr.mxu0 0.0
      %1776 = vmatpush1.xpose.msra.mxu0 0.0
      %1777 = vmatprep.subr.mxu0 0.0
      %1778 = vmatpush1.xpose.msra.mxu0 0.0
      %1779 = vmatprep.subr.mxu0 0.0
      %1780 = vmatpush1.xpose.msra.mxu0 0.0
      %1781 = vmatprep.subr.mxu0 0.0
      %1782 = vmatpush1.xpose.msra.mxu0 0.0
      %1783 = vmatprep.subr.mxu0 0.0
      %1784 = vmatpush1.xpose.msra.mxu0 0.0
      %1785 = vmatprep.subr.mxu0 0.0
      %1786 = vmatpush1.xpose.msra.mxu0 0.0
      %1787 = vmatprep.subr.mxu0 0.0
      %1788 = vmatpush1.xpose.msra.mxu0 0.0
      %1789 = vmatprep.subr.mxu0 0.0
      %1790 = vmatpush1.xpose.msra.mxu0 %v1757
      %1791 = vmatprep.subr.mxu0 0.0
      %1792 = vmatpush2.xpose.msra.mxu0 0.0
      %1793 = vmatprep.subr.mxu0 0.0
      %1794 = vmatpush2.xpose.msra.mxu0 0.0
      %1795 = vmatprep.subr.mxu0 0.0
      %1796 = vmatpush2.xpose.msra.mxu0 0.0
      %1797 = vmatprep.subr.mxu0 0.0
      %1798 = vmatpush2.xpose.msra.mxu0 0.0
      %1799 = vmatprep.subr.mxu0 0.0
      %1800 = vmatpush2.xpose.msra.mxu0 0.0
      %1801 = vmatprep.subr.mxu0 0.0
      %1802 = vmatpush2.xpose.msra.mxu0 0.0
      %1803 = vmatprep.subr.mxu0 0.0
      %1804 = vmatpush2.xpose.msra.mxu0 0.0
      %1805 = vmatprep.subr.mxu0 0.0
      %1806 = vmatpush2.xpose.msra.mxu0 0.0
      %1807 = vmatprep.subr.mxu0 0.0
      %1808 = vmatpush2.xpose.msra.mxu0 0.0
      %1809 = vmatprep.subr.mxu0 0.0
      %1810 = vmatpush2.xpose.msra.mxu0 0.0
      %1811 = vmatprep.subr.mxu0 0.0
      %1812 = vmatpush2.xpose.msra.mxu0 0.0
      %1813 = vmatprep.subr.mxu0 0.0
      %1814 = vmatpush2.xpose.msra.mxu0 0.0
      %1815 = vmatprep.subr.mxu0 0.0
      %1816 = vmatpush2.xpose.msra.mxu0 0.0
      %1817 = vmatprep.subr.mxu0 0.0
      %1818 = vmatpush2.xpose.msra.mxu0 0.0
      %1819 = vmatprep.subr.mxu0 0.0
      %1820 = vmatpush2.xpose.msra.mxu0 0.0
      %1821 = vmatprep.subr.mxu0 0.0
      %1822 = vmatpush2.xpose.msra.mxu0 0.0
      %1823 = vmatprep.mubr.f32.mxu0 0.0
      %1824 = vmatmul.mubr.f32.gmra.mxu0 %v1754
      %v1825 = vpop.f32.mrf.mxu0
      %v1826 = vadd.f32 0.0, %v1825
      %v1827 = vpop.f32.mrf.mxu0
      %1828 = vdwg.mxu0
      %v1829 = vrsqrt.pop %v1826
      %v1830 = vmul.f32 %v1826, %v1829
      %vm1831 = vcmp.eq.f32.partialorder %v1826, inf
      %v1832 = vsel %vm1831, %v1826, %v1830
      %vm1833 = vcmp.eq.f32.partialorder %v1826, 0.0
      %v1834 = vand.u32 %v1826, 2147483648
      %v1835 = vsel %vm1833, %v1834, %v1832
      %v1837 = vsel %vm827, %v1742, 0
      %1839 = vmatprep.subr.mxu0 0.0
      %1840 = vmatpush1.xpose.msra.mxu0 0.0
      %1841 = vmatprep.subr.mxu0 0.0
      %1842 = vmatpush1.xpose.msra.mxu0 0.0
      %1843 = vmatprep.subr.mxu0 0.0
      %1844 = vmatpush1.xpose.msra.mxu0 0.0
      %1845 = vmatprep.subr.mxu0 0.0
      %1846 = vmatpush1.xpose.msra.mxu0 0.0
      %1847 = vmatprep.subr.mxu0 0.0
      %1848 = vmatpush1.xpose.msra.mxu0 0.0
      %1849 = vmatprep.subr.mxu0 0.0
      %1850 = vmatpush1.xpose.msra.mxu0 0.0
      %1851 = vmatprep.subr.mxu0 0.0
      %1852 = vmatpush1.xpose.msra.mxu0 0.0
      %1853 = vmatprep.subr.mxu0 0.0
      %1854 = vmatpush1.xpose.msra.mxu0 0.0
      %1855 = vmatprep.subr.mxu0 0.0
      %1856 = vmatpush1.xpose.msra.mxu0 0.0
      %1857 = vmatprep.subr.mxu0 0.0
      %1858 = vmatpush1.xpose.msra.mxu0 0.0
      %1859 = vmatprep.subr.mxu0 0.0
      %1860 = vmatpush1.xpose.msra.mxu0 0.0
      %1861 = vmatprep.subr.mxu0 0.0
      %1862 = vmatpush1.xpose.msra.mxu0 0.0
      %1863 = vmatprep.subr.mxu0 0.0
      %1864 = vmatpush1.xpose.msra.mxu0 0.0
      %1865 = vmatprep.subr.mxu0 0.0
      %1866 = vmatpush1.xpose.msra.mxu0 0.0
      %1867 = vmatprep.subr.mxu0 0.0
      %1868 = vmatpush1.xpose.msra.mxu0 0.0
      %1869 = vmatprep.subr.mxu0 0.0
      %1870 = vmatpush1.xpose.msra.mxu0 %v1837
      %1871 = vmatprep.subr.mxu0 0.0
      %1872 = vmatpush2.xpose.msra.mxu0 0.0
      %1873 = vmatprep.subr.mxu0 0.0
      %1874 = vmatpush2.xpose.msra.mxu0 0.0
      %1875 = vmatprep.subr.mxu0 0.0
      %1876 = vmatpush2.xpose.msra.mxu0 0.0
      %1877 = vmatprep.subr.mxu0 0.0
      %1878 = vmatpush2.xpose.msra.mxu0 0.0
      %1879 = vmatprep.subr.mxu0 0.0
      %1880 = vmatpush2.xpose.msra.mxu0 0.0
      %1881 = vmatprep.subr.mxu0 0.0
      %1882 = vmatpush2.xpose.msra.mxu0 0.0
      %1883 = vmatprep.subr.mxu0 0.0
      %1884 = vmatpush2.xpose.msra.mxu0 0.0
      %1885 = vmatprep.subr.mxu0 0.0
      %1886 = vmatpush2.xpose.msra.mxu0 0.0
      %1887 = vmatprep.subr.mxu0 0.0
      %1888 = vmatpush2.xpose.msra.mxu0 0.0
      %1889 = vmatprep.subr.mxu0 0.0
      %1890 = vmatpush2.xpose.msra.mxu0 0.0
      %1891 = vmatprep.subr.mxu0 0.0
      %1892 = vmatpush2.xpose.msra.mxu0 0.0
      %1893 = vmatprep.subr.mxu0 0.0
      %1894 = vmatpush2.xpose.msra.mxu0 0.0
      %1895 = vmatprep.subr.mxu0 0.0
      %1896 = vmatpush2.xpose.msra.mxu0 0.0
      %1897 = vmatprep.subr.mxu0 0.0
      %1898 = vmatpush2.xpose.msra.mxu0 0.0
      %1899 = vmatprep.subr.mxu0 0.0
      %1900 = vmatpush2.xpose.msra.mxu0 0.0
      %1901 = vmatprep.subr.mxu0 0.0
      %1902 = vmatpush2.xpose.msra.mxu0 0.0
      %1903 = vmatprep.mubr.f32.mxu0 0.0
      %1904 = vmatmul.mubr.f32.gmra.mxu0 %v1754
      %v1905 = vpop.f32.mrf.mxu0
      %v1906 = vadd.f32 0.0, %v1905
      %v1907 = vpop.f32.mrf.mxu0
      %1908 = vdwg.mxu0
      %v1909 = vrsqrt.pop %v1906
      %v1910 = vmul.f32 %v1906, %v1909
      %vm1911 = vcmp.eq.f32.partialorder %v1906, inf
      %v1912 = vsel %vm1911, %v1906, %v1910
      %vm1913 = vcmp.eq.f32.partialorder %v1906, 0.0
      %v1914 = vand.u32 %v1906, 2147483648
      %v1915 = vsel %vm1913, %v1914, %v1912
      %v1916 = vlaneseq
      %v1917 = vshrl.u32 %v1916, 7
      %v1918 = vsub.s32 0, %v1917
      %v1919 = vrot.slane %v1915, %v1918
      %v1920 = vmul.f32 %v1741, %v1919
      %vm1921 = vcmp.gt.f32.partialorder %v1920, 1e-08
      %v1922 = vsel %vm1921, %v1920, 1e-08
      %v1923 = vrcp.pop %v1922
      %v1924 = vmul.f32 %v1658, %v1923
      %v1925 = vlaneseq
      %v1926 = vshrl.u32 %v1925, 7
      %v1927 = vsub.s32 0, %v1926
      %v1928 = vrot.slane %v1835, %v1927
      %v1929 = vmul.f32 %v1752, %v1928
      %vm1930 = vcmp.gt.f32.partialorder %v1929, 1e-08
      %v1931 = vsel %vm1930, %v1929, 1e-08
      %v1932 = vrcp.pop %v1931
      %v1933 = vmul.f32 %v1728, %v1932
      %v1935 = vsel %vm664, %v1924, 0
      %1937 = vmatprep.subr.mxu0 0.0
      %1938 = vmatpush1.msra.mxu0 0.0
      %1939 = vmatprep.subr.mxu0 0.0
      %1940 = vmatpush1.msra.mxu0 0.0
      %1941 = vmatprep.subr.mxu0 0.0
      %1942 = vmatpush1.msra.mxu0 0.0
      %1943 = vmatprep.subr.mxu0 0.0
      %1944 = vmatpush1.msra.mxu0 0.0
      %1945 = vmatprep.subr.mxu0 0.0
      %1946 = vmatpush1.msra.mxu0 0.0
      %1947 = vmatprep.subr.mxu0 0.0
      %1948 = vmatpush1.msra.mxu0 0.0
      %1949 = vmatprep.subr.mxu0 0.0
      %1950 = vmatpush1.msra.mxu0 0.0
      %1951 = vmatprep.subr.mxu0 0.0
      %1952 = vmatpush1.msra.mxu0 0.0
      %1953 = vmatprep.subr.mxu0 0.0
      %1954 = vmatpush1.msra.mxu0 0.0
      %1955 = vmatprep.subr.mxu0 0.0
      %1956 = vmatpush1.msra.mxu0 0.0
      %1957 = vmatprep.subr.mxu0 0.0
      %1958 = vmatpush1.msra.mxu0 0.0
      %1959 = vmatprep.subr.mxu0 0.0
      %1960 = vmatpush1.msra.mxu0 0.0
      %1961 = vmatprep.subr.mxu0 0.0
      %1962 = vmatpush1.msra.mxu0 0.0
      %1963 = vmatprep.subr.mxu0 0.0
      %1964 = vmatpush1.msra.mxu0 0.0
      %1965 = vmatprep.subr.mxu0 0.0
      %1966 = vmatpush1.msra.mxu0 0.0
      %1967 = vmatprep.subr.mxu0 0.0
      %1968 = vmatpush1.msra.mxu0 %v1584
      %1969 = vmatprep.subr.mxu0 0.0
      %1970 = vmatpush2.msra.mxu0 0.0
      %1971 = vmatprep.subr.mxu0 0.0
      %1972 = vmatpush2.msra.mxu0 0.0
      %1973 = vmatprep.subr.mxu0 0.0
      %1974 = vmatpush2.msra.mxu0 0.0
      %1975 = vmatprep.subr.mxu0 0.0
      %1976 = vmatpush2.msra.mxu0 0.0
      %1977 = vmatprep.subr.mxu0 0.0
      %1978 = vmatpush2.msra.mxu0 0.0
      %1979 = vmatprep.subr.mxu0 0.0
      %1980 = vmatpush2.msra.mxu0 0.0
      %1981 = vmatprep.subr.mxu0 0.0
      %1982 = vmatpush2.msra.mxu0 0.0
      %1983 = vmatprep.subr.mxu0 0.0
      %1984 = vmatpush2.msra.mxu0 0.0
      %1985 = vmatprep.subr.mxu0 0.0
      %1986 = vmatpush2.msra.mxu0 0.0
      %1987 = vmatprep.subr.mxu0 0.0
      %1988 = vmatpush2.msra.mxu0 0.0
      %1989 = vmatprep.subr.mxu0 0.0
      %1990 = vmatpush2.msra.mxu0 0.0
      %1991 = vmatprep.subr.mxu0 0.0
      %1992 = vmatpush2.msra.mxu0 0.0
      %1993 = vmatprep.subr.mxu0 0.0
      %1994 = vmatpush2.msra.mxu0 0.0
      %1995 = vmatprep.subr.mxu0 0.0
      %1996 = vmatpush2.msra.mxu0 0.0
      %1997 = vmatprep.subr.mxu0 0.0
      %1998 = vmatpush2.msra.mxu0 0.0
      %1999 = vmatprep.subr.mxu0 0.0
      %2000 = vmatpush2.msra.mxu0 0.0
      %2001 = vmatprep.mubr.f32.mxu0 0.0
      %2002 = vmatmul.mubr.f32.gmra.mxu0 %v1935
      %v2003 = vpop.f32.mrf.mxu0
      %v2004 = vadd.f32 0.0, %v2003
      %v2005 = vpop.f32.mrf.mxu0
      %2006 = vdwg.mxu0
      %v2007 = vsel %vm664, %v1924, 0.0
      %2008 = vadd.xlane.f32.xlu0 %v2007
      %v2009 = vpop.xlane.xlu0 %2008
      %vm2010 = vcmp.gt.f32.partialorder %v2009, 1e-08
      %v2011 = vsel %vm2010, %v2009, 1e-08
      %v2012 = vrcp.pop %v2011
      %v2013 = vmul.f32 %v2004, %v2012
      %v2015 = vsel %vm664, %v1933, 0
      %2017 = vmatprep.subr.mxu0 0.0
      %2018 = vmatpush1.msra.mxu0 0.0
      %2019 = vmatprep.subr.mxu0 0.0
      %2020 = vmatpush1.msra.mxu0 0.0
      %2021 = vmatprep.subr.mxu0 0.0
      %2022 = vmatpush1.msra.mxu0 0.0
      %2023 = vmatprep.subr.mxu0 0.0
      %2024 = vmatpush1.msra.mxu0 0.0
      %2025 = vmatprep.subr.mxu0 0.0
      %2026 = vmatpush1.msra.mxu0 0.0
      %2027 = vmatprep.subr.mxu0 0.0
      %2028 = vmatpush1.msra.mxu0 0.0
      %2029 = vmatprep.subr.mxu0 0.0
      %2030 = vmatpush1.msra.mxu0 0.0
      %2031 = vmatprep.subr.mxu0 0.0
      %2032 = vmatpush1.msra.mxu0 0.0
      %2033 = vmatprep.subr.mxu0 0.0
      %2034 = vmatpush1.msra.mxu0 0.0
      %2035 = vmatprep.subr.mxu0 0.0
      %2036 = vmatpush1.msra.mxu0 0.0
      %2037 = vmatprep.subr.mxu0 0.0
      %2038 = vmatpush1.msra.mxu0 0.0
      %2039 = vmatprep.subr.mxu0 0.0
      %2040 = vmatpush1.msra.mxu0 0.0
      %2041 = vmatprep.subr.mxu0 0.0
      %2042 = vmatpush1.msra.mxu0 0.0
      %2043 = vmatprep.subr.mxu0 0.0
      %2044 = vmatpush1.msra.mxu0 0.0
      %2045 = vmatprep.subr.mxu0 0.0
      %2046 = vmatpush1.msra.mxu0 0.0
      %2047 = vmatprep.subr.mxu0 0.0
      %2048 = vmatpush1.msra.mxu0 %v1133
      %2049 = vmatprep.subr.mxu0 0.0
      %2050 = vmatpush2.msra.mxu0 0.0
      %2051 = vmatprep.subr.mxu0 0.0
      %2052 = vmatpush2.msra.mxu0 0.0
      %2053 = vmatprep.subr.mxu0 0.0
      %2054 = vmatpush2.msra.mxu0 0.0
      %2055 = vmatprep.subr.mxu0 0.0
      %2056 = vmatpush2.msra.mxu0 0.0
      %2057 = vmatprep.subr.mxu0 0.0
      %2058 = vmatpush2.msra.mxu0 0.0
      %2059 = vmatprep.subr.mxu0 0.0
      %2060 = vmatpush2.msra.mxu0 0.0
      %2061 = vmatprep.subr.mxu0 0.0
      %2062 = vmatpush2.msra.mxu0 0.0
      %2063 = vmatprep.subr.mxu0 0.0
      %2064 = vmatpush2.msra.mxu0 0.0
      %2065 = vmatprep.subr.mxu0 0.0
      %2066 = vmatpush2.msra.mxu0 0.0
      %2067 = vmatprep.subr.mxu0 0.0
      %2068 = vmatpush2.msra.mxu0 0.0
      %2069 = vmatprep.subr.mxu0 0.0
      %2070 = vmatpush2.msra.mxu0 0.0
      %2071 = vmatprep.subr.mxu0 0.0
      %2072 = vmatpush2.msra.mxu0 0.0
      %2073 = vmatprep.subr.mxu0 0.0
      %2074 = vmatpush2.msra.mxu0 0.0
      %2075 = vmatprep.subr.mxu0 0.0
      %2076 = vmatpush2.msra.mxu0 0.0
      %2077 = vmatprep.subr.mxu0 0.0
      %2078 = vmatpush2.msra.mxu0 0.0
      %2079 = vmatprep.subr.mxu0 0.0
      %2080 = vmatpush2.msra.mxu0 0.0
      %2081 = vmatprep.mubr.f32.mxu0 0.0
      %2082 = vmatmul.mubr.f32.gmra.mxu0 %v2015
      %v2083 = vpop.f32.mrf.mxu0
      %v2084 = vadd.f32 0.0, %v2083
      %v2085 = vpop.f32.mrf.mxu0
      %2086 = vdwg.mxu0
      %v2087 = vsel %vm664, %v1933, 0.0
      %2088 = vadd.xlane.f32.xlu0 %v2087
      %v2089 = vpop.xlane.xlu0 %2088
      %vm2090 = vcmp.gt.f32.partialorder %v2089, 1e-08
      %v2091 = vsel %vm2090, %v2089, 1e-08
      %v2092 = vrcp.pop %v2091
      %v2093 = vmul.f32 %v2084, %v2092
      %v2094 = vld [vmem:[%s10] sm:$0xff]
      %v2095 = vld [vmem:[%s10 + $0x8] sm:$0xff]
      %v2096 = vld [vmem:[%s10 + $0x10] sm:$0xff]
      %v2097 = vld [vmem:[%s10 + $0x18] sm:$0xff]
      %v2098 = vmul.f32 %v1133, %v2013
      %v2100 = vsel %vm827, %v2098, 0
      %2102 = vmatprep.subr.mxu0 0.0
      %2103 = vmatpush1.msra.mxu0 0.0
      %2104 = vmatprep.subr.mxu0 0.0
      %2105 = vmatpush1.msra.mxu0 0.0
      %2106 = vmatprep.subr.mxu0 0.0
      %2107 = vmatpush1.msra.mxu0 0.0
      %2108 = vmatprep.subr.mxu0 0.0
      %2109 = vmatpush1.msra.mxu0 0.0
      %2110 = vmatprep.subr.mxu0 0.0
      %2111 = vmatpush1.msra.mxu0 0.0
      %2112 = vmatprep.subr.mxu0 0.0
      %2113 = vmatpush1.msra.mxu0 0.0
      %2114 = vmatprep.subr.mxu0 0.0
      %2115 = vmatpush1.msra.mxu0 0.0
      %2116 = vmatprep.subr.mxu0 0.0
      %2117 = vmatpush1.msra.mxu0 0.0
      %2118 = vmatprep.subr.mxu0 0.0
      %2119 = vmatpush1.msra.mxu0 0.0
      %2120 = vmatprep.subr.mxu0 0.0
      %2121 = vmatpush1.msra.mxu0 0.0
      %2122 = vmatprep.subr.mxu0 0.0
      %2123 = vmatpush1.msra.mxu0 0.0
      %2124 = vmatprep.subr.mxu0 0.0
      %2125 = vmatpush1.msra.mxu0 0.0
      %2126 = vmatprep.subr.mxu0 0.0
      %2127 = vmatpush1.msra.mxu0 %v2097
      %2128 = vmatprep.subr.mxu0 0.0
      %2129 = vmatpush1.msra.mxu0 %v2096
      %2130 = vmatprep.subr.mxu0 0.0
      %2131 = vmatpush1.msra.mxu0 %v2095
      %2132 = vmatprep.subr.mxu0 0.0
      %2133 = vmatpush1.msra.mxu0 %v2094
      %2134 = vmatprep.subr.mxu0 0.0
      %2135 = vmatpush2.msra.mxu0 0.0
      %2136 = vmatprep.subr.mxu0 0.0
      %2137 = vmatpush2.msra.mxu0 0.0
      %2138 = vmatprep.subr.mxu0 0.0
      %2139 = vmatpush2.msra.mxu0 0.0
      %2140 = vmatprep.subr.mxu0 0.0
      %2141 = vmatpush2.msra.mxu0 0.0
      %2142 = vmatprep.subr.mxu0 0.0
      %2143 = vmatpush2.msra.mxu0 0.0
      %2144 = vmatprep.subr.mxu0 0.0
      %2145 = vmatpush2.msra.mxu0 0.0
      %2146 = vmatprep.subr.mxu0 0.0
      %2147 = vmatpush2.msra.mxu0 0.0
      %2148 = vmatprep.subr.mxu0 0.0
      %2149 = vmatpush2.msra.mxu0 0.0
      %2150 = vmatprep.subr.mxu0 0.0
      %2151 = vmatpush2.msra.mxu0 0.0
      %2152 = vmatprep.subr.mxu0 0.0
      %2153 = vmatpush2.msra.mxu0 0.0
      %2154 = vmatprep.subr.mxu0 0.0
      %2155 = vmatpush2.msra.mxu0 0.0
      %2156 = vmatprep.subr.mxu0 0.0
      %2157 = vmatpush2.msra.mxu0 0.0
      %2158 = vmatprep.subr.mxu0 0.0
      %2159 = vmatpush2.msra.mxu0 0.0
      %2160 = vmatprep.subr.mxu0 0.0
      %2161 = vmatpush2.msra.mxu0 0.0
      %2162 = vmatprep.subr.mxu0 0.0
      %2163 = vmatpush2.msra.mxu0 0.0
      %2164 = vmatprep.subr.mxu0 0.0
      %2165 = vmatpush2.msra.mxu0 0.0
      %2166 = vmatprep.mubr.f32.mxu0 0.0
      %2167 = vmatmul.mubr.f32.gmra.mxu0 %v2100
      %v2168 = vpop.f32.mrf.mxu0
      %v2169 = vadd.f32 0.0, %v2168
      %v2170 = vpop.f32.mrf.mxu0
      %2171 = vdwg.mxu0
      %2172 = vmatprep.subr.mxu0 0.0
      %2173 = vmatpush1.msra.mxu0 0.0
      %2174 = vmatprep.subr.mxu0 0.0
      %2175 = vmatpush1.msra.mxu0 0.0
      %2176 = vmatprep.subr.mxu0 0.0
      %2177 = vmatpush1.msra.mxu0 0.0
      %2178 = vmatprep.subr.mxu0 0.0
      %2179 = vmatpush1.msra.mxu0 0.0
      %2180 = vmatprep.subr.mxu0 0.0
      %2181 = vmatpush1.msra.mxu0 0.0
      %2182 = vmatprep.subr.mxu0 0.0
      %2183 = vmatpush1.msra.mxu0 0.0
      %2184 = vmatprep.subr.mxu0 0.0
      %2185 = vmatpush1.msra.mxu0 0.0
      %2186 = vmatprep.subr.mxu0 0.0
      %2187 = vmatpush1.msra.mxu0 0.0
      %2188 = vmatprep.subr.mxu0 0.0
      %2189 = vmatpush1.msra.mxu0 0.0
      %2190 = vmatprep.subr.mxu0 0.0
      %2191 = vmatpush1.msra.mxu0 0.0
      %2192 = vmatprep.subr.mxu0 0.0
      %2193 = vmatpush1.msra.mxu0 0.0
      %2194 = vmatprep.subr.mxu0 0.0
      %2195 = vmatpush1.msra.mxu0 0.0
      %2196 = vmatprep.subr.mxu0 0.0
      %2197 = vmatpush1.msra.mxu0 %v2097
      %2198 = vmatprep.subr.mxu0 0.0
      %2199 = vmatpush1.msra.mxu0 %v2096
      %2200 = vmatprep.subr.mxu0 0.0
      %2201 = vmatpush1.msra.mxu0 %v2095
      %2202 = vmatprep.subr.mxu0 0.0
      %2203 = vmatpush1.msra.mxu0 %v2094
      %2204 = vmatprep.subr.mxu0 0.0
      %2205 = vmatpush2.msra.mxu0 0.0
      %2206 = vmatprep.subr.mxu0 0.0
      %2207 = vmatpush2.msra.mxu0 0.0
      %2208 = vmatprep.subr.mxu0 0.0
      %2209 = vmatpush2.msra.mxu0 0.0
      %2210 = vmatprep.subr.mxu0 0.0
      %2211 = vmatpush2.msra.mxu0 0.0
      %2212 = vmatprep.subr.mxu0 0.0
      %2213 = vmatpush2.msra.mxu0 0.0
      %2214 = vmatprep.subr.mxu0 0.0
      %2215 = vmatpush2.msra.mxu0 0.0
      %2216 = vmatprep.subr.mxu0 0.0
      %2217 = vmatpush2.msra.mxu0 0.0
      %2218 = vmatprep.subr.mxu0 0.0
      %2219 = vmatpush2.msra.mxu0 0.0
      %2220 = vmatprep.subr.mxu0 0.0
      %2221 = vmatpush2.msra.mxu0 0.0
      %2222 = vmatprep.subr.mxu0 0.0
      %2223 = vmatpush2.msra.mxu0 0.0
      %2224 = vmatprep.subr.mxu0 0.0
      %2225 = vmatpush2.msra.mxu0 0.0
      %2226 = vmatprep.subr.mxu0 0.0
      %2227 = vmatpush2.msra.mxu0 0.0
      %2228 = vmatprep.subr.mxu0 0.0
      %2229 = vmatpush2.msra.mxu0 0.0
      %2230 = vmatprep.subr.mxu0 0.0
      %2231 = vmatpush2.msra.mxu0 0.0
      %2232 = vmatprep.subr.mxu0 0.0
      %2233 = vmatpush2.msra.mxu0 0.0
      %2234 = vmatprep.subr.mxu0 0.0
      %2235 = vmatpush2.msra.mxu0 0.0
      %2236 = vmatprep.mubr.f32.mxu0 0.0
      %2237 = vmatmul.mubr.f32.gmra.mxu0 %v1757
      %v2238 = vpop.f32.mrf.mxu0
      %v2239 = vadd.f32 0.0, %v2238
      %v2240 = vpop.f32.mrf.mxu0
      %2241 = vdwg.mxu0
      %v2242 = vrsqrt.pop %v2239
      %v2243 = vmul.f32 %v2239, %v2242
      %vm2244 = vcmp.eq.f32.partialorder %v2239, inf
      %v2245 = vsel %vm2244, %v2239, %v2243
      %vm2246 = vcmp.eq.f32.partialorder %v2239, 0.0
      %v2247 = vand.u32 %v2239, 2147483648
      %v2248 = vsel %vm2246, %v2247, %v2245
      %v2249 = vmul.f32 %v2013, %v2013
      %v2251 = vsel %vm827, %v2249, 0
      %2253 = vmatprep.subr.mxu0 0.0
      %2254 = vmatpush1.msra.mxu0 0.0
      %2255 = vmatprep.subr.mxu0 0.0
      %2256 = vmatpush1.msra.mxu0 0.0
      %2257 = vmatprep.subr.mxu0 0.0
      %2258 = vmatpush1.msra.mxu0 0.0
      %2259 = vmatprep.subr.mxu0 0.0
      %2260 = vmatpush1.msra.mxu0 0.0
      %2261 = vmatprep.subr.mxu0 0.0
      %2262 = vmatpush1.msra.mxu0 0.0
      %2263 = vmatprep.subr.mxu0 0.0
      %2264 = vmatpush1.msra.mxu0 0.0
      %2265 = vmatprep.subr.mxu0 0.0
      %2266 = vmatpush1.msra.mxu0 0.0
      %2267 = vmatprep.subr.mxu0 0.0
      %2268 = vmatpush1.msra.mxu0 0.0
      %2269 = vmatprep.subr.mxu0 0.0
      %2270 = vmatpush1.msra.mxu0 0.0
      %2271 = vmatprep.subr.mxu0 0.0
      %2272 = vmatpush1.msra.mxu0 0.0
      %2273 = vmatprep.subr.mxu0 0.0
      %2274 = vmatpush1.msra.mxu0 0.0
      %2275 = vmatprep.subr.mxu0 0.0
      %2276 = vmatpush1.msra.mxu0 0.0
      %2277 = vmatprep.subr.mxu0 0.0
      %2278 = vmatpush1.msra.mxu0 %v2097
      %2279 = vmatprep.subr.mxu0 0.0
      %2280 = vmatpush1.msra.mxu0 %v2096
      %2281 = vmatprep.subr.mxu0 0.0
      %2282 = vmatpush1.msra.mxu0 %v2095
      %2283 = vmatprep.subr.mxu0 0.0
      %2284 = vmatpush1.msra.mxu0 %v2094
      %2285 = vmatprep.subr.mxu0 0.0
      %2286 = vmatpush2.msra.mxu0 0.0
      %2287 = vmatprep.subr.mxu0 0.0
      %2288 = vmatpush2.msra.mxu0 0.0
      %2289 = vmatprep.subr.mxu0 0.0
      %2290 = vmatpush2.msra.mxu0 0.0
      %2291 = vmatprep.subr.mxu0 0.0
      %2292 = vmatpush2.msra.mxu0 0.0
      %2293 = vmatprep.subr.mxu0 0.0
      %2294 = vmatpush2.msra.mxu0 0.0
      %2295 = vmatprep.subr.mxu0 0.0
      %2296 = vmatpush2.msra.mxu0 0.0
      %2297 = vmatprep.subr.mxu0 0.0
      %2298 = vmatpush2.msra.mxu0 0.0
      %2299 = vmatprep.subr.mxu0 0.0
      %2300 = vmatpush2.msra.mxu0 0.0
      %2301 = vmatprep.subr.mxu0 0.0
      %2302 = vmatpush2.msra.mxu0 0.0
      %2303 = vmatprep.subr.mxu0 0.0
      %2304 = vmatpush2.msra.mxu0 0.0
      %2305 = vmatprep.subr.mxu0 0.0
      %2306 = vmatpush2.msra.mxu0 0.0
      %2307 = vmatprep.subr.mxu0 0.0
      %2308 = vmatpush2.msra.mxu0 0.0
      %2309 = vmatprep.subr.mxu0 0.0
      %2310 = vmatpush2.msra.mxu0 0.0
      %2311 = vmatprep.subr.mxu0 0.0
      %2312 = vmatpush2.msra.mxu0 0.0
      %2313 = vmatprep.subr.mxu0 0.0
      %2314 = vmatpush2.msra.mxu0 0.0
      %2315 = vmatprep.subr.mxu0 0.0
      %2316 = vmatpush2.msra.mxu0 0.0
      %2317 = vmatprep.mubr.f32.mxu0 0.0
      %2318 = vmatmul.mubr.f32.gmra.mxu0 %v2251
      %v2319 = vpop.f32.mrf.mxu0
      %v2320 = vadd.f32 0.0, %v2319
      %v2321 = vpop.f32.mrf.mxu0
      %2322 = vdwg.mxu0
      %v2323 = vrsqrt.pop %v2320
      %v2324 = vmul.f32 %v2320, %v2323
      %vm2325 = vcmp.eq.f32.partialorder %v2320, inf
      %v2326 = vsel %vm2325, %v2320, %v2324
      %vm2327 = vcmp.eq.f32.partialorder %v2320, 0.0
      %v2328 = vand.u32 %v2320, 2147483648
      %v2329 = vsel %vm2327, %v2328, %v2326
      %v2330 = vmax.f32 %v2248, 1e-08
      %v2331 = vmax.f32 %v2329, 1e-08
      %v2332 = vmul.f32 %v2330, %v2331
      %v2333 = vrcp.pop %v2332
      %v2334 = vmul.f32 %v2169, %v2333
      %v2335 = vmul.f32 %v1584, %v2093
      %v2337 = vsel %vm827, %v2335, 0
      %2339 = vmatprep.subr.mxu0 0.0
      %2340 = vmatpush1.msra.mxu0 0.0
      %2341 = vmatprep.subr.mxu0 0.0
      %2342 = vmatpush1.msra.mxu0 0.0
      %2343 = vmatprep.subr.mxu0 0.0
      %2344 = vmatpush1.msra.mxu0 0.0
      %2345 = vmatprep.subr.mxu0 0.0
      %2346 = vmatpush1.msra.mxu0 0.0
      %2347 = vmatprep.subr.mxu0 0.0
      %2348 = vmatpush1.msra.mxu0 0.0
      %2349 = vmatprep.subr.mxu0 0.0
      %2350 = vmatpush1.msra.mxu0 0.0
      %2351 = vmatprep.subr.mxu0 0.0
      %2352 = vmatpush1.msra.mxu0 0.0
      %2353 = vmatprep.subr.mxu0 0.0
      %2354 = vmatpush1.msra.mxu0 0.0
      %2355 = vmatprep.subr.mxu0 0.0
      %2356 = vmatpush1.msra.mxu0 0.0
      %2357 = vmatprep.subr.mxu0 0.0
      %2358 = vmatpush1.msra.mxu0 0.0
      %2359 = vmatprep.subr.mxu0 0.0
      %2360 = vmatpush1.msra.mxu0 0.0
      %2361 = vmatprep.subr.mxu0 0.0
      %2362 = vmatpush1.msra.mxu0 0.0
      %2363 = vmatprep.subr.mxu0 0.0
      %2364 = vmatpush1.msra.mxu0 %v2097
      %2365 = vmatprep.subr.mxu0 0.0
      %2366 = vmatpush1.msra.mxu0 %v2096
      %2367 = vmatprep.subr.mxu0 0.0
      %2368 = vmatpush1.msra.mxu0 %v2095
      %2369 = vmatprep.subr.mxu0 0.0
      %2370 = vmatpush1.msra.mxu0 %v2094
      %2371 = vmatprep.subr.mxu0 0.0
      %2372 = vmatpush2.msra.mxu0 0.0
      %2373 = vmatprep.subr.mxu0 0.0
      %2374 = vmatpush2.msra.mxu0 0.0
      %2375 = vmatprep.subr.mxu0 0.0
      %2376 = vmatpush2.msra.mxu0 0.0
      %2377 = vmatprep.subr.mxu0 0.0
      %2378 = vmatpush2.msra.mxu0 0.0
      %2379 = vmatprep.subr.mxu0 0.0
      %2380 = vmatpush2.msra.mxu0 0.0
      %2381 = vmatprep.subr.mxu0 0.0
      %2382 = vmatpush2.msra.mxu0 0.0
      %2383 = vmatprep.subr.mxu0 0.0
      %2384 = vmatpush2.msra.mxu0 0.0
      %2385 = vmatprep.subr.mxu0 0.0
      %2386 = vmatpush2.msra.mxu0 0.0
      %2387 = vmatprep.subr.mxu0 0.0
      %2388 = vmatpush2.msra.mxu0 0.0
      %2389 = vmatprep.subr.mxu0 0.0
      %2390 = vmatpush2.msra.mxu0 0.0
      %2391 = vmatprep.subr.mxu0 0.0
      %2392 = vmatpush2.msra.mxu0 0.0
      %2393 = vmatprep.subr.mxu0 0.0
      %2394 = vmatpush2.msra.mxu0 0.0
      %2395 = vmatprep.subr.mxu0 0.0
      %2396 = vmatpush2.msra.mxu0 0.0
      %2397 = vmatprep.subr.mxu0 0.0
      %2398 = vmatpush2.msra.mxu0 0.0
      %2399 = vmatprep.subr.mxu0 0.0
      %2400 = vmatpush2.msra.mxu0 0.0
      %2401 = vmatprep.subr.mxu0 0.0
      %2402 = vmatpush2.msra.mxu0 0.0
      %2403 = vmatprep.mubr.f32.mxu0 0.0
      %2404 = vmatmul.mubr.f32.gmra.mxu0 %v2337
      %v2405 = vpop.f32.mrf.mxu0
      %v2406 = vadd.f32 0.0, %v2405
      %v2407 = vpop.f32.mrf.mxu0
      %2408 = vdwg.mxu0
      %2409 = vmatprep.subr.mxu0 0.0
      %2410 = vmatpush1.msra.mxu0 0.0
      %2411 = vmatprep.subr.mxu0 0.0
      %2412 = vmatpush1.msra.mxu0 0.0
      %2413 = vmatprep.subr.mxu0 0.0
      %2414 = vmatpush1.msra.mxu0 0.0
      %2415 = vmatprep.subr.mxu0 0.0
      %2416 = vmatpush1.msra.mxu0 0.0
      %2417 = vmatprep.subr.mxu0 0.0
      %2418 = vmatpush1.msra.mxu0 0.0
      %2419 = vmatprep.subr.mxu0 0.0
      %2420 = vmatpush1.msra.mxu0 0.0
      %2421 = vmatprep.subr.mxu0 0.0
      %2422 = vmatpush1.msra.mxu0 0.0
      %2423 = vmatprep.subr.mxu0 0.0
      %2424 = vmatpush1.msra.mxu0 0.0
      %2425 = vmatprep.subr.mxu0 0.0
      %2426 = vmatpush1.msra.mxu0 0.0
      %2427 = vmatprep.subr.mxu0 0.0
      %2428 = vmatpush1.msra.mxu0 0.0
      %2429 = vmatprep.subr.mxu0 0.0
      %2430 = vmatpush1.msra.mxu0 0.0
      %2431 = vmatprep.subr.mxu0 0.0
      %2432 = vmatpush1.msra.mxu0 0.0
      %2433 = vmatprep.subr.mxu0 0.0
      %2434 = vmatpush1.msra.mxu0 %v2097
      %2435 = vmatprep.subr.mxu0 0.0
      %2436 = vmatpush1.msra.mxu0 %v2096
      %2437 = vmatprep.subr.mxu0 0.0
      %2438 = vmatpush1.msra.mxu0 %v2095
      %2439 = vmatprep.subr.mxu0 0.0
      %2440 = vmatpush1.msra.mxu0 %v2094
      %2441 = vmatprep.subr.mxu0 0.0
      %2442 = vmatpush2.msra.mxu0 0.0
      %2443 = vmatprep.subr.mxu0 0.0
      %2444 = vmatpush2.msra.mxu0 0.0
      %2445 = vmatprep.subr.mxu0 0.0
      %2446 = vmatpush2.msra.mxu0 0.0
      %2447 = vmatprep.subr.mxu0 0.0
      %2448 = vmatpush2.msra.mxu0 0.0
      %2449 = vmatprep.subr.mxu0 0.0
      %2450 = vmatpush2.msra.mxu0 0.0
      %2451 = vmatprep.subr.mxu0 0.0
      %2452 = vmatpush2.msra.mxu0 0.0
      %2453 = vmatprep.subr.mxu0 0.0
      %2454 = vmatpush2.msra.mxu0 0.0
      %2455 = vmatprep.subr.mxu0 0.0
      %2456 = vmatpush2.msra.mxu0 0.0
      %2457 = vmatprep.subr.mxu0 0.0
      %2458 = vmatpush2.msra.mxu0 0.0
      %2459 = vmatprep.subr.mxu0 0.0
      %2460 = vmatpush2.msra.mxu0 0.0
      %2461 = vmatprep.subr.mxu0 0.0
      %2462 = vmatpush2.msra.mxu0 0.0
      %2463 = vmatprep.subr.mxu0 0.0
      %2464 = vmatpush2.msra.mxu0 0.0
      %2465 = vmatprep.subr.mxu0 0.0
      %2466 = vmatpush2.msra.mxu0 0.0
      %2467 = vmatprep.subr.mxu0 0.0
      %2468 = vmatpush2.msra.mxu0 0.0
      %2469 = vmatprep.subr.mxu0 0.0
      %2470 = vmatpush2.msra.mxu0 0.0
      %2471 = vmatprep.subr.mxu0 0.0
      %2472 = vmatpush2.msra.mxu0 0.0
      %2473 = vmatprep.mubr.f32.mxu0 0.0
      %2474 = vmatmul.mubr.f32.gmra.mxu0 %v1837
      %v2475 = vpop.f32.mrf.mxu0
      %v2476 = vadd.f32 0.0, %v2475
      %v2477 = vpop.f32.mrf.mxu0
      %2478 = vdwg.mxu0
      %v2479 = vrsqrt.pop %v2476
      %v2480 = vmul.f32 %v2476, %v2479
      %vm2481 = vcmp.eq.f32.partialorder %v2476, inf
      %v2482 = vsel %vm2481, %v2476, %v2480
      %vm2483 = vcmp.eq.f32.partialorder %v2476, 0.0
      %v2484 = vand.u32 %v2476, 2147483648
      %v2485 = vsel %vm2483, %v2484, %v2482
      %v2486 = vmul.f32 %v2093, %v2093
      %v2488 = vsel %vm827, %v2486, 0
      %2490 = vmatprep.subr.mxu0 0.0
      %2491 = vmatpush1.msra.mxu0 0.0
      %2492 = vmatprep.subr.mxu0 0.0
      %2493 = vmatpush1.msra.mxu0 0.0
      %2494 = vmatprep.subr.mxu0 0.0
      %2495 = vmatpush1.msra.mxu0 0.0
      %2496 = vmatprep.subr.mxu0 0.0
      %2497 = vmatpush1.msra.mxu0 0.0
      %2498 = vmatprep.subr.mxu0 0.0
      %2499 = vmatpush1.msra.mxu0 0.0
      %2500 = vmatprep.subr.mxu0 0.0
      %2501 = vmatpush1.msra.mxu0 0.0
      %2502 = vmatprep.subr.mxu0 0.0
      %2503 = vmatpush1.msra.mxu0 0.0
      %2504 = vmatprep.subr.mxu0 0.0
      %2505 = vmatpush1.msra.mxu0 0.0
      %2506 = vmatprep.subr.mxu0 0.0
      %2507 = vmatpush1.msra.mxu0 0.0
      %2508 = vmatprep.subr.mxu0 0.0
      %2509 = vmatpush1.msra.mxu0 0.0
      %2510 = vmatprep.subr.mxu0 0.0
      %2511 = vmatpush1.msra.mxu0 0.0
      %2512 = vmatprep.subr.mxu0 0.0
      %2513 = vmatpush1.msra.mxu0 0.0
      %2514 = vmatprep.subr.mxu0 0.0
      %2515 = vmatpush1.msra.mxu0 %v2097
      %2516 = vmatprep.subr.mxu0 0.0
      %2517 = vmatpush1.msra.mxu0 %v2096
      %2518 = vmatprep.subr.mxu0 0.0
      %2519 = vmatpush1.msra.mxu0 %v2095
      %2520 = vmatprep.subr.mxu0 0.0
      %2521 = vmatpush1.msra.mxu0 %v2094
      %2522 = vmatprep.subr.mxu0 0.0
      %2523 = vmatpush2.msra.mxu0 0.0
      %2524 = vmatprep.subr.mxu0 0.0
      %2525 = vmatpush2.msra.mxu0 0.0
      %2526 = vmatprep.subr.mxu0 0.0
      %2527 = vmatpush2.msra.mxu0 0.0
      %2528 = vmatprep.subr.mxu0 0.0
      %2529 = vmatpush2.msra.mxu0 0.0
      %2530 = vmatprep.subr.mxu0 0.0
      %2531 = vmatpush2.msra.mxu0 0.0
      %2532 = vmatprep.subr.mxu0 0.0
      %2533 = vmatpush2.msra.mxu0 0.0
      %2534 = vmatprep.subr.mxu0 0.0
      %2535 = vmatpush2.msra.mxu0 0.0
      %2536 = vmatprep.subr.mxu0 0.0
      %2537 = vmatpush2.msra.mxu0 0.0
      %2538 = vmatprep.subr.mxu0 0.0
      %2539 = vmatpush2.msra.mxu0 0.0
      %2540 = vmatprep.subr.mxu0 0.0
      %2541 = vmatpush2.msra.mxu0 0.0
      %2542 = vmatprep.subr.mxu0 0.0
      %2543 = vmatpush2.msra.mxu0 0.0
      %2544 = vmatprep.subr.mxu0 0.0
      %2545 = vmatpush2.msra.mxu0 0.0
      %2546 = vmatprep.subr.mxu0 0.0
      %2547 = vmatpush2.msra.mxu0 0.0
      %2548 = vmatprep.subr.mxu0 0.0
      %2549 = vmatpush2.msra.mxu0 0.0
      %2550 = vmatprep.subr.mxu0 0.0
      %2551 = vmatpush2.msra.mxu0 0.0
      %2552 = vmatprep.subr.mxu0 0.0
      %2553 = vmatpush2.msra.mxu0 0.0
      %2554 = vmatprep.mubr.f32.mxu0 0.0
      %2555 = vmatmul.mubr.f32.gmra.mxu0 %v2488
      %v2556 = vpop.f32.mrf.mxu0
      %v2557 = vadd.f32 0.0, %v2556
      %v2558 = vpop.f32.mrf.mxu0
      %2559 = vdwg.mxu0
      %v2560 = vrsqrt.pop %v2557
      %v2561 = vmul.f32 %v2557, %v2560
      %vm2562 = vcmp.eq.f32.partialorder %v2557, inf
      %v2563 = vsel %vm2562, %v2557, %v2561
      %vm2564 = vcmp.eq.f32.partialorder %v2557, 0.0
      %v2565 = vand.u32 %v2557, 2147483648
      %v2566 = vsel %vm2564, %v2565, %v2563
      %v2567 = vmax.f32 %v2485, 1e-08
      %v2568 = vmax.f32 %v2566, 1e-08
      %v2569 = vmul.f32 %v2567, %v2568
      %v2570 = vrcp.pop %v2569
      %v2571 = vmul.f32 %v2406, %v2570
      %v2572 = vsel %vm827, %v2334, 0.0
      %v2573 = vrot.slane %v2572, 4
      %v2574 = vadd.f32 %v2572, %v2573
      %v2575 = vrot.slane %v2574, 2
      %v2576 = vadd.f32 %v2574, %v2575
      %v2577 = vrot.slane %v2576, 1
      %v2578 = vadd.f32 %v2576, %v2577
      %v2579 = vrcp.pop 8.0
      %v2580 = vmul.f32 %v2578, %v2579
      %v2581 = vsel %vm827, %v2571, 0.0
      %v2582 = vrot.slane %v2581, 4
      %v2583 = vadd.f32 %v2581, %v2582
      %v2584 = vrot.slane %v2583, 2
      %v2585 = vadd.f32 %v2583, %v2584
      %v2586 = vrot.slane %v2585, 1
      %v2587 = vadd.f32 %v2585, %v2586
      %v2588 = vmul.f32 %v2587, %v2579
      %v2589 = vsel %vm827, %v1133, -inf
      %v2590 = vrot.slane %v2589, 4
      %v2591 = vmax.f32 %v2589, %v2590
      %v2592 = vrot.slane %v2591, 2
      %v2593 = vmax.f32 %v2591, %v2592
      %v2594 = vrot.slane %v2593, 1
      %v2595 = vmax.f32 %v2593, %v2594
      %v2596 = vsel %vm827, %v1584, -inf
      %v2597 = vrot.slane %v2596, 4
      %v2598 = vmax.f32 %v2596, %v2597
      %v2599 = vrot.slane %v2598, 2
      %v2600 = vmax.f32 %v2598, %v2599
      %v2601 = vrot.slane %v2600, 1
      %v2602 = vmax.f32 %v2600, %v2601
      %2604 = vrot.lane.b32.xlu0 %v2595, 32
      %v2605 = vpop.permute.xlu0 %2604
      %2608 = vrot.lane.b32.xlu0 %v2588, 64
      %v2609 = vpop.permute.xlu0 %2608
      %2612 = vrot.lane.b32.xlu0 %v2602, 96
      %v2613 = vpop.permute.xlu0 %2612
      %v2615 = vsel %vm827, %v2580, %v2605
      %vm2616 = vcmask 523264
      %v2617 = vsel %vm2616, %v2615, %v2609
      %vm2618 = vcmask 785408
      %v2619 = vsel %vm2618, %v2617, %v2613
      %v2620 = vld [vmem:[%s11] sm:$0xff]
      %v2621 = vld [vmem:[%s11 + $0x8] sm:$0xff]
      %v2622 = vld [vmem:[%s11 + $0x10] sm:$0xff]
      %v2623 = vld [vmem:[%s11 + $0x18] sm:$0xff]
      %v2624 = vld [vmem:[%s11 + $0x20] sm:$0xff]
      %v2625 = vld [vmem:[%s11 + $0x28] sm:$0xff]
      %v2626 = vld [vmem:[%s11 + $0x30] sm:$0xff]
      %v2627 = vld [vmem:[%s11 + $0x38] sm:$0xff]
      %v2628 = vld [vmem:[%s11 + $0x40] sm:$0xff]
      %v2629 = vld [vmem:[%s11 + $0x48] sm:$0xff]
      %v2630 = vld [vmem:[%s11 + $0x50] sm:$0xff]
      %v2631 = vld [vmem:[%s11 + $0x58] sm:$0xff]
      %v2632 = vld [vmem:[%s11 + $0x60] sm:$0xff]
      %v2633 = vld [vmem:[%s11 + $0x68] sm:$0xff]
      %v2634 = vld [vmem:[%s11 + $0x70] sm:$0xff]
      %v2635 = vld [vmem:[%s11 + $0x78] sm:$0xff]
      %v2636 = vld [vmem:[%s12] sm:$0x1]
      %2637 = vmatprep.subr.mxu0 0.0
      %2638 = vmatpush1.msra.mxu0 %v2635
      %2639 = vmatprep.subr.mxu0 0.0
      %2640 = vmatpush1.msra.mxu0 %v2634
      %2641 = vmatprep.subr.mxu0 0.0
      %2642 = vmatpush1.msra.mxu0 %v2633
      %2643 = vmatprep.subr.mxu0 0.0
      %2644 = vmatpush1.msra.mxu0 %v2632
      %2645 = vmatprep.subr.mxu0 0.0
      %2646 = vmatpush1.msra.mxu0 %v2631
      %2647 = vmatprep.subr.mxu0 0.0
      %2648 = vmatpush1.msra.mxu0 %v2630
      %2649 = vmatprep.subr.mxu0 0.0
      %2650 = vmatpush1.msra.mxu0 %v2629
      %2651 = vmatprep.subr.mxu0 0.0
      %2652 = vmatpush1.msra.mxu0 %v2628
      %2653 = vmatprep.subr.mxu0 0.0
      %2654 = vmatpush1.msra.mxu0 %v2627
      %2655 = vmatprep.subr.mxu0 0.0
      %2656 = vmatpush1.msra.mxu0 %v2626
      %2657 = vmatprep.subr.mxu0 0.0
      %2658 = vmatpush1.msra.mxu0 %v2625
      %2659 = vmatprep.subr.mxu0 0.0
      %2660 = vmatpush1.msra.mxu0 %v2624
      %2661 = vmatprep.subr.mxu0 0.0
      %2662 = vmatpush1.msra.mxu0 %v2623
      %2663 = vmatprep.subr.mxu0 0.0
      %2664 = vmatpush1.msra.mxu0 %v2622
      %2665 = vmatprep.subr.mxu0 0.0
      %2666 = vmatpush1.msra.mxu0 %v2621
      %2667 = vmatprep.subr.mxu0 0.0
      %2668 = vmatpush1.msra.mxu0 %v2620
      %2669 = vmatprep.subr.mxu0 0.0
      %2670 = vmatpush2.msra.mxu0 0.0
      %2671 = vmatprep.subr.mxu0 0.0
      %2672 = vmatpush2.msra.mxu0 0.0
      %2673 = vmatprep.subr.mxu0 0.0
      %2674 = vmatpush2.msra.mxu0 0.0
      %2675 = vmatprep.subr.mxu0 0.0
      %2676 = vmatpush2.msra.mxu0 0.0
      %2677 = vmatprep.subr.mxu0 0.0
      %2678 = vmatpush2.msra.mxu0 0.0
      %2679 = vmatprep.subr.mxu0 0.0
      %2680 = vmatpush2.msra.mxu0 0.0
      %2681 = vmatprep.subr.mxu0 0.0
      %2682 = vmatpush2.msra.mxu0 0.0
      %2683 = vmatprep.subr.mxu0 0.0
      %2684 = vmatpush2.msra.mxu0 0.0
      %2685 = vmatprep.subr.mxu0 0.0
      %2686 = vmatpush2.msra.mxu0 0.0
      %2687 = vmatprep.subr.mxu0 0.0
      %2688 = vmatpush2.msra.mxu0 0.0
      %2689 = vmatprep.subr.mxu0 0.0
      %2690 = vmatpush2.msra.mxu0 0.0
      %2691 = vmatprep.subr.mxu0 0.0
      %2692 = vmatpush2.msra.mxu0 0.0
      %2693 = vmatprep.subr.mxu0 0.0
      %2694 = vmatpush2.msra.mxu0 0.0
      %2695 = vmatprep.subr.mxu0 0.0
      %2696 = vmatpush2.msra.mxu0 0.0
      %2697 = vmatprep.subr.mxu0 0.0
      %2698 = vmatpush2.msra.mxu0 0.0
      %2699 = vmatprep.subr.mxu0 0.0
      %2700 = vmatpush2.msra.mxu0 0.0
      %2701 = vmatprep.mubr.f32.mxu0 0.0
      %2702 = vmatmul.mubr.f32.gmra.mxu0 %v2619
      %v2703 = vpop.f32.mrf.mxu0
      %v2704 = vadd.f32 %v2636, %v2703
      %v2705 = vpop.f32.mrf.mxu0
      %2706 = vdwg.mxu0
      %v2707 = vmax.f32 %v2704, 0.0
      %v2708 = vld [vmem:[%s13] sm:$0xff]
      %v2709 = vld [vmem:[%s13 + $0x8] sm:$0xff]
      %v2710 = vld [vmem:[%s13 + $0x10] sm:$0xff]
      %v2711 = vld [vmem:[%s13 + $0x18] sm:$0xff]
      %v2712 = vld [vmem:[%s13 + $0x20] sm:$0xff]
      %v2713 = vld [vmem:[%s13 + $0x28] sm:$0xff]
      %v2714 = vld [vmem:[%s13 + $0x30] sm:$0xff]
      %v2715 = vld [vmem:[%s13 + $0x38] sm:$0xff]
      %v2716 = vld [vmem:[%s14] sm:$0x1]
      %v2718 = vsel %vm2616, %v2707, 0
      %2720 = vmatprep.subr.mxu0 0.0
      %2721 = vmatpush1.msra.mxu0 0.0
      %2722 = vmatprep.subr.mxu0 0.0
      %2723 = vmatpush1.msra.mxu0 0.0
      %2724 = vmatprep.subr.mxu0 0.0
      %2725 = vmatpush1.msra.mxu0 0.0
      %2726 = vmatprep.subr.mxu0 0.0
      %2727 = vmatpush1.msra.mxu0 0.0
      %2728 = vmatprep.subr.mxu0 0.0
      %2729 = vmatpush1.msra.mxu0 0.0
      %2730 = vmatprep.subr.mxu0 0.0
      %2731 = vmatpush1.msra.mxu0 0.0
      %2732 = vmatprep.subr.mxu0 0.0
      %2733 = vmatpush1.msra.mxu0 0.0
      %2734 = vmatprep.subr.mxu0 0.0
      %2735 = vmatpush1.msra.mxu0 0.0
      %2736 = vmatprep.subr.mxu0 0.0
      %2737 = vmatpush1.msra.mxu0 %v2715
      %2738 = vmatprep.subr.mxu0 0.0
      %2739 = vmatpush1.msra.mxu0 %v2714
      %2740 = vmatprep.subr.mxu0 0.0
      %2741 = vmatpush1.msra.mxu0 %v2713
      %2742 = vmatprep.subr.mxu0 0.0
      %2743 = vmatpush1.msra.mxu0 %v2712
      %2744 = vmatprep.subr.mxu0 0.0
      %2745 = vmatpush1.msra.mxu0 %v2711
      %2746 = vmatprep.subr.mxu0 0.0
      %2747 = vmatpush1.msra.mxu0 %v2710
      %2748 = vmatprep.subr.mxu0 0.0
      %2749 = vmatpush1.msra.mxu0 %v2709
      %2750 = vmatprep.subr.mxu0 0.0
      %2751 = vmatpush1.msra.mxu0 %v2708
      %2752 = vmatprep.subr.mxu0 0.0
      %2753 = vmatpush2.msra.mxu0 0.0
      %2754 = vmatprep.subr.mxu0 0.0
      %2755 = vmatpush2.msra.mxu0 0.0
      %2756 = vmatprep.subr.mxu0 0.0
      %2757 = vmatpush2.msra.mxu0 0.0
      %2758 = vmatprep.subr.mxu0 0.0
      %2759 = vmatpush2.msra.mxu0 0.0
      %2760 = vmatprep.subr.mxu0 0.0
      %2761 = vmatpush2.msra.mxu0 0.0
      %2762 = vmatprep.subr.mxu0 0.0
      %2763 = vmatpush2.msra.mxu0 0.0
      %2764 = vmatprep.subr.mxu0 0.0
      %2765 = vmatpush2.msra.mxu0 0.0
      %2766 = vmatprep.subr.mxu0 0.0
      %2767 = vmatpush2.msra.mxu0 0.0
      %2768 = vmatprep.subr.mxu0 0.0
      %2769 = vmatpush2.msra.mxu0 0.0
      %2770 = vmatprep.subr.mxu0 0.0
      %2771 = vmatpush2.msra.mxu0 0.0
      %2772 = vmatprep.subr.mxu0 0.0
      %2773 = vmatpush2.msra.mxu0 0.0
      %2774 = vmatprep.subr.mxu0 0.0
      %2775 = vmatpush2.msra.mxu0 0.0
      %2776 = vmatprep.subr.mxu0 0.0
      %2777 = vmatpush2.msra.mxu0 0.0
      %2778 = vmatprep.subr.mxu0 0.0
      %2779 = vmatpush2.msra.mxu0 0.0
      %2780 = vmatprep.subr.mxu0 0.0
      %2781 = vmatpush2.msra.mxu0 0.0
      %2782 = vmatprep.subr.mxu0 0.0
      %2783 = vmatpush2.msra.mxu0 0.0
      %2784 = vmatprep.mubr.f32.mxu0 0.0
      %2785 = vmatmul.mubr.f32.gmra.mxu0 %v2718
      %v2786 = vpop.f32.mrf.mxu0
      %v2787 = vadd.f32 %v2716, %v2786
      %v2788 = vpop.f32.mrf.mxu0
      %2789 = vdwg.mxu0
      %v2790 = vmax.f32 %v2787, 0.0
      %v2791 = vld [vmem:[%s15] sm:$0xff]
      %v2792 = vld [vmem:[%s15 + $0x8] sm:$0xff]
      %v2793 = vld [vmem:[%s15 + $0x10] sm:$0xff]
      %v2794 = vld [vmem:[%s15 + $0x18] sm:$0xff]
      %v2795 = vld [vmem:[%s16] sm:$0x1]
      %v2797 = vsel %vm827, %v2790, 0
      %2799 = vmatprep.subr.mxu0 0.0
      %2800 = vmatpush1.msra.mxu0 0.0
      %2801 = vmatprep.subr.mxu0 0.0
      %2802 = vmatpush1.msra.mxu0 0.0
      %2803 = vmatprep.subr.mxu0 0.0
      %2804 = vmatpush1.msra.mxu0 0.0
      %2805 = vmatprep.subr.mxu0 0.0
      %2806 = vmatpush1.msra.mxu0 0.0
      %2807 = vmatprep.subr.mxu0 0.0
      %2808 = vmatpush1.msra.mxu0 0.0
      %2809 = vmatprep.subr.mxu0 0.0
      %2810 = vmatpush1.msra.mxu0 0.0
      %2811 = vmatprep.subr.mxu0 0.0
      %2812 = vmatpush1.msra.mxu0 0.0
      %2813 = vmatprep.subr.mxu0 0.0
      %2814 = vmatpush1.msra.mxu0 0.0
      %2815 = vmatprep.subr.mxu0 0.0
      %2816 = vmatpush1.msra.mxu0 0.0
      %2817 = vmatprep.subr.mxu0 0.0
      %2818 = vmatpush1.msra.mxu0 0.0
      %2819 = vmatprep.subr.mxu0 0.0
      %2820 = vmatpush1.msra.mxu0 0.0
      %2821 = vmatprep.subr.mxu0 0.0
      %2822 = vmatpush1.msra.mxu0 0.0
      %2823 = vmatprep.subr.mxu0 0.0
      %2824 = vmatpush1.msra.mxu0 %v2794
      %2825 = vmatprep.subr.mxu0 0.0
      %2826 = vmatpush1.msra.mxu0 %v2793
      %2827 = vmatprep.subr.mxu0 0.0
      %2828 = vmatpush1.msra.mxu0 %v2792
      %2829 = vmatprep.subr.mxu0 0.0
      %2830 = vmatpush1.msra.mxu0 %v2791
      %2831 = vmatprep.subr.mxu0 0.0
      %2832 = vmatpush2.msra.mxu0 0.0
      %2833 = vmatprep.subr.mxu0 0.0
      %2834 = vmatpush2.msra.mxu0 0.0
      %2835 = vmatprep.subr.mxu0 0.0
      %2836 = vmatpush2.msra.mxu0 0.0
      %2837 = vmatprep.subr.mxu0 0.0
      %2838 = vmatpush2.msra.mxu0 0.0
      %2839 = vmatprep.subr.mxu0 0.0
      %2840 = vmatpush2.msra.mxu0 0.0
      %2841 = vmatprep.subr.mxu0 0.0
      %2842 = vmatpush2.msra.mxu0 0.0
      %2843 = vmatprep.subr.mxu0 0.0
      %2844 = vmatpush2.msra.mxu0 0.0
      %2845 = vmatprep.subr.mxu0 0.0
      %2846 = vmatpush2.msra.mxu0 0.0
      %2847 = vmatprep.subr.mxu0 0.0
      %2848 = vmatpush2.msra.mxu0 0.0
      %2849 = vmatprep.subr.mxu0 0.0
      %2850 = vmatpush2.msra.mxu0 0.0
      %2851 = vmatprep.subr.mxu0 0.0
      %2852 = vmatpush2.msra.mxu0 0.0
      %2853 = vmatprep.subr.mxu0 0.0
      %2854 = vmatpush2.msra.mxu0 0.0
      %2855 = vmatprep.subr.mxu0 0.0
      %2856 = vmatpush2.msra.mxu0 0.0
      %2857 = vmatprep.subr.mxu0 0.0
      %2858 = vmatpush2.msra.mxu0 0.0
      %2859 = vmatprep.subr.mxu0 0.0
      %2860 = vmatpush2.msra.mxu0 0.0
      %2861 = vmatprep.subr.mxu0 0.0
      %2862 = vmatpush2.msra.mxu0 0.0
      %2863 = vmatprep.mubr.f32.mxu0 0.0
      %2864 = vmatmul.mubr.f32.gmra.mxu0 %v2797
      %v2865 = vpop.f32.mrf.mxu0
      %v2866 = vadd.f32 %v2795, %v2865
      %v2867 = vpop.f32.mrf.mxu0
      %2868 = vdwg.mxu0
      %v2869 = vmax.f32 %v2866, 0.0
      %v2870 = vld [vmem:[%s17] sm:$0x1]
      %v2871 = vmul.f32 %v2869, %v2870
      %vm2872 = vcmask 122880
      %v2873 = vsel %vm2872, %v2871, 0.0
      %2874 = vadd.xlane.f32.xlu0 %v2873
      %v2875 = vpop.xlane.xlu0 %2874
      %v2876 = vld [vmem:[#allocation2] sm:$0x1]
      %v2877 = vadd.f32 %v2875, %v2876
      %v2878 = vsub.f32 0.0, %v2877
      %v2879 = vmul.f32 %v2878, 1.442695
      %v2880 = vpow.pop %v2879
      %v2881 = vadd.f32 %v2880, 1.0
      %v2882 = vrcp.pop %v2881
      %vm2883 = vcmask 0
      %2884 = vst.msk [vmem:[%s648] sm:$0x1] %vm2883, %v2882
      %p2885 = scmp.lt.s32.totalorder %s32, 1
      %s2886 = scalar_select %p2885, %s32, 1
      %s2887 = scalar_lea.vmem %s19, %s2886
      // Predicated region
      $region97: #{tpu_custom_call.1} parent=95 // pred_check
        %p2888 = pneg %p469
      $region98: #{tpu_custom_call.1} parent=95 // pred_check_branch
        %2890 = sbr.rel (%p2888) target = $region100
      $region99: #{tpu_custom_call.1} parent=95 // pred_region
        _
      $region100: #{tpu_custom_call.1} parent=95 // pred_fallthru
        _
    $region96: #{tpu_custom_call.1} parent=5 // pred_fallthru
      _
    %p2891 = scmp.le.s32.totalorder 2, %s27
    // Predicated region
    $region101: #{tpu_custom_call.1} parent=5 // pred_check
      %p2892 = pneg %p2891
    $region102: #{tpu_custom_call.1} parent=5 // pred_check_branch
      %2894 = sbr.rel (%p2892) target = $region104
    $region103: #{tpu_custom_call.1} parent=5 // pred_region
      %s2895 = ssub.s32 %s27, 2
      // Predicated region
      $region105: #{tpu_custom_call.1} parent=103 // pred_check
        %p2896 = pneg %p475
      $region106: #{tpu_custom_call.1} parent=103 // pred_check_branch
        %2898 = sbr.rel (%p2896) target = $region108
      $region107: #{tpu_custom_call.1} parent=103 // pred_region
        %p2899 = scmp.lt.s32.totalorder %s33, 1
        %s2900 = scalar_select %p2899, %s33, 1
        %s2901 = scalar_lea.vmem %s19, %s2900
      $region108: #{tpu_custom_call.1} parent=103 // pred_fallthru
        _
    $region104: #{tpu_custom_call.1} parent=5 // pred_fallthru
      _
  $region6: #{tpu_custom_call.1} parent=0 // loop_footer
    %s31 = sadd.s32 1, %s27
  $region7: #{tpu_custom_call.1} parent=0 // loop_footer_branch
    %26 = sbr.rel target = $region3
  $region8: #{tpu_custom_call.1} parent=0 // loop_exit
    _

</llo_original>
